<compile_context>
chip_gen: v7x
topology: tpu7x:2x2x1
jax: 0.10.0
libtpu: 0.0.40
codegen_flags: <defaults>
</compile_context>

<pallas_src>
import math

import jax
import jax.numpy as jnp
from jax.experimental import pallas as pl
from jax.experimental.pallas import tpu as pltpu

NEG_SLOPE = 0.1  # nn.LeakyReLU(0.1)
LANE = 128       # TPU lane width


def _leaky_relu(x):
    return jnp.where(x > 0, x, NEG_SLOPE * x)


_ACTIVATIONS = {
    "relu": _leaky_relu,        # module maps 'relu' -> LeakyReLU(0.1)
    "tanh": jnp.tanh,
    "sigmoid": jax.nn.sigmoid,
}


def _round_up(n, m):
    return ((n + m - 1) // m) * m


def _pad_to(arr, shape):
    pads = [(0, s - d) for d, s in zip(arr.shape, shape)]
    if all(p == (0, 0) for p in pads):
        return arr
    return jnp.pad(arr, pads)


def _default_batch_tile(B):
    """Pick a batch tile per TPU generation (see header comment)."""
    B16 = _round_up(max(B, 1), 16)
    try:
        kind = jax.devices()[0].device_kind.lower()
    except Exception:  # pragma: no cover - device query should not fail on TPU
        kind = ""
    two_tensorcores = ("v7" in kind) or ("7x" in kind)
    if two_tensorcores:
        # Keep >= ~4 grid steps so both TensorCores stay busy and each core
        # still overlaps DMA with compute; cap tiles at 1024 rows.
        tile = max(16, min(1024, (B16 // 4 // 16) * 16))
    else:
        # Single TensorCore: one resident tile (grid=1) up to 2048 rows, else
        # 1024-row tiles (big per-step DMA, still pipelined).
        tile = B16 if B16 <= 2048 else 1024
    return tile


def _make_mlp_kernel(act_fn):
    def mlp_kernel(x_ref, *refs):
        """Fused MLP forward for one batch tile.

        refs = (w0, b0, w1, b1, ..., w_{L-1}, b_{L-1}, out)
        bf16 matmul -> f32 accumulate -> f32 bias + activation, all in VMEM.
        """
        out_ref = refs[-1]
        param_refs = refs[:-1]
        n_layers = len(param_refs) // 2

        h = x_ref[...]  # bf16 activations entering the first matmul
        for i in range(n_layers):
            w = param_refs[2 * i][...]        # bf16 (in_pad, out[_pad])
            b = param_refs[2 * i + 1][...]    # f32  (1, out[_pad])
            h32 = jnp.dot(h.astype(jnp.bfloat16), w,
                          preferred_element_type=jnp.float32) + b
            if i < n_layers - 1:
                h32 = act_fn(h32)
            h = h32
        out_ref[...] = h.astype(out_ref.dtype)

    return mlp_kernel


def _call_pallas(act_fn, x_p, w_p, b_p, batch_tile, B_pad, dims_pad, out_dim,
                 cost, weight_pipeline_mode):
    in_specs = [pl.BlockSpec((batch_tile, dims_pad[0]), lambda i: (i, 0))]
    operands = [x_p]
    for w, b in zip(w_p, b_p):
        # Constant index_map => the pipeline loads these once and keeps the
        # VMEM copy resident across all batch tiles.  Buffered(1) avoids an
        # unnecessary second buffer for these never-changing blocks.
        if weight_pipeline_mode is None:
            w_spec = pl.BlockSpec(w.shape, lambda i: (0, 0))
            b_spec = pl.BlockSpec(b.shape, lambda i: (0, 0))
        else:
            w_spec = pl.BlockSpec(w.shape, lambda i: (0, 0),
                                  pipeline_mode=weight_pipeline_mode)
            b_spec = pl.BlockSpec(b.shape, lambda i: (0, 0),
                                  pipeline_mode=weight_pipeline_mode)
        in_specs += [w_spec, b_spec]
        operands += [w, b]

    out_spec = pl.BlockSpec((batch_tile, out_dim), lambda i: (i, 0))

    return pl.pallas_call(
        _make_mlp_kernel(act_fn),
        out_shape=jax.ShapeDtypeStruct((B_pad, out_dim), jnp.float32),
        grid=(B_pad // batch_tile,),
        in_specs=in_specs,
        out_specs=out_spec,
        compiler_params=pltpu.CompilerParams(
            dimension_semantics=("parallel",),
        ),
        cost_estimate=cost,
    )(*operands)


def custom_mlp_forward(x, weights, biases, *, nonlinear="relu", batch_tile=None):
    """Run the fused MLP Pallas kernel.

    x:        (B, in_size) float32
    weights:  list of (in_i, out_i) float32  (already transposed vs. PyTorch)
    biases:   list of (out_i,)     float32
    """
    B, in_size = x.shape
    out_dim = weights[-1].shape[1]
    act_fn = _ACTIVATIONS[nonlinear]

    # --- batch tiling (generation aware) ------------------------------------
    if batch_tile is None:
        batch_tile = _default_batch_tile(B)
    assert batch_tile % 16 == 0, "batch_tile must be a multiple of 16 (bf16)"
    B_pad = _round_up(B, batch_tile)

    # --- feature padding: lane-dense hidden dims, UNPADDED final output -----
    dims = [in_size] + [w.shape[1] for w in weights]
    dims_pad = [_round_up(d, LANE) for d in dims[:-1]] + [dims[-1]]

    x_p = _pad_to(x, (B_pad, dims_pad[0])).astype(jnp.bfloat16)
    w_p, b_p = [], []
    for i, (w, b) in enumerate(zip(weights, biases)):
        w_p.append(_pad_to(w, (dims_pad[i], dims_pad[i + 1])).astype(jnp.bfloat16))
        b_p.append(_pad_to(b.reshape(1, -1).astype(jnp.float32),
                           (1, dims_pad[i + 1])))

    # --- advisory cost estimate ----------------------------------------------
    n_layers = len(weights)
    flops = 2 * B_pad * sum(dims_pad[i] * dims_pad[i + 1] for i in range(n_layers))
    transcendentals = (0 if nonlinear == "relu"
                       else B_pad * sum(dims_pad[1:n_layers]))
    bytes_accessed = (x_p.size * 2
                      + sum(int(w.size) * 2 for w in w_p)
                      + sum(int(b.size) * 4 for b in b_p)
                      + B_pad * out_dim * 4)
    cost = pl.CostEstimate(flops=int(flops),
                           transcendentals=int(transcendentals),
                           bytes_accessed=int(bytes_accessed))

    # --- launch ---------------------------------------------------------------
    buffered_one = pl.Buffered(1) if hasattr(pl, "Buffered") else None
    if buffered_one is not None:
        try:
            out_pad = _call_pallas(act_fn, x_p, w_p, b_p, batch_tile, B_pad,
                                   dims_pad, out_dim, cost, buffered_one)
        except Exception:
            # Fall back to default double-buffering if Buffered(1) is rejected
            # by this jax/Mosaic version (correctness identical).
            out_pad = _call_pallas(act_fn, x_p, w_p, b_p, batch_tile, B_pad,
                                   dims_pad, out_dim, cost, None)
    else:
        out_pad = _call_pallas(act_fn, x_p, w_p, b_p, batch_tile, B_pad,
                               dims_pad, out_dim, cost, None)

    # Slice away batch padding outside the kernel (output width is exact).
    return out_pad[:B, :]


def init_mlp_params(key, in_size, mlp_layer):
    """Deterministic init mimicking PyTorch nn.Linear defaults
    (uniform(-1/sqrt(fan_in), 1/sqrt(fan_in)))."""
    layer_info = [in_size] + mlp_layer
    weights, biases = [], []
    for i in range(len(layer_info) - 1):
        fan_in, fan_out = layer_info[i], layer_info[i + 1]
        key, kw, kb = jax.random.split(key, 3)
        bound = 1.0 / math.sqrt(fan_in)
        # Stored as (in, out) == PyTorch weight.T
        w = jax.random.uniform(kw, (fan_in, fan_out), jnp.float32, -bound, bound)
        b = jax.random.uniform(kb, (fan_out,), jnp.float32, -bound, bound)
        weights.append(w)
        biases.append(b)
    return weights, biases


def mlp_reference(x, weights, biases, nonlinear="relu"):
    act_fn = _ACTIVATIONS[nonlinear]
    h = x
    n = len(weights)
    for i, (w, b) in enumerate(zip(weights, biases)):
        h = h @ w + b
        if i < n - 1:
            h = act_fn(h)
    return h


if __name__ == "__main__":
    key = jax.random.PRNGKey(0)

    # Small shapes consistent with the module's forward.  Batch of 512 gives
    # grid=(1,) on single-TC v5e/v6e and a 4-step "parallel" grid on v7x.
    batch = 512
    in_size = 32
    mlp_layer = [64, 48, 16]

    key, kx = jax.random.split(key)
    x = jax.random.normal(kx, (batch, in_size), jnp.float32)
    weights, biases = init_mlp_params(key, in_size, mlp_layer)

    for nl in ("relu", "tanh", "sigmoid"):
        out = custom_mlp_forward(x, weights, biases, nonlinear=nl)
        out = jax.block_until_ready(out)
        ref = mlp_reference(x, weights, biases, nonlinear=nl)
        assert out.shape == (batch, mlp_layer[-1])
        max_err = float(jnp.max(jnp.abs(out - ref)))
        # bf16 matmul operands (f32 accumulation) => loosened tolerance vs f32.
        assert jnp.allclose(out, ref, atol=5e-2, rtol=5e-2), (
            f"[{nl}] mismatch vs reference, max abs err {max_err}"
        )

    print("KERNEL_OK")
</pallas_src>

<mosaic_0001>
module attributes {stable_mosaic.version = 11 : i64} {
  func.func @mlp_kernel(%arg0: i32, %arg1: memref<512x128xbf16, #tpu.memory_space<vmem>>, %arg2: memref<128x128xbf16, #tpu.memory_space<vmem>>, %arg3: memref<1x128xf32, #tpu.memory_space<vmem>>, %arg4: memref<128x128xbf16, #tpu.memory_space<vmem>>, %arg5: memref<1x128xf32, #tpu.memory_space<vmem>>, %arg6: memref<128x16xbf16, #tpu.memory_space<vmem>>, %arg7: memref<1x16xf32, #tpu.memory_space<vmem>>, %arg8: memref<512x16xf32, #tpu.memory_space<vmem>>) attributes {dimension_semantics = [#tpu.dimension_semantics<parallel>], iteration_bounds = array<i64: 1>, scalar_prefetch = 0 : i64, scratch_operands = 0 : i64, tpu.core_type = #tpu.core_type<tc>, window_params = [{transform_indices = @transform_0, window_bounds = array<i64: 512, 128>}, {pipeline_mode = #tpu.pipeline_mode<synchronous>, transform_indices = @transform_1, window_bounds = array<i64: 128, 128>}, {pipeline_mode = #tpu.pipeline_mode<synchronous>, transform_indices = @transform_2, window_bounds = array<i64: 1, 128>}, {pipeline_mode = #tpu.pipeline_mode<synchronous>, transform_indices = @transform_3, window_bounds = array<i64: 128, 128>}, {pipeline_mode = #tpu.pipeline_mode<synchronous>, transform_indices = @transform_4, window_bounds = array<i64: 1, 128>}, {pipeline_mode = #tpu.pipeline_mode<synchronous>, transform_indices = @transform_5, window_bounds = array<i64: 128, 16>}, {pipeline_mode = #tpu.pipeline_mode<synchronous>, transform_indices = @transform_6, window_bounds = array<i64: 1, 16>}, {transform_indices = @transform_7, window_bounds = array<i64: 512, 16>}]} {
    %c0 = arith.constant 0 : index
    %c0_0 = arith.constant 0 : index
    %0 = vector.load %arg1[%c0, %c0_0] : memref<512x128xbf16, #tpu.memory_space<vmem>>, vector<512x128xbf16>
    %c0_1 = arith.constant 0 : index
    %c0_2 = arith.constant 0 : index
    %1 = vector.load %arg2[%c0_1, %c0_2] : memref<128x128xbf16, #tpu.memory_space<vmem>>, vector<128x128xbf16>
    %c0_3 = arith.constant 0 : index
    %c0_4 = arith.constant 0 : index
    %2 = vector.load %arg3[%c0_3, %c0_4] : memref<1x128xf32, #tpu.memory_space<vmem>>, vector<1x128xf32>
    %cst = arith.constant dense<0.000000e+00> : vector<512x128xf32>
    %3 = tpu.matmul %0, %1, %cst {dimension_numbers = #tpu.dot_dimension_numbers<[1], [0], [0], [1], [0, 0, 1, 1], [], []>} : vector<512x128xbf16>, vector<128x128xbf16>, vector<512x128xf32> -> vector<512x128xf32>
    %4 = vector.broadcast %2 : vector<1x128xf32> to vector<512x128xf32>
    %5 = arith.addf %3, %4 : vector<512x128xf32>
    %cst_5 = arith.constant 0.000000e+00 : f32
    %6 = vector.broadcast %cst_5 : f32 to vector<512x128xf32>
    %7 = arith.cmpf ogt, %5, %6 : vector<512x128xf32>
    %cst_6 = arith.constant 1.000000e-01 : f32
    %8 = vector.broadcast %cst_6 : f32 to vector<512x128xf32>
    %9 = arith.mulf %8, %5 : vector<512x128xf32>
    %10 = arith.select %7, %5, %9 : vector<512x128xi1>, vector<512x128xf32>
    %c0_7 = arith.constant 0 : index
    %c0_8 = arith.constant 0 : index
    %11 = vector.load %arg4[%c0_7, %c0_8] : memref<128x128xbf16, #tpu.memory_space<vmem>>, vector<128x128xbf16>
    %c0_9 = arith.constant 0 : index
    %c0_10 = arith.constant 0 : index
    %12 = vector.load %arg5[%c0_9, %c0_10] : memref<1x128xf32, #tpu.memory_space<vmem>>, vector<1x128xf32>
    %13 = arith.truncf %10 : vector<512x128xf32> to vector<512x128xbf16>
    %cst_11 = arith.constant dense<0.000000e+00> : vector<512x128xf32>
    %14 = tpu.matmul %13, %11, %cst_11 {dimension_numbers = #tpu.dot_dimension_numbers<[1], [0], [0], [1], [0, 0, 1, 1], [], []>} : vector<512x128xbf16>, vector<128x128xbf16>, vector<512x128xf32> -> vector<512x128xf32>
    %15 = vector.broadcast %12 : vector<1x128xf32> to vector<512x128xf32>
    %16 = arith.addf %14, %15 : vector<512x128xf32>
    %cst_12 = arith.constant 0.000000e+00 : f32
    %17 = vector.broadcast %cst_12 : f32 to vector<512x128xf32>
    %18 = arith.cmpf ogt, %16, %17 : vector<512x128xf32>
    %cst_13 = arith.constant 1.000000e-01 : f32
    %19 = vector.broadcast %cst_13 : f32 to vector<512x128xf32>
    %20 = arith.mulf %19, %16 : vector<512x128xf32>
    %21 = arith.select %18, %16, %20 : vector<512x128xi1>, vector<512x128xf32>
    %c0_14 = arith.constant 0 : index
    %c0_15 = arith.constant 0 : index
    %22 = vector.load %arg6[%c0_14, %c0_15] : memref<128x16xbf16, #tpu.memory_space<vmem>>, vector<128x16xbf16>
    %c0_16 = arith.constant 0 : index
    %c0_17 = arith.constant 0 : index
    %23 = vector.load %arg7[%c0_16, %c0_17] : memref<1x16xf32, #tpu.memory_space<vmem>>, vector<1x16xf32>
    %24 = arith.truncf %21 : vector<512x128xf32> to vector<512x128xbf16>
    %cst_18 = arith.constant dense<0.000000e+00> : vector<512x16xf32>
    %25 = tpu.matmul %24, %22, %cst_18 {dimension_numbers = #tpu.dot_dimension_numbers<[1], [0], [0], [1], [0, 0, 1, 1], [], []>} : vector<512x128xbf16>, vector<128x16xbf16>, vector<512x16xf32> -> vector<512x16xf32>
    %26 = vector.broadcast %23 : vector<1x16xf32> to vector<512x16xf32>
    %27 = arith.addf %25, %26 : vector<512x16xf32>
    %c0_19 = arith.constant 0 : index
    %c0_20 = arith.constant 0 : index
    %28 = vector.load %arg8[%c0_19, %c0_20] : memref<512x16xf32, #tpu.memory_space<vmem>>, vector<512x16xf32>
    tpu.vector_store %arg8[%c0_19, %c0_20], %27 {strides = array<i32>} : memref<512x16xf32, #tpu.memory_space<vmem>>, vector<512x16xf32>,
    return
  }
  func.func @transform_0(%arg0: i32) -> (i32, i32) {
    %c0_i32 = arith.constant 0 : i32
    %c0_i32_0 = arith.constant 0 : i32
    return %arg0, %c0_i32 : i32, i32
  }
  func.func @transform_1(%arg0: i32) -> (i32, i32) {
    %c0_i32 = arith.constant 0 : i32
    %c0_i32_0 = arith.constant 0 : i32
    %c0_i32_1 = arith.constant 0 : i32
    return %c0_i32, %c0_i32_0 : i32, i32
  }
  func.func @transform_2(%arg0: i32) -> (i32, i32) {
    %c0_i32 = arith.constant 0 : i32
    %c0_i32_0 = arith.constant 0 : i32
    %c0_i32_1 = arith.constant 0 : i32
    return %c0_i32, %c0_i32_0 : i32, i32
  }
  func.func @transform_3(%arg0: i32) -> (i32, i32) {
    %c0_i32 = arith.constant 0 : i32
    %c0_i32_0 = arith.constant 0 : i32
    %c0_i32_1 = arith.constant 0 : i32
    return %c0_i32, %c0_i32_0 : i32, i32
  }
  func.func @transform_4(%arg0: i32) -> (i32, i32) {
    %c0_i32 = arith.constant 0 : i32
    %c0_i32_0 = arith.constant 0 : i32
    %c0_i32_1 = arith.constant 0 : i32
    return %c0_i32, %c0_i32_0 : i32, i32
  }
  func.func @transform_5(%arg0: i32) -> (i32, i32) {
    %c0_i32 = arith.constant 0 : i32
    %c0_i32_0 = arith.constant 0 : i32
    %c0_i32_1 = arith.constant 0 : i32
    return %c0_i32, %c0_i32_0 : i32, i32
  }
  func.func @transform_6(%arg0: i32) -> (i32, i32) {
    %c0_i32 = arith.constant 0 : i32
    %c0_i32_0 = arith.constant 0 : i32
    %c0_i32_1 = arith.constant 0 : i32
    return %c0_i32, %c0_i32_0 : i32, i32
  }
  func.func @transform_7(%arg0: i32) -> (i32, i32) {
    %c0_i32 = arith.constant 0 : i32
    %c0_i32_0 = arith.constant 0 : i32
    return %arg0, %c0_i32 : i32, i32
  }
}

module attributes {stable_mosaic.version = 11 : i64} {
  func.func @mlp_kernel(%arg0: i32, %arg1: memref<512x128xbf16, #tpu.memory_space<vmem>>, %arg2: memref<128x128xbf16, #tpu.memory_space<vmem>>, %arg3: memref<1x128xf32, #tpu.memory_space<vmem>>, %arg4: memref<128x128xbf16, #tpu.memory_space<vmem>>, %arg5: memref<1x128xf32, #tpu.memory_space<vmem>>, %arg6: memref<128x16xbf16, #tpu.memory_space<vmem>>, %arg7: memref<1x16xf32, #tpu.memory_space<vmem>>, %arg8: memref<512x16xf32, #tpu.memory_space<vmem>>) attributes {dimension_semantics = [#tpu.dimension_semantics<parallel>], iteration_bounds = array<i64: 1>, scalar_prefetch = 0 : i64, scratch_operands = 0 : i64, tpu.core_type = #tpu.core_type<tc>, window_params = [{transform_indices = @transform_0, window_bounds = array<i64: 512, 128>}, {pipeline_mode = #tpu.pipeline_mode<synchronous>, transform_indices = @transform_1, window_bounds = array<i64: 128, 128>}, {pipeline_mode = #tpu.pipeline_mode<synchronous>, transform_indices = @transform_2, window_bounds = array<i64: 1, 128>}, {pipeline_mode = #tpu.pipeline_mode<synchronous>, transform_indices = @transform_3, window_bounds = array<i64: 128, 128>}, {pipeline_mode = #tpu.pipeline_mode<synchronous>, transform_indices = @transform_4, window_bounds = array<i64: 1, 128>}, {pipeline_mode = #tpu.pipeline_mode<synchronous>, transform_indices = @transform_5, window_bounds = array<i64: 128, 16>}, {pipeline_mode = #tpu.pipeline_mode<synchronous>, transform_indices = @transform_6, window_bounds = array<i64: 1, 16>}, {transform_indices = @transform_7, window_bounds = array<i64: 512, 16>}]} {
    %c0 = arith.constant 0 : index
    %c0_0 = arith.constant 0 : index
    %0 = vector.load %arg1[%c0, %c0_0] : memref<512x128xbf16, #tpu.memory_space<vmem>>, vector<512x128xbf16>
    %c0_1 = arith.constant 0 : index
    %c0_2 = arith.constant 0 : index
    %1 = vector.load %arg2[%c0_1, %c0_2] : memref<128x128xbf16, #tpu.memory_space<vmem>>, vector<128x128xbf16>
    %c0_3 = arith.constant 0 : index
    %c0_4 = arith.constant 0 : index
    %2 = vector.load %arg3[%c0_3, %c0_4] : memref<1x128xf32, #tpu.memory_space<vmem>>, vector<1x128xf32>
    %cst = arith.constant dense<0.000000e+00> : vector<512x128xf32>
    %3 = tpu.matmul %0, %1, %cst {dimension_numbers = #tpu.dot_dimension_numbers<[1], [0], [0], [1], [0, 0, 1, 1], [], []>} : vector<512x128xbf16>, vector<128x128xbf16>, vector<512x128xf32> -> vector<512x128xf32>
    %4 = vector.broadcast %2 : vector<1x128xf32> to vector<512x128xf32>
    %5 = arith.addf %3, %4 : vector<512x128xf32>
    %cst_5 = arith.constant 0.000000e+00 : f32
    %6 = vector.broadcast %cst_5 : f32 to vector<512x128xf32>
    %7 = arith.cmpf ogt, %5, %6 : vector<512x128xf32>
    %cst_6 = arith.constant 1.000000e-01 : f32
    %8 = vector.broadcast %cst_6 : f32 to vector<512x128xf32>
    %9 = arith.mulf %8, %5 : vector<512x128xf32>
    %10 = arith.select %7, %5, %9 : vector<512x128xi1>, vector<512x128xf32>
    %c0_7 = arith.constant 0 : index
    %c0_8 = arith.constant 0 : index
    %11 = vector.load %arg4[%c0_7, %c0_8] : memref<128x128xbf16, #tpu.memory_space<vmem>>, vector<128x128xbf16>
    %c0_9 = arith.constant 0 : index
    %c0_10 = arith.constant 0 : index
    %12 = vector.load %arg5[%c0_9, %c0_10] : memref<1x128xf32, #tpu.memory_space<vmem>>, vector<1x128xf32>
    %13 = arith.truncf %10 : vector<512x128xf32> to vector<512x128xbf16>
    %cst_11 = arith.constant dense<0.000000e+00> : vector<512x128xf32>
    %14 = tpu.matmul %13, %11, %cst_11 {dimension_numbers = #tpu.dot_dimension_numbers<[1], [0], [0], [1], [0, 0, 1, 1], [], []>} : vector<512x128xbf16>, vector<128x128xbf16>, vector<512x128xf32> -> vector<512x128xf32>
    %15 = vector.broadcast %12 : vector<1x128xf32> to vector<512x128xf32>
    %16 = arith.addf %14, %15 : vector<512x128xf32>
    %cst_12 = arith.constant 0.000000e+00 : f32
    %17 = vector.broadcast %cst_12 : f32 to vector<512x128xf32>
    %18 = arith.cmpf ogt, %16, %17 : vector<512x128xf32>
    %cst_13 = arith.constant 1.000000e-01 : f32
    %19 = vector.broadcast %cst_13 : f32 to vector<512x128xf32>
    %20 = arith.mulf %19, %16 : vector<512x128xf32>
    %21 = arith.select %18, %16, %20 : vector<512x128xi1>, vector<512x128xf32>
    %c0_14 = arith.constant 0 : index
    %c0_15 = arith.constant 0 : index
    %22 = vector.load %arg6[%c0_14, %c0_15] : memref<128x16xbf16, #tpu.memory_space<vmem>>, vector<128x16xbf16>
    %c0_16 = arith.constant 0 : index
    %c0_17 = arith.constant 0 : index
    %23 = vector.load %arg7[%c0_16, %c0_17] : memref<1x16xf32, #tpu.memory_space<vmem>>, vector<1x16xf32>
    %24 = arith.truncf %21 : vector<512x128xf32> to vector<512x128xbf16>
    %cst_18 = arith.constant dense<0.000000e+00> : vector<512x16xf32>
    %25 = tpu.matmul %24, %22, %cst_18 {dimension_numbers = #tpu.dot_dimension_numbers<[1], [0], [0], [1], [0, 0, 1, 1], [], []>} : vector<512x128xbf16>, vector<128x16xbf16>, vector<512x16xf32> -> vector<512x16xf32>
    %26 = vector.broadcast %23 : vector<1x16xf32> to vector<512x16xf32>
    %27 = arith.addf %25, %26 : vector<512x16xf32>
    %c0_19 = arith.constant 0 : index
    %c0_20 = arith.constant 0 : index
    %28 = vector.load %arg8[%c0_19, %c0_20] : memref<512x16xf32, #tpu.memory_space<vmem>>, vector<512x16xf32>
    tpu.vector_store %arg8[%c0_19, %c0_20], %27 {strides = array<i32>} : memref<512x16xf32, #tpu.memory_space<vmem>>, vector<512x16xf32>,
    return
  }
  func.func @transform_0(%arg0: i32) -> (i32, i32) {
    %c0_i32 = arith.constant 0 : i32
    %c0_i32_0 = arith.constant 0 : i32
    return %arg0, %c0_i32 : i32, i32
  }
  func.func @transform_1(%arg0: i32) -> (i32, i32) {
    %c0_i32 = arith.constant 0 : i32
    %c0_i32_0 = arith.constant 0 : i32
    %c0_i32_1 = arith.constant 0 : i32
    return %c0_i32, %c0_i32_0 : i32, i32
  }
  func.func @transform_2(%arg0: i32) -> (i32, i32) {
    %c0_i32 = arith.constant 0 : i32
    %c0_i32_0 = arith.constant 0 : i32
    %c0_i32_1 = arith.constant 0 : i32
    return %c0_i32, %c0_i32_0 : i32, i32
  }
  func.func @transform_3(%arg0: i32) -> (i32, i32) {
    %c0_i32 = arith.constant 0 : i32
    %c0_i32_0 = arith.constant 0 : i32
    %c0_i32_1 = arith.constant 0 : i32
    return %c0_i32, %c0_i32_0 : i32, i32
  }
  func.func @transform_4(%arg0: i32) -> (i32, i32) {
    %c0_i32 = arith.constant 0 : i32
    %c0_i32_0 = arith.constant 0 : i32
    %c0_i32_1 = arith.constant 0 : i32
    return %c0_i32, %c0_i32_0 : i32, i32
  }
  func.func @transform_5(%arg0: i32) -> (i32, i32) {
    %c0_i32 = arith.constant 0 : i32
    %c0_i32_0 = arith.constant 0 : i32
    %c0_i32_1 = arith.constant 0 : i32
    return %c0_i32, %c0_i32_0 : i32, i32
  }
  func.func @transform_6(%arg0: i32) -> (i32, i32) {
    %c0_i32 = arith.constant 0 : i32
    %c0_i32_0 = arith.constant 0 : i32
    %c0_i32_1 = arith.constant 0 : i32
    return %c0_i32, %c0_i32_0 : i32, i32
  }
  func.func @transform_7(%arg0: i32) -> (i32, i32) {
    %c0_i32 = arith.constant 0 : i32
    %c0_i32_0 = arith.constant 0 : i32
    return %arg0, %c0_i32 : i32, i32
  }
}

</mosaic_0001>

<llo_original>
// kernel: tpu_custom_call.1
$region0: #{tpu_custom_call.1}
  #allocation0 [shape = 'u32[]', space=smem, size = 0x4, offset = 0x4, fixed_abs, tag = 'smem constant byte address 0x4 - core index']
  #allocation1 [shape = 'u32[144,128]{1,0:T(1,128)}', space=vmem, size = 0x12000, scoped, tag = 'internal scratch']
  %s0 = inlined_call_operand.hbm [shape: bf16[512,128], index: 0, kind: input, shape index: {}]
  %s1 = inlined_call_operand.vmem [shape: bf16[128,128], index: 1, kind: input, shape index: {}]
  %s2 = inlined_call_operand.vmem [shape: f32[1,128], index: 2, kind: input, shape index: {}]
  %s3 = inlined_call_operand.hbm [shape: bf16[128,128], index: 3, kind: input, shape index: {}]
  %s4 = inlined_call_operand.vmem [shape: f32[1,128], index: 4, kind: input, shape index: {}]
  %s5 = inlined_call_operand.vmem [shape: bf16[128,16], index: 5, kind: input, shape index: {}]
  %s6 = inlined_call_operand.vmem [shape: f32[1,16], index: 6, kind: input, shape index: {}]
  %s7 = inlined_call_operand.vmem [shape: f32[512,16], index: 7, kind: output, shape index: {}]
  %s8 = sld [smem:[#allocation0]]
  $region46: #{tpu_custom_call.1} parent=0
    _
  %s10 = ssub.s32 1, %s8
  %s11 = scalar_select 0, %s10, %s8
  $region1: #{tpu_custom_call.1} parent=0
    #allocation2 [shape = 'u8[131072]{0}', space=vmem, size = 0x20000, scoped, tag = 'input window, operand 0, single buffered']
    #allocation3 [shape = 's32[1]{0}', space=sflag, size = 0x4, scoped, tag = 'scoped memory for tpu_custom_call.1']
    #allocation4 [shape = 'u8[32768]{0}', space=vmem, size = 0x8000, scoped, tag = 'input window, operand 3, single buffered']
    #allocation5 [shape = 's32[1]{0}', space=sflag, size = 0x4, scoped, tag = 'scoped memory for tpu_custom_call.1']
    %12 = vsyncpa [#allocation3], 0
    %13 = vsyncpa [#allocation5], 0
    // Predicated region
    $region2: #{tpu_custom_call.1} parent=1 // pred_check
      _
    $region3: #{tpu_custom_call.1} parent=1 // pred_check_branch
      %15 = sbr.rel (0) target = $region5
    $region4: #{tpu_custom_call.1} parent=1 // pred_region
      %s17 = ssub.s32 4096, 4096
      %18 = vsyncadd [#allocation3], %s17
      %s19 = sshll.u32 [#allocation2], 4
      %s20 = int_to_ptr.vmem [resolvable:$true] %s19
      %25 = dma.hbm_to_vmem [thread:$0]  %s0, 4096, %s20, [#allocation3], 64, 64, 4
    $region5: #{tpu_custom_call.1} parent=1 // pred_fallthru
      _
    // Predicated region
    $region6: #{tpu_custom_call.1} parent=1 // pred_check
      _
    $region7: #{tpu_custom_call.1} parent=1 // pred_check_branch
      %27 = sbr.rel (0) target = $region9
    $region8: #{tpu_custom_call.1} parent=1 // pred_region
      _
    $region9: #{tpu_custom_call.1} parent=1 // pred_fallthru
      _
    // Predicated region
    $region10: #{tpu_custom_call.1} parent=1 // pred_check
      _
    $region11: #{tpu_custom_call.1} parent=1 // pred_check_branch
      %29 = sbr.rel (0) target = $region13
    $region12: #{tpu_custom_call.1} parent=1 // pred_region
      _
    $region13: #{tpu_custom_call.1} parent=1 // pred_fallthru
      _
    // Predicated region
    $region14: #{tpu_custom_call.1} parent=1 // pred_check
      _
    $region15: #{tpu_custom_call.1} parent=1 // pred_check_branch
      %31 = sbr.rel (0) target = $region17
    $region16: #{tpu_custom_call.1} parent=1 // pred_region
      %s33 = ssub.s32 1024, 1024
      %34 = vsyncadd [#allocation5], %s33
      %s35 = sshll.u32 [#allocation4], 4
      %s36 = int_to_ptr.vmem [resolvable:$true] %s35
      %41 = dma.hbm_to_vmem [thread:$0]  %s3, 1024, %s36, [#allocation5], 64, 64, 4
    $region17: #{tpu_custom_call.1} parent=1 // pred_fallthru
      _
    // Predicated region
    $region18: #{tpu_custom_call.1} parent=1 // pred_check
      _
    $region19: #{tpu_custom_call.1} parent=1 // pred_check_branch
      %43 = sbr.rel (0) target = $region21
    $region20: #{tpu_custom_call.1} parent=1 // pred_region
      _
    $region21: #{tpu_custom_call.1} parent=1 // pred_fallthru
      _
    // Predicated region
    $region22: #{tpu_custom_call.1} parent=1 // pred_check
      _
    $region23: #{tpu_custom_call.1} parent=1 // pred_check_branch
      %45 = sbr.rel (0) target = $region25
    $region24: #{tpu_custom_call.1} parent=1 // pred_region
      _
    $region25: #{tpu_custom_call.1} parent=1 // pred_fallthru
      _
    // Predicated region
    $region26: #{tpu_custom_call.1} parent=1 // pred_check
      _
    $region27: #{tpu_custom_call.1} parent=1 // pred_check_branch
      %47 = sbr.rel (0) target = $region29
    $region28: #{tpu_custom_call.1} parent=1 // pred_region
      _
    $region29: #{tpu_custom_call.1} parent=1 // pred_fallthru
      _
    // Predicated region
    $region30: #{tpu_custom_call.1} parent=1 // pred_check
      _
    $region31: #{tpu_custom_call.1} parent=1 // pred_check_branch
      %49 = sbr.rel (0) target = $region33
    $region32: #{tpu_custom_call.1} parent=1 // pred_region
      %50 = dma.done [#allocation3], 4096
    $region33: #{tpu_custom_call.1} parent=1 // pred_fallthru
      _
    // Predicated region
    $region34: #{tpu_custom_call.1} parent=1 // pred_check
      _
    $region35: #{tpu_custom_call.1} parent=1 // pred_check_branch
      %52 = sbr.rel (0) target = $region37
    $region36: #{tpu_custom_call.1} parent=1 // pred_region
      %53 = dma.done [#allocation5], 1024
    $region37: #{tpu_custom_call.1} parent=1 // pred_fallthru
      _
    %v55 = vld [vmem:[#allocation2] sm:$0xf]
    %v56 = vld [vmem:[#allocation2 + $0x4] sm:$0xf]
    %v57 = vld [vmem:[#allocation2 + $0x8] sm:$0xf]
    %v58 = vld [vmem:[#allocation2 + $0xc] sm:$0xf]
    %v59 = vld [vmem:[#allocation2 + $0x10] sm:$0xf]
    %v60 = vld [vmem:[#allocation2 + $0x14] sm:$0xf]
    %v61 = vld [vmem:[#allocation2 + $0x18] sm:$0xf]
    %v62 = vld [vmem:[#allocation2 + $0x1c] sm:$0xf]
    %v63 = vld [vmem:[#allocation2 + $0x20] sm:$0xf]
    %v64 = vld [vmem:[#allocation2 + $0x24] sm:$0xf]
    %v65 = vld [vmem:[#allocation2 + $0x28] sm:$0xf]
    %v66 = vld [vmem:[#allocation2 + $0x2c] sm:$0xf]
    %v67 = vld [vmem:[#allocation2 + $0x30] sm:$0xf]
    %v68 = vld [vmem:[#allocation2 + $0x34] sm:$0xf]
    %v69 = vld [vmem:[#allocation2 + $0x38] sm:$0xf]
    %v70 = vld [vmem:[#allocation2 + $0x3c] sm:$0xf]
    %v71 = vld [vmem:[#allocation2 + $0x40] sm:$0xf]
    %v72 = vld [vmem:[#allocation2 + $0x44] sm:$0xf]
    %v73 = vld [vmem:[#allocation2 + $0x48] sm:$0xf]
    %v74 = vld [vmem:[#allocation2 + $0x4c] sm:$0xf]
    %v75 = vld [vmem:[#allocation2 + $0x50] sm:$0xf]
    %v76 = vld [vmem:[#allocation2 + $0x54] sm:$0xf]
    %v77 = vld [vmem:[#allocation2 + $0x58] sm:$0xf]
    %v78 = vld [vmem:[#allocation2 + $0x5c] sm:$0xf]
    %v79 = vld [vmem:[#allocation2 + $0x60] sm:$0xf]
    %v80 = vld [vmem:[#allocation2 + $0x64] sm:$0xf]
    %v81 = vld [vmem:[#allocation2 + $0x68] sm:$0xf]
    %v82 = vld [vmem:[#allocation2 + $0x6c] sm:$0xf]
    %v83 = vld [vmem:[#allocation2 + $0x70] sm:$0xf]
    %v84 = vld [vmem:[#allocation2 + $0x74] sm:$0xf]
    %v85 = vld [vmem:[#allocation2 + $0x78] sm:$0xf]
    %v86 = vld [vmem:[#allocation2 + $0x7c] sm:$0xf]
    %v87 = vld [vmem:[#allocation2 + $0x80] sm:$0xf]
    %v88 = vld [vmem:[#allocation2 + $0x84] sm:$0xf]
    %v89 = vld [vmem:[#allocation2 + $0x88] sm:$0xf]
    %v90 = vld [vmem:[#allocation2 + $0x8c] sm:$0xf]
    %v91 = vld [vmem:[#allocation2 + $0x90] sm:$0xf]
    %v92 = vld [vmem:[#allocation2 + $0x94] sm:$0xf]
    %v93 = vld [vmem:[#allocation2 + $0x98] sm:$0xf]
    %v94 = vld [vmem:[#allocation2 + $0x9c] sm:$0xf]
    %v95 = vld [vmem:[#allocation2 + $0xa0] sm:$0xf]
    %v96 = vld [vmem:[#allocation2 + $0xa4] sm:$0xf]
    %v97 = vld [vmem:[#allocation2 + $0xa8] sm:$0xf]
    %v98 = vld [vmem:[#allocation2 + $0xac] sm:$0xf]
    %v99 = vld [vmem:[#allocation2 + $0xb0] sm:$0xf]
    %v100 = vld [vmem:[#allocation2 + $0xb4] sm:$0xf]
    %v101 = vld [vmem:[#allocation2 + $0xb8] sm:$0xf]
    %v102 = vld [vmem:[#allocation2 + $0xbc] sm:$0xf]
    %v103 = vld [vmem:[#allocation2 + $0xc0] sm:$0xf]
    %v104 = vld [vmem:[#allocation2 + $0xc4] sm:$0xf]
    %v105 = vld [vmem:[#allocation2 + $0xc8] sm:$0xf]
    %v106 = vld [vmem:[#allocation2 + $0xcc] sm:$0xf]
    %v107 = vld [vmem:[#allocation2 + $0xd0] sm:$0xf]
    %v108 = vld [vmem:[#allocation2 + $0xd4] sm:$0xf]
    %v109 = vld [vmem:[#allocation2 + $0xd8] sm:$0xf]
    %v110 = vld [vmem:[#allocation2 + $0xdc] sm:$0xf]
    %v111 = vld [vmem:[#allocation2 + $0xe0] sm:$0xf]
    %v112 = vld [vmem:[#allocation2 + $0xe4] sm:$0xf]
    %v113 = vld [vmem:[#allocation2 + $0xe8] sm:$0xf]
    %v114 = vld [vmem:[#allocation2 + $0xec] sm:$0xf]
    %v115 = vld [vmem:[#allocation2 + $0xf0] sm:$0xf]
    %v116 = vld [vmem:[#allocation2 + $0xf4] sm:$0xf]
    %v117 = vld [vmem:[#allocation2 + $0xf8] sm:$0xf]
    %v118 = vld [vmem:[#allocation2 + $0xfc] sm:$0xf]
    %v119 = vld [vmem:[%s1] sm:$0xf]
    %v120 = vld [vmem:[%s1 + $0x4] sm:$0xf]
    %v121 = vld [vmem:[%s1 + $0x8] sm:$0xf]
    %v122 = vld [vmem:[%s1 + $0xc] sm:$0xf]
    %v123 = vld [vmem:[%s1 + $0x10] sm:$0xf]
    %v124 = vld [vmem:[%s1 + $0x14] sm:$0xf]
    %v125 = vld [vmem:[%s1 + $0x18] sm:$0xf]
    %v126 = vld [vmem:[%s1 + $0x1c] sm:$0xf]
    %v127 = vld [vmem:[%s1 + $0x20] sm:$0xf]
    %v128 = vld [vmem:[%s1 + $0x24] sm:$0xf]
    %v129 = vld [vmem:[%s1 + $0x28] sm:$0xf]
    %v130 = vld [vmem:[%s1 + $0x2c] sm:$0xf]
    %v131 = vld [vmem:[%s1 + $0x30] sm:$0xf]
    %v132 = vld [vmem:[%s1 + $0x34] sm:$0xf]
    %v133 = vld [vmem:[%s1 + $0x38] sm:$0xf]
    %v134 = vld [vmem:[%s1 + $0x3c] sm:$0xf]
    %v135 = vld [vmem:[%s2] sm:$0x1]
    %v137 = vlaneseq
    %v138 = vshrl.u32 %v137, 7
    %v139 = vsub.s32 0, %v138
    %v140 = vrot.slane %v135, %v139
    %v206 = vunpack.c.l.b16 %v55
    %v207 = vunpack.c.l.b16 %v56
    %v208 = vunpack.c.l.b16 %v57
    %v209 = vunpack.c.l.b16 %v58
    %v210 = vunpack.c.l.b16 %v59
    %v211 = vunpack.c.l.b16 %v60
    %v212 = vunpack.c.l.b16 %v61
    %v213 = vunpack.c.l.b16 %v62
    %v214 = vunpack.c.l.b16 %v63
    %v215 = vunpack.c.l.b16 %v64
    %v216 = vunpack.c.l.b16 %v65
    %v217 = vunpack.c.l.b16 %v66
    %v218 = vunpack.c.l.b16 %v67
    %v219 = vunpack.c.l.b16 %v68
    %v220 = vunpack.c.l.b16 %v69
    %v221 = vunpack.c.l.b16 %v70
    %v222 = vunpack.c.l.b16 %v71
    %v223 = vunpack.c.l.b16 %v72
    %v224 = vunpack.c.l.b16 %v73
    %v225 = vunpack.c.l.b16 %v74
    %v226 = vunpack.c.l.b16 %v75
    %v227 = vunpack.c.l.b16 %v76
    %v228 = vunpack.c.l.b16 %v77
    %v229 = vunpack.c.l.b16 %v78
    %v230 = vunpack.c.l.b16 %v79
    %v231 = vunpack.c.l.b16 %v80
    %v232 = vunpack.c.l.b16 %v81
    %v233 = vunpack.c.l.b16 %v82
    %v234 = vunpack.c.l.b16 %v83
    %v235 = vunpack.c.l.b16 %v84
    %v236 = vunpack.c.l.b16 %v85
    %v237 = vunpack.c.l.b16 %v86
    %v238 = vunpack.c.l.b16 %v87
    %v239 = vunpack.c.l.b16 %v88
    %v240 = vunpack.c.l.b16 %v89
    %v241 = vunpack.c.l.b16 %v90
    %v242 = vunpack.c.l.b16 %v91
    %v243 = vunpack.c.l.b16 %v92
    %v244 = vunpack.c.l.b16 %v93
    %v245 = vunpack.c.l.b16 %v94
    %v246 = vunpack.c.l.b16 %v95
    %v247 = vunpack.c.l.b16 %v96
    %v248 = vunpack.c.l.b16 %v97
    %v249 = vunpack.c.l.b16 %v98
    %v250 = vunpack.c.l.b16 %v99
    %v251 = vunpack.c.l.b16 %v100
    %v252 = vunpack.c.l.b16 %v101
    %v253 = vunpack.c.l.b16 %v102
    %v254 = vunpack.c.l.b16 %v103
    %v255 = vunpack.c.l.b16 %v104
    %v256 = vunpack.c.l.b16 %v105
    %v257 = vunpack.c.l.b16 %v106
    %v258 = vunpack.c.l.b16 %v107
    %v259 = vunpack.c.l.b16 %v108
    %v260 = vunpack.c.l.b16 %v109
    %v261 = vunpack.c.l.b16 %v110
    %v262 = vunpack.c.l.b16 %v111
    %v263 = vunpack.c.l.b16 %v112
    %v264 = vunpack.c.l.b16 %v113
    %v265 = vunpack.c.l.b16 %v114
    %v266 = vunpack.c.l.b16 %v115
    %v267 = vunpack.c.l.b16 %v116
    %v268 = vunpack.c.l.b16 %v117
    %v269 = vunpack.c.l.b16 %v118
    %v270 = vpack.c.b16 %v207, %v206
    %v271 = vpack.c.b16 %v209, %v208
    %v272 = vpack.c.b16 %v211, %v210
    %v273 = vpack.c.b16 %v213, %v212
    %v274 = vpack.c.b16 %v215, %v214
    %v275 = vpack.c.b16 %v217, %v216
    %v276 = vpack.c.b16 %v219, %v218
    %v277 = vpack.c.b16 %v221, %v220
    %v278 = vpack.c.b16 %v223, %v222
    %v279 = vpack.c.b16 %v225, %v224
    %v280 = vpack.c.b16 %v227, %v226
    %v281 = vpack.c.b16 %v229, %v228
    %v282 = vpack.c.b16 %v231, %v230
    %v283 = vpack.c.b16 %v233, %v232
    %v284 = vpack.c.b16 %v235, %v234
    %v285 = vpack.c.b16 %v237, %v236
    %v286 = vpack.c.b16 %v239, %v238
    %v287 = vpack.c.b16 %v241, %v240
    %v288 = vpack.c.b16 %v243, %v242
    %v289 = vpack.c.b16 %v245, %v244
    %v290 = vpack.c.b16 %v247, %v246
    %v291 = vpack.c.b16 %v249, %v248
    %v292 = vpack.c.b16 %v251, %v250
    %v293 = vpack.c.b16 %v253, %v252
    %v294 = vpack.c.b16 %v255, %v254
    %v295 = vpack.c.b16 %v257, %v256
    %v296 = vpack.c.b16 %v259, %v258
    %v297 = vpack.c.b16 %v261, %v260
    %v298 = vpack.c.b16 %v263, %v262
    %v299 = vpack.c.b16 %v265, %v264
    %v300 = vpack.c.b16 %v267, %v266
    %v301 = vpack.c.b16 %v269, %v268
    %v350 = vunpack.c.l.b16 %v119
    %v351 = vunpack.c.l.b16 %v120
    %v352 = vunpack.c.l.b16 %v121
    %v353 = vunpack.c.l.b16 %v122
    %v354 = vunpack.c.l.b16 %v123
    %v355 = vunpack.c.l.b16 %v124
    %v356 = vunpack.c.l.b16 %v125
    %v357 = vunpack.c.l.b16 %v126
    %v358 = vunpack.c.l.b16 %v127
    %v359 = vunpack.c.l.b16 %v128
    %v360 = vunpack.c.l.b16 %v129
    %v361 = vunpack.c.l.b16 %v130
    %v362 = vunpack.c.l.b16 %v131
    %v363 = vunpack.c.l.b16 %v132
    %v364 = vunpack.c.l.b16 %v133
    %v365 = vunpack.c.l.b16 %v134
    %v366 = vpack.c.b16 %v351, %v350
    %v367 = vpack.c.b16 %v353, %v352
    %v368 = vpack.c.b16 %v355, %v354
    %v369 = vpack.c.b16 %v357, %v356
    %v370 = vpack.c.b16 %v359, %v358
    %v371 = vpack.c.b16 %v361, %v360
    %v372 = vpack.c.b16 %v363, %v362
    %v373 = vpack.c.b16 %v365, %v364
    %382 = vmatprep.subr.bf16.mxu0 0
    %383 = vmatpush1.bf16.msra.mxu0 %v366
    %384 = vmatprep.subr.bf16.mxu0 0
    %385 = vmatpush1.bf16.msra.mxu0 %v367
    %386 = vmatprep.subr.bf16.mxu0 0
    %387 = vmatpush1.bf16.msra.mxu0 %v368
    %388 = vmatprep.subr.bf16.mxu0 0
    %389 = vmatpush1.bf16.msra.mxu0 %v369
    %390 = vmatprep.subr.bf16.mxu0 0
    %391 = vmatpush1.bf16.msra.mxu0 %v370
    %392 = vmatprep.subr.bf16.mxu0 0
    %393 = vmatpush1.bf16.msra.mxu0 %v371
    %394 = vmatprep.subr.bf16.mxu0 0
    %395 = vmatpush1.bf16.msra.mxu0 %v372
    %396 = vmatprep.subr.bf16.mxu0 0
    %397 = vmatpush1.bf16.msra.mxu0 %v373
    %398 = vmatprep.subr.bf16.mxu0 0
    %399 = vmatpush1.bf16.msra.mxu0 0
    %400 = vmatprep.subr.bf16.mxu0 0
    %401 = vmatpush1.bf16.msra.mxu0 0
    %402 = vmatprep.subr.bf16.mxu0 0
    %403 = vmatpush1.bf16.msra.mxu0 0
    %404 = vmatprep.subr.bf16.mxu0 0
    %405 = vmatpush1.bf16.msra.mxu0 0
    %406 = vmatprep.subr.bf16.mxu0 0
    %407 = vmatpush1.bf16.msra.mxu0 0
    %408 = vmatprep.subr.bf16.mxu0 0
    %409 = vmatpush1.bf16.msra.mxu0 0
    %410 = vmatprep.subr.bf16.mxu0 0
    %411 = vmatpush1.bf16.msra.mxu0 0
    %412 = vmatprep.subr.bf16.mxu0 0
    %413 = vmatpush1.bf16.msra.mxu0 0
    %414 = vmatprep.mubr.bf16.mxu0 0
    %415 = vmatmul.mubr.bf16.gmra.mrb[0].mxu0 %v270
    %v416 = vpop.f32.mrb[0].mxu0
    %v417 = vadd.f32 %v140, %v416
    %v418 = vpop.f32.mrb[0].mxu0
    %v419 = vpop.f32.mrb[0].mxu0
    %v420 = vadd.f32 %v140, %v419
    %v421 = vpop.f32.mrb[0].mxu0
    %422 = vmatprep.mubr.bf16.mxu0 0
    %423 = vmatmul.mubr.bf16.gmra.mrb[0].mxu0 %v271
    %v424 = vpop.f32.mrb[0].mxu0
    %v425 = vadd.f32 %v140, %v424
    %v426 = vpop.f32.mrb[0].mxu0
    %v427 = vpop.f32.mrb[0].mxu0
    %v428 = vadd.f32 %v140, %v427
    %v429 = vpop.f32.mrb[0].mxu0
    %430 = vmatprep.mubr.bf16.mxu0 0
    %431 = vmatmul.mubr.bf16.gmra.mrb[0].mxu0 %v272
    %v432 = vpop.f32.mrb[0].mxu0
    %v433 = vadd.f32 %v140, %v432
    %v434 = vpop.f32.mrb[0].mxu0
    %v435 = vpop.f32.mrb[0].mxu0
    %v436 = vadd.f32 %v140, %v435
    %v437 = vpop.f32.mrb[0].mxu0
    %438 = vmatprep.mubr.bf16.mxu0 0
    %439 = vmatmul.mubr.bf16.gmra.mrb[0].mxu0 %v273
    %v440 = vpop.f32.mrb[0].mxu0
    %v441 = vadd.f32 %v140, %v440
    %v442 = vpop.f32.mrb[0].mxu0
    %v443 = vpop.f32.mrb[0].mxu0
    %v444 = vadd.f32 %v140, %v443
    %v445 = vpop.f32.mrb[0].mxu0
    %446 = vmatprep.mubr.bf16.mxu0 0
    %447 = vmatmul.mubr.bf16.gmra.mrb[0].mxu0 %v274
    %v448 = vpop.f32.mrb[0].mxu0
    %v449 = vadd.f32 %v140, %v448
    %v450 = vpop.f32.mrb[0].mxu0
    %v451 = vpop.f32.mrb[0].mxu0
    %v452 = vadd.f32 %v140, %v451
    %v453 = vpop.f32.mrb[0].mxu0
    %454 = vmatprep.mubr.bf16.mxu0 0
    %455 = vmatmul.mubr.bf16.gmra.mrb[0].mxu0 %v275
    %v456 = vpop.f32.mrb[0].mxu0
    %v457 = vadd.f32 %v140, %v456
    %v458 = vpop.f32.mrb[0].mxu0
    %v459 = vpop.f32.mrb[0].mxu0
    %v460 = vadd.f32 %v140, %v459
    %v461 = vpop.f32.mrb[0].mxu0
    %462 = vmatprep.mubr.bf16.mxu0 0
    %463 = vmatmul.mubr.bf16.gmra.mrb[0].mxu0 %v276
    %v464 = vpop.f32.mrb[0].mxu0
    %v465 = vadd.f32 %v140, %v464
    %v466 = vpop.f32.mrb[0].mxu0
    %v467 = vpop.f32.mrb[0].mxu0
    %v468 = vadd.f32 %v140, %v467
    %v469 = vpop.f32.mrb[0].mxu0
    %470 = vmatprep.mubr.bf16.mxu0 0
    %471 = vmatmul.mubr.bf16.gmra.mrb[0].mxu0 %v277
    %v472 = vpop.f32.mrb[0].mxu0
    %v473 = vadd.f32 %v140, %v472
    %v474 = vpop.f32.mrb[0].mxu0
    %v475 = vpop.f32.mrb[0].mxu0
    %v476 = vadd.f32 %v140, %v475
    %v477 = vpop.f32.mrb[0].mxu0
    %478 = vmatprep.mubr.bf16.mxu0 0
    %479 = vmatmul.mubr.bf16.gmra.mrb[0].mxu0 %v278
    %v480 = vpop.f32.mrb[0].mxu0
    %v481 = vadd.f32 %v140, %v480
    %v482 = vpop.f32.mrb[0].mxu0
    %v483 = vpop.f32.mrb[0].mxu0
    %v484 = vadd.f32 %v140, %v483
    %v485 = vpop.f32.mrb[0].mxu0
    %486 = vmatprep.mubr.bf16.mxu0 0
    %487 = vmatmul.mubr.bf16.gmra.mrb[0].mxu0 %v279
    %v488 = vpop.f32.mrb[0].mxu0
    %v489 = vadd.f32 %v140, %v488
    %v490 = vpop.f32.mrb[0].mxu0
    %v491 = vpop.f32.mrb[0].mxu0
    %v492 = vadd.f32 %v140, %v491
    %v493 = vpop.f32.mrb[0].mxu0
    %494 = vmatprep.mubr.bf16.mxu0 0
    %495 = vmatmul.mubr.bf16.gmra.mrb[0].mxu0 %v280
    %v496 = vpop.f32.mrb[0].mxu0
    %v497 = vadd.f32 %v140, %v496
    %v498 = vpop.f32.mrb[0].mxu0
    %v499 = vpop.f32.mrb[0].mxu0
    %v500 = vadd.f32 %v140, %v499
    %v501 = vpop.f32.mrb[0].mxu0
    %502 = vmatprep.mubr.bf16.mxu0 0
    %503 = vmatmul.mubr.bf16.gmra.mrb[0].mxu0 %v281
    %v504 = vpop.f32.mrb[0].mxu0
    %v505 = vadd.f32 %v140, %v504
    %v506 = vpop.f32.mrb[0].mxu0
    %v507 = vpop.f32.mrb[0].mxu0
    %v508 = vadd.f32 %v140, %v507
    %v509 = vpop.f32.mrb[0].mxu0
    %510 = vmatprep.mubr.bf16.mxu0 0
    %511 = vmatmul.mubr.bf16.gmra.mrb[0].mxu0 %v282
    %v512 = vpop.f32.mrb[0].mxu0
    %v513 = vadd.f32 %v140, %v512
    %v514 = vpop.f32.mrb[0].mxu0
    %v515 = vpop.f32.mrb[0].mxu0
    %v516 = vadd.f32 %v140, %v515
    %v517 = vpop.f32.mrb[0].mxu0
    %518 = vmatprep.mubr.bf16.mxu0 0
    %519 = vmatmul.mubr.bf16.gmra.mrb[0].mxu0 %v283
    %v520 = vpop.f32.mrb[0].mxu0
    %v521 = vadd.f32 %v140, %v520
    %v522 = vpop.f32.mrb[0].mxu0
    %v523 = vpop.f32.mrb[0].mxu0
    %v524 = vadd.f32 %v140, %v523
    %v525 = vpop.f32.mrb[0].mxu0
    %526 = vmatprep.mubr.bf16.mxu0 0
    %527 = vmatmul.mubr.bf16.gmra.mrb[0].mxu0 %v284
    %v528 = vpop.f32.mrb[0].mxu0
    %v529 = vadd.f32 %v140, %v528
    %v530 = vpop.f32.mrb[0].mxu0
    %v531 = vpop.f32.mrb[0].mxu0
    %v532 = vadd.f32 %v140, %v531
    %v533 = vpop.f32.mrb[0].mxu0
    %534 = vmatprep.mubr.bf16.mxu0 0
    %535 = vmatmul.mubr.bf16.gmra.mrb[0].mxu0 %v285
    %v536 = vpop.f32.mrb[0].mxu0
    %v537 = vadd.f32 %v140, %v536
    %v538 = vpop.f32.mrb[0].mxu0
    %v539 = vpop.f32.mrb[0].mxu0
    %v540 = vadd.f32 %v140, %v539
    %v541 = vpop.f32.mrb[0].mxu0
    %542 = vmatprep.mubr.bf16.mxu0 0
    %543 = vmatmul.mubr.bf16.gmra.mrb[0].mxu0 %v286
    %v544 = vpop.f32.mrb[0].mxu0
    %v545 = vadd.f32 %v140, %v544
    %v546 = vpop.f32.mrb[0].mxu0
    %v547 = vpop.f32.mrb[0].mxu0
    %v548 = vadd.f32 %v140, %v547
    %v549 = vpop.f32.mrb[0].mxu0
    %550 = vmatprep.mubr.bf16.mxu0 0
    %551 = vmatmul.mubr.bf16.gmra.mrb[0].mxu0 %v287
    %v552 = vpop.f32.mrb[0].mxu0
    %v553 = vadd.f32 %v140, %v552
    %v554 = vpop.f32.mrb[0].mxu0
    %v555 = vpop.f32.mrb[0].mxu0
    %v556 = vadd.f32 %v140, %v555
    %v557 = vpop.f32.mrb[0].mxu0
    %558 = vmatprep.mubr.bf16.mxu0 0
    %559 = vmatmul.mubr.bf16.gmra.mrb[0].mxu0 %v288
    %v560 = vpop.f32.mrb[0].mxu0
    %v561 = vadd.f32 %v140, %v560
    %v562 = vpop.f32.mrb[0].mxu0
    %v563 = vpop.f32.mrb[0].mxu0
    %v564 = vadd.f32 %v140, %v563
    %v565 = vpop.f32.mrb[0].mxu0
    %566 = vmatprep.mubr.bf16.mxu0 0
    %567 = vmatmul.mubr.bf16.gmra.mrb[0].mxu0 %v289
    %v568 = vpop.f32.mrb[0].mxu0
    %v569 = vadd.f32 %v140, %v568
    %v570 = vpop.f32.mrb[0].mxu0
    %v571 = vpop.f32.mrb[0].mxu0
    %v572 = vadd.f32 %v140, %v571
    %v573 = vpop.f32.mrb[0].mxu0
    %574 = vmatprep.mubr.bf16.mxu0 0
    %575 = vmatmul.mubr.bf16.gmra.mrb[0].mxu0 %v290
    %v576 = vpop.f32.mrb[0].mxu0
    %v577 = vadd.f32 %v140, %v576
    %v578 = vpop.f32.mrb[0].mxu0
    %v579 = vpop.f32.mrb[0].mxu0
    %v580 = vadd.f32 %v140, %v579
    %v581 = vpop.f32.mrb[0].mxu0
    %582 = vmatprep.mubr.bf16.mxu0 0
    %583 = vmatmul.mubr.bf16.gmra.mrb[0].mxu0 %v291
    %v584 = vpop.f32.mrb[0].mxu0
    %v585 = vadd.f32 %v140, %v584
    %v586 = vpop.f32.mrb[0].mxu0
    %v587 = vpop.f32.mrb[0].mxu0
    %v588 = vadd.f32 %v140, %v587
    %v589 = vpop.f32.mrb[0].mxu0
    %590 = vmatprep.mubr.bf16.mxu0 0
    %591 = vmatmul.mubr.bf16.gmra.mrb[0].mxu0 %v292
    %v592 = vpop.f32.mrb[0].mxu0
    %v593 = vadd.f32 %v140, %v592
    %v594 = vpop.f32.mrb[0].mxu0
    %v595 = vpop.f32.mrb[0].mxu0
    %v596 = vadd.f32 %v140, %v595
    %v597 = vpop.f32.mrb[0].mxu0
    %598 = vmatprep.mubr.bf16.mxu0 0
    %599 = vmatmul.mubr.bf16.gmra.mrb[0].mxu0 %v293
    %v600 = vpop.f32.mrb[0].mxu0
    %v601 = vadd.f32 %v140, %v600
    %v602 = vpop.f32.mrb[0].mxu0
    %v603 = vpop.f32.mrb[0].mxu0
    %v604 = vadd.f32 %v140, %v603
    %v605 = vpop.f32.mrb[0].mxu0
    %606 = vmatprep.mubr.bf16.mxu0 0
    %607 = vmatmul.mubr.bf16.gmra.mrb[0].mxu0 %v294
    %v608 = vpop.f32.mrb[0].mxu0
    %v609 = vadd.f32 %v140, %v608
    %v610 = vpop.f32.mrb[0].mxu0
    %v611 = vpop.f32.mrb[0].mxu0
    %v612 = vadd.f32 %v140, %v611
    %v613 = vpop.f32.mrb[0].mxu0
    %614 = vmatprep.mubr.bf16.mxu0 0
    %615 = vmatmul.mubr.bf16.gmra.mrb[0].mxu0 %v295
    %v616 = vpop.f32.mrb[0].mxu0
    %v617 = vadd.f32 %v140, %v616
    %v618 = vpop.f32.mrb[0].mxu0
    %v619 = vpop.f32.mrb[0].mxu0
    %v620 = vadd.f32 %v140, %v619
    %v621 = vpop.f32.mrb[0].mxu0
    %622 = vmatprep.mubr.bf16.mxu0 0
    %623 = vmatmul.mubr.bf16.gmra.mrb[0].mxu0 %v296
    %v624 = vpop.f32.mrb[0].mxu0
    %v625 = vadd.f32 %v140, %v624
    %v626 = vpop.f32.mrb[0].mxu0
    %v627 = vpop.f32.mrb[0].mxu0
    %v628 = vadd.f32 %v140, %v627
    %v629 = vpop.f32.mrb[0].mxu0
    %630 = vmatprep.mubr.bf16.mxu0 0
    %631 = vmatmul.mubr.bf16.gmra.mrb[0].mxu0 %v297
    %v632 = vpop.f32.mrb[0].mxu0
    %v633 = vadd.f32 %v140, %v632
    %v634 = vpop.f32.mrb[0].mxu0
    %v635 = vpop.f32.mrb[0].mxu0
    %v636 = vadd.f32 %v140, %v635
    %v637 = vpop.f32.mrb[0].mxu0
    %638 = vmatprep.mubr.bf16.mxu0 0
    %639 = vmatmul.mubr.bf16.gmra.mrb[0].mxu0 %v298
    %v640 = vpop.f32.mrb[0].mxu0
    %v641 = vadd.f32 %v140, %v640
    %v642 = vpop.f32.mrb[0].mxu0
    %v643 = vpop.f32.mrb[0].mxu0
    %v644 = vadd.f32 %v140, %v643
    %v645 = vpop.f32.mrb[0].mxu0
    %646 = vmatprep.mubr.bf16.mxu0 0
    %647 = vmatmul.mubr.bf16.gmra.mrb[0].mxu0 %v299
    %v648 = vpop.f32.mrb[0].mxu0
    %v649 = vadd.f32 %v140, %v648
    %v650 = vpop.f32.mrb[0].mxu0
    %v651 = vpop.f32.mrb[0].mxu0
    %v652 = vadd.f32 %v140, %v651
    %v653 = vpop.f32.mrb[0].mxu0
    %654 = vmatprep.mubr.bf16.mxu0 0
    %655 = vmatmul.mubr.bf16.gmra.mrb[0].mxu0 %v300
    %v656 = vpop.f32.mrb[0].mxu0
    %v657 = vadd.f32 %v140, %v656
    %v658 = vpop.f32.mrb[0].mxu0
    %v659 = vpop.f32.mrb[0].mxu0
    %v660 = vadd.f32 %v140, %v659
    %v661 = vpop.f32.mrb[0].mxu0
    %662 = vmatprep.mubr.bf16.mxu0 0
    %663 = vmatmul.mubr.bf16.gmra.mrb[0].mxu0 %v301
    %v664 = vpop.f32.mrb[0].mxu0
    %v665 = vadd.f32 %v140, %v664
    %v666 = vpop.f32.mrb[0].mxu0
    %v667 = vpop.f32.mrb[0].mxu0
    %v668 = vadd.f32 %v140, %v667
    %v669 = vpop.f32.mrb[0].mxu0
    %670 = vdwg.mxu0
    %vm671 = vcmp.gt.f32.partialorder %v417, 0.0
    %vm672 = vcmp.gt.f32.partialorder %v420, 0.0
    %vm673 = vcmp.gt.f32.partialorder %v425, 0.0
    %vm674 = vcmp.gt.f32.partialorder %v428, 0.0
    %vm675 = vcmp.gt.f32.partialorder %v433, 0.0
    %vm676 = vcmp.gt.f32.partialorder %v436, 0.0
    %vm677 = vcmp.gt.f32.partialorder %v441, 0.0
    %vm678 = vcmp.gt.f32.partialorder %v444, 0.0
    %vm679 = vcmp.gt.f32.partialorder %v449, 0.0
    %vm680 = vcmp.gt.f32.partialorder %v452, 0.0
    %vm681 = vcmp.gt.f32.partialorder %v457, 0.0
    %vm682 = vcmp.gt.f32.partialorder %v460, 0.0
    %vm683 = vcmp.gt.f32.partialorder %v465, 0.0
    %vm684 = vcmp.gt.f32.partialorder %v468, 0.0
    %vm685 = vcmp.gt.f32.partialorder %v473, 0.0
    %vm686 = vcmp.gt.f32.partialorder %v476, 0.0
    %vm687 = vcmp.gt.f32.partialorder %v481, 0.0
    %vm688 = vcmp.gt.f32.partialorder %v484, 0.0
    %vm689 = vcmp.gt.f32.partialorder %v489, 0.0
    %vm690 = vcmp.gt.f32.partialorder %v492, 0.0
    %vm691 = vcmp.gt.f32.partialorder %v497, 0.0
    %vm692 = vcmp.gt.f32.partialorder %v500, 0.0
    %vm693 = vcmp.gt.f32.partialorder %v505, 0.0
    %vm694 = vcmp.gt.f32.partialorder %v508, 0.0
    %vm695 = vcmp.gt.f32.partialorder %v513, 0.0
    %vm696 = vcmp.gt.f32.partialorder %v516, 0.0
    %vm697 = vcmp.gt.f32.partialorder %v521, 0.0
    %vm698 = vcmp.gt.f32.partialorder %v524, 0.0
    %vm699 = vcmp.gt.f32.partialorder %v529, 0.0
    %vm700 = vcmp.gt.f32.partialorder %v532, 0.0
    %vm701 = vcmp.gt.f32.partialorder %v537, 0.0
    %vm702 = vcmp.gt.f32.partialorder %v540, 0.0
    %vm703 = vcmp.gt.f32.partialorder %v545, 0.0
    %vm704 = vcmp.gt.f32.partialorder %v548, 0.0
    %vm705 = vcmp.gt.f32.partialorder %v553, 0.0
    %vm706 = vcmp.gt.f32.partialorder %v556, 0.0
    %vm707 = vcmp.gt.f32.partialorder %v561, 0.0
    %vm708 = vcmp.gt.f32.partialorder %v564, 0.0
    %vm709 = vcmp.gt.f32.partialorder %v569, 0.0
    %vm710 = vcmp.gt.f32.partialorder %v572, 0.0
    %vm711 = vcmp.gt.f32.partialorder %v577, 0.0
    %vm712 = vcmp.gt.f32.partialorder %v580, 0.0
    %vm713 = vcmp.gt.f32.partialorder %v585, 0.0
    %vm714 = vcmp.gt.f32.partialorder %v588, 0.0
    %vm715 = vcmp.gt.f32.partialorder %v593, 0.0
    %vm716 = vcmp.gt.f32.partialorder %v596, 0.0
    %vm717 = vcmp.gt.f32.partialorder %v601, 0.0
    %vm718 = vcmp.gt.f32.partialorder %v604, 0.0
    %vm719 = vcmp.gt.f32.partialorder %v609, 0.0
    %vm720 = vcmp.gt.f32.partialorder %v612, 0.0
    %vm721 = vcmp.gt.f32.partialorder %v617, 0.0
    %vm722 = vcmp.gt.f32.partialorder %v620, 0.0
    %vm723 = vcmp.gt.f32.partialorder %v625, 0.0
    %vm724 = vcmp.gt.f32.partialorder %v628, 0.0
    %vm725 = vcmp.gt.f32.partialorder %v633, 0.0
    %vm726 = vcmp.gt.f32.partialorder %v636, 0.0
    %vm727 = vcmp.gt.f32.partialorder %v641, 0.0
    %vm728 = vcmp.gt.f32.partialorder %v644, 0.0
    %vm729 = vcmp.gt.f32.partialorder %v649, 0.0
    %vm730 = vcmp.gt.f32.partialorder %v652, 0.0
    %vm731 = vcmp.gt.f32.partialorder %v657, 0.0
    %vm732 = vcmp.gt.f32.partialorder %v660, 0.0
    %vm733 = vcmp.gt.f32.partialorder %v665, 0.0
    %vm734 = vcmp.gt.f32.partialorder %v668, 0.0
    %v735 = vmul.f32 %v417, 0.1
    %v736 = vmul.f32 %v420, 0.1
    %v737 = vmul.f32 %v425, 0.1
    %v738 = vmul.f32 %v428, 0.1
    %v739 = vmul.f32 %v433, 0.1
    %v740 = vmul.f32 %v436, 0.1
    %v741 = vmul.f32 %v441, 0.1
    %v742 = vmul.f32 %v444, 0.1
    %v743 = vmul.f32 %v449, 0.1
    %v744 = vmul.f32 %v452, 0.1
    %v745 = vmul.f32 %v457, 0.1
    %v746 = vmul.f32 %v460, 0.1
    %v747 = vmul.f32 %v465, 0.1
    %v748 = vmul.f32 %v468, 0.1
    %v749 = vmul.f32 %v473, 0.1
    %v750 = vmul.f32 %v476, 0.1
    %v751 = vmul.f32 %v481, 0.1
    %v752 = vmul.f32 %v484, 0.1
    %v753 = vmul.f32 %v489, 0.1
    %v754 = vmul.f32 %v492, 0.1
    %v755 = vmul.f32 %v497, 0.1
    %v756 = vmul.f32 %v500, 0.1
    %v757 = vmul.f32 %v505, 0.1
    %v758 = vmul.f32 %v508, 0.1
    %v759 = vmul.f32 %v513, 0.1
    %v760 = vmul.f32 %v516, 0.1
    %v761 = vmul.f32 %v521, 0.1
    %v762 = vmul.f32 %v524, 0.1
    %v763 = vmul.f32 %v529, 0.1
    %v764 = vmul.f32 %v532, 0.1
    %v765 = vmul.f32 %v537, 0.1
    %v766 = vmul.f32 %v540, 0.1
    %v767 = vmul.f32 %v545, 0.1
    %v768 = vmul.f32 %v548, 0.1
    %v769 = vmul.f32 %v553, 0.1
    %v770 = vmul.f32 %v556, 0.1
    %v771 = vmul.f32 %v561, 0.1
    %v772 = vmul.f32 %v564, 0.1
    %v773 = vmul.f32 %v569, 0.1
    %v774 = vmul.f32 %v572, 0.1
    %v775 = vmul.f32 %v577, 0.1
    %v776 = vmul.f32 %v580, 0.1
    %v777 = vmul.f32 %v585, 0.1
    %v778 = vmul.f32 %v588, 0.1
    %v779 = vmul.f32 %v593, 0.1
    %v780 = vmul.f32 %v596, 0.1
    %v781 = vmul.f32 %v601, 0.1
    %v782 = vmul.f32 %v604, 0.1
    %v783 = vmul.f32 %v609, 0.1
    %v784 = vmul.f32 %v612, 0.1
    %v785 = vmul.f32 %v617, 0.1
    %v786 = vmul.f32 %v620, 0.1
    %v787 = vmul.f32 %v625, 0.1
    %v788 = vmul.f32 %v628, 0.1
    %v789 = vmul.f32 %v633, 0.1
    %v790 = vmul.f32 %v636, 0.1
    %v791 = vmul.f32 %v641, 0.1
    %v792 = vmul.f32 %v644, 0.1
    %v793 = vmul.f32 %v649, 0.1
    %v794 = vmul.f32 %v652, 0.1
    %v795 = vmul.f32 %v657, 0.1
    %v796 = vmul.f32 %v660, 0.1
    %v797 = vmul.f32 %v665, 0.1
    %v798 = vmul.f32 %v668, 0.1
    %v799 = vsel %vm671, %v417, %v735
    %v800 = vsel %vm672, %v420, %v736
    %v801 = vsel %vm673, %v425, %v737
    %v802 = vsel %vm674, %v428, %v738
    %v803 = vsel %vm675, %v433, %v739
    %v804 = vsel %vm676, %v436, %v740
    %v805 = vsel %vm677, %v441, %v741
    %v806 = vsel %vm678, %v444, %v742
    %v807 = vsel %vm679, %v449, %v743
    %v808 = vsel %vm680, %v452, %v744
    %v809 = vsel %vm681, %v457, %v745
    %v810 = vsel %vm682, %v460, %v746
    %v811 = vsel %vm683, %v465, %v747
    %v812 = vsel %vm684, %v468, %v748
    %v813 = vsel %vm685, %v473, %v749
    %v814 = vsel %vm686, %v476, %v750
    %v815 = vsel %vm687, %v481, %v751
    %v816 = vsel %vm688, %v484, %v752
    %v817 = vsel %vm689, %v489, %v753
    %v818 = vsel %vm690, %v492, %v754
    %v819 = vsel %vm691, %v497, %v755
    %v820 = vsel %vm692, %v500, %v756
    %v821 = vsel %vm693, %v505, %v757
    %v822 = vsel %vm694, %v508, %v758
    %v823 = vsel %vm695, %v513, %v759
    %v824 = vsel %vm696, %v516, %v760
    %v825 = vsel %vm697, %v521, %v761
    %v826 = vsel %vm698, %v524, %v762
    %v827 = vsel %vm699, %v529, %v763
    %v828 = vsel %vm700, %v532, %v764
    %v829 = vsel %vm701, %v537, %v765
    %v830 = vsel %vm702, %v540, %v766
    %v831 = vsel %vm703, %v545, %v767
    %v832 = vsel %vm704, %v548, %v768
    %v833 = vsel %vm705, %v553, %v769
    %v834 = vsel %vm706, %v556, %v770
    %v835 = vsel %vm707, %v561, %v771
    %v836 = vsel %vm708, %v564, %v772
    %v837 = vsel %vm709, %v569, %v773
    %v838 = vsel %vm710, %v572, %v774
    %v839 = vsel %vm711, %v577, %v775
    %v840 = vsel %vm712, %v580, %v776
    %v841 = vsel %vm713, %v585, %v777
    %v842 = vsel %vm714, %v588, %v778
    %v843 = vsel %vm715, %v593, %v779
    %v844 = vsel %vm716, %v596, %v780
    %v845 = vsel %vm717, %v601, %v781
    %v846 = vsel %vm718, %v604, %v782
    %v847 = vsel %vm719, %v609, %v783
    %v848 = vsel %vm720, %v612, %v784
    %v849 = vsel %vm721, %v617, %v785
    %v850 = vsel %vm722, %v620, %v786
    %v851 = vsel %vm723, %v625, %v787
    %v852 = vsel %vm724, %v628, %v788
    %v853 = vsel %vm725, %v633, %v789
    %v854 = vsel %vm726, %v636, %v790
    %v855 = vsel %vm727, %v641, %v791
    %v856 = vsel %vm728, %v644, %v792
    %v857 = vsel %vm729, %v649, %v793
    %v858 = vsel %vm730, %v652, %v794
    %v859 = vsel %vm731, %v657, %v795
    %v860 = vsel %vm732, %v660, %v796
    %v861 = vsel %vm733, %v665, %v797
    %v862 = vsel %vm734, %v668, %v798
    %v863 = vld [vmem:[#allocation4] sm:$0xf]
    %v864 = vld [vmem:[#allocation4 + $0x4] sm:$0xf]
    %v865 = vld [vmem:[#allocation4 + $0x8] sm:$0xf]
    %v866 = vld [vmem:[#allocation4 + $0xc] sm:$0xf]
    %v867 = vld [vmem:[#allocation4 + $0x10] sm:$0xf]
    %v868 = vld [vmem:[#allocation4 + $0x14] sm:$0xf]
    %v869 = vld [vmem:[#allocation4 + $0x18] sm:$0xf]
    %v870 = vld [vmem:[#allocation4 + $0x1c] sm:$0xf]
    %v871 = vld [vmem:[#allocation4 + $0x20] sm:$0xf]
    %v872 = vld [vmem:[#allocation4 + $0x24] sm:$0xf]
    %v873 = vld [vmem:[#allocation4 + $0x28] sm:$0xf]
    %v874 = vld [vmem:[#allocation4 + $0x2c] sm:$0xf]
    %v875 = vld [vmem:[#allocation4 + $0x30] sm:$0xf]
    %v876 = vld [vmem:[#allocation4 + $0x34] sm:$0xf]
    %v877 = vld [vmem:[#allocation4 + $0x38] sm:$0xf]
    %v878 = vld [vmem:[#allocation4 + $0x3c] sm:$0xf]
    %v879 = vld [vmem:[%s4] sm:$0x1]
    %v880 = vpack.c.bf16 %v800, %v799
    %v881 = vpack.c.bf16 %v802, %v801
    %v882 = vpack.c.bf16 %v804, %v803
    %v883 = vpack.c.bf16 %v806, %v805
    %v884 = vpack.c.bf16 %v808, %v807
    %v885 = vpack.c.bf16 %v810, %v809
    %v886 = vpack.c.bf16 %v812, %v811
    %v887 = vpack.c.bf16 %v814, %v813
    %v888 = vpack.c.bf16 %v816, %v815
    %v889 = vpack.c.bf16 %v818, %v817
    %v890 = vpack.c.bf16 %v820, %v819
    %v891 = vpack.c.bf16 %v822, %v821
    %v892 = vpack.c.bf16 %v824, %v823
    %v893 = vpack.c.bf16 %v826, %v825
    %v894 = vpack.c.bf16 %v828, %v827
    %v895 = vpack.c.bf16 %v830, %v829
    %v896 = vpack.c.bf16 %v832, %v831
    %v897 = vpack.c.bf16 %v834, %v833
    %v898 = vpack.c.bf16 %v836, %v835
    %v899 = vpack.c.bf16 %v838, %v837
    %v900 = vpack.c.bf16 %v840, %v839
    %v901 = vpack.c.bf16 %v842, %v841
    %v902 = vpack.c.bf16 %v844, %v843
    %v903 = vpack.c.bf16 %v846, %v845
    %v904 = vpack.c.bf16 %v848, %v847
    %v905 = vpack.c.bf16 %v850, %v849
    %v906 = vpack.c.bf16 %v852, %v851
    %v907 = vpack.c.bf16 %v854, %v853
    %v908 = vpack.c.bf16 %v856, %v855
    %v909 = vpack.c.bf16 %v858, %v857
    %v910 = vpack.c.bf16 %v860, %v859
    %v911 = vpack.c.bf16 %v862, %v861
    %v913 = vlaneseq
    %v914 = vshrl.u32 %v913, 7
    %v915 = vsub.s32 0, %v914
    %v916 = vrot.slane %v879, %v915
    %v934 = vunpack.c.l.b16 %v863
    %v935 = vunpack.c.l.b16 %v864
    %v936 = vunpack.c.l.b16 %v865
    %v937 = vunpack.c.l.b16 %v866
    %v938 = vunpack.c.l.b16 %v867
    %v939 = vunpack.c.l.b16 %v868
    %v940 = vunpack.c.l.b16 %v869
    %v941 = vunpack.c.l.b16 %v870
    %v942 = vunpack.c.l.b16 %v871
    %v943 = vunpack.c.l.b16 %v872
    %v944 = vunpack.c.l.b16 %v873
    %v945 = vunpack.c.l.b16 %v874
    %v946 = vunpack.c.l.b16 %v875
    %v947 = vunpack.c.l.b16 %v876
    %v948 = vunpack.c.l.b16 %v877
    %v949 = vunpack.c.l.b16 %v878
    %v950 = vpack.c.b16 %v935, %v934
    %v951 = vpack.c.b16 %v937, %v936
    %v952 = vpack.c.b16 %v939, %v938
    %v953 = vpack.c.b16 %v941, %v940
    %v954 = vpack.c.b16 %v943, %v942
    %v955 = vpack.c.b16 %v945, %v944
    %v956 = vpack.c.b16 %v947, %v946
    %v957 = vpack.c.b16 %v949, %v948
    %966 = vmatprep.subr.bf16.mxu0 0
    %967 = vmatpush1.bf16.msra.mxu0 %v950
    %968 = vmatprep.subr.bf16.mxu0 0
    %969 = vmatpush1.bf16.msra.mxu0 %v951
    %970 = vmatprep.subr.bf16.mxu0 0
    %971 = vmatpush1.bf16.msra.mxu0 %v952
    %972 = vmatprep.subr.bf16.mxu0 0
    %973 = vmatpush1.bf16.msra.mxu0 %v953
    %974 = vmatprep.subr.bf16.mxu0 0
    %975 = vmatpush1.bf16.msra.mxu0 %v954
    %976 = vmatprep.subr.bf16.mxu0 0
    %977 = vmatpush1.bf16.msra.mxu0 %v955
    %978 = vmatprep.subr.bf16.mxu0 0
    %979 = vmatpush1.bf16.msra.mxu0 %v956
    %980 = vmatprep.subr.bf16.mxu0 0
    %981 = vmatpush1.bf16.msra.mxu0 %v957
    %982 = vmatprep.subr.bf16.mxu0 0
    %983 = vmatpush1.bf16.msra.mxu0 0
    %984 = vmatprep.subr.bf16.mxu0 0
    %985 = vmatpush1.bf16.msra.mxu0 0
    %986 = vmatprep.subr.bf16.mxu0 0
    %987 = vmatpush1.bf16.msra.mxu0 0
    %988 = vmatprep.subr.bf16.mxu0 0
    %989 = vmatpush1.bf16.msra.mxu0 0
    %990 = vmatprep.subr.bf16.mxu0 0
    %991 = vmatpush1.bf16.msra.mxu0 0
    %992 = vmatprep.subr.bf16.mxu0 0
    %993 = vmatpush1.bf16.msra.mxu0 0
    %994 = vmatprep.subr.bf16.mxu0 0
    %995 = vmatpush1.bf16.msra.mxu0 0
    %996 = vmatprep.subr.bf16.mxu0 0
    %997 = vmatpush1.bf16.msra.mxu0 0
    %998 = vmatprep.mubr.bf16.mxu0 0
    %999 = vmatmul.mubr.bf16.gmra.mrb[0].mxu0 %v880
    %v1000 = vpop.f32.mrb[0].mxu0
    %v1001 = vadd.f32 %v916, %v1000
    %v1002 = vpop.f32.mrb[0].mxu0
    %v1003 = vpop.f32.mrb[0].mxu0
    %v1004 = vadd.f32 %v916, %v1003
    %v1005 = vpop.f32.mrb[0].mxu0
    %1006 = vmatprep.mubr.bf16.mxu0 0
    %1007 = vmatmul.mubr.bf16.gmra.mrb[0].mxu0 %v881
    %v1008 = vpop.f32.mrb[0].mxu0
    %v1009 = vadd.f32 %v916, %v1008
    %v1010 = vpop.f32.mrb[0].mxu0
    %v1011 = vpop.f32.mrb[0].mxu0
    %v1012 = vadd.f32 %v916, %v1011
    %v1013 = vpop.f32.mrb[0].mxu0
    %1014 = vmatprep.mubr.bf16.mxu0 0
    %1015 = vmatmul.mubr.bf16.gmra.mrb[0].mxu0 %v882
    %v1016 = vpop.f32.mrb[0].mxu0
    %v1017 = vadd.f32 %v916, %v1016
    %v1018 = vpop.f32.mrb[0].mxu0
    %v1019 = vpop.f32.mrb[0].mxu0
    %v1020 = vadd.f32 %v916, %v1019
    %v1021 = vpop.f32.mrb[0].mxu0
    %1022 = vmatprep.mubr.bf16.mxu0 0
    %1023 = vmatmul.mubr.bf16.gmra.mrb[0].mxu0 %v883
    %v1024 = vpop.f32.mrb[0].mxu0
    %v1025 = vadd.f32 %v916, %v1024
    %v1026 = vpop.f32.mrb[0].mxu0
    %v1027 = vpop.f32.mrb[0].mxu0
    %v1028 = vadd.f32 %v916, %v1027
    %v1029 = vpop.f32.mrb[0].mxu0
    %1030 = vmatprep.mubr.bf16.mxu0 0
    %1031 = vmatmul.mubr.bf16.gmra.mrb[0].mxu0 %v884
    %v1032 = vpop.f32.mrb[0].mxu0
    %v1033 = vadd.f32 %v916, %v1032
    %v1034 = vpop.f32.mrb[0].mxu0
    %v1035 = vpop.f32.mrb[0].mxu0
    %v1036 = vadd.f32 %v916, %v1035
    %v1037 = vpop.f32.mrb[0].mxu0
    %1038 = vmatprep.mubr.bf16.mxu0 0
    %1039 = vmatmul.mubr.bf16.gmra.mrb[0].mxu0 %v885
    %v1040 = vpop.f32.mrb[0].mxu0
    %v1041 = vadd.f32 %v916, %v1040
    %v1042 = vpop.f32.mrb[0].mxu0
    %v1043 = vpop.f32.mrb[0].mxu0
    %v1044 = vadd.f32 %v916, %v1043
    %v1045 = vpop.f32.mrb[0].mxu0
    %1046 = vmatprep.mubr.bf16.mxu0 0
    %1047 = vmatmul.mubr.bf16.gmra.mrb[0].mxu0 %v886
    %v1048 = vpop.f32.mrb[0].mxu0
    %v1049 = vadd.f32 %v916, %v1048
    %v1050 = vpop.f32.mrb[0].mxu0
    %v1051 = vpop.f32.mrb[0].mxu0
    %v1052 = vadd.f32 %v916, %v1051
    %v1053 = vpop.f32.mrb[0].mxu0
    %1054 = vmatprep.mubr.bf16.mxu0 0
    %1055 = vmatmul.mubr.bf16.gmra.mrb[0].mxu0 %v887
    %v1056 = vpop.f32.mrb[0].mxu0
    %v1057 = vadd.f32 %v916, %v1056
    %v1058 = vpop.f32.mrb[0].mxu0
    %v1059 = vpop.f32.mrb[0].mxu0
    %v1060 = vadd.f32 %v916, %v1059
    %v1061 = vpop.f32.mrb[0].mxu0
    %1062 = vmatprep.mubr.bf16.mxu0 0
    %1063 = vmatmul.mubr.bf16.gmra.mrb[0].mxu0 %v888
    %v1064 = vpop.f32.mrb[0].mxu0
    %v1065 = vadd.f32 %v916, %v1064
    %v1066 = vpop.f32.mrb[0].mxu0
    %v1067 = vpop.f32.mrb[0].mxu0
    %v1068 = vadd.f32 %v916, %v1067
    %v1069 = vpop.f32.mrb[0].mxu0
    %1070 = vmatprep.mubr.bf16.mxu0 0
    %1071 = vmatmul.mubr.bf16.gmra.mrb[0].mxu0 %v889
    %v1072 = vpop.f32.mrb[0].mxu0
    %v1073 = vadd.f32 %v916, %v1072
    %v1074 = vpop.f32.mrb[0].mxu0
    %v1075 = vpop.f32.mrb[0].mxu0
    %v1076 = vadd.f32 %v916, %v1075
    %v1077 = vpop.f32.mrb[0].mxu0
    %1078 = vmatprep.mubr.bf16.mxu0 0
    %1079 = vmatmul.mubr.bf16.gmra.mrb[0].mxu0 %v890
    %v1080 = vpop.f32.mrb[0].mxu0
    %v1081 = vadd.f32 %v916, %v1080
    %v1082 = vpop.f32.mrb[0].mxu0
    %v1083 = vpop.f32.mrb[0].mxu0
    %v1084 = vadd.f32 %v916, %v1083
    %v1085 = vpop.f32.mrb[0].mxu0
    %1086 = vmatprep.mubr.bf16.mxu0 0
    %1087 = vmatmul.mubr.bf16.gmra.mrb[0].mxu0 %v891
    %v1088 = vpop.f32.mrb[0].mxu0
    %v1089 = vadd.f32 %v916, %v1088
    %v1090 = vpop.f32.mrb[0].mxu0
    %v1091 = vpop.f32.mrb[0].mxu0
    %v1092 = vadd.f32 %v916, %v1091
    %v1093 = vpop.f32.mrb[0].mxu0
    %1094 = vmatprep.mubr.bf16.mxu0 0
    %1095 = vmatmul.mubr.bf16.gmra.mrb[0].mxu0 %v892
    %v1096 = vpop.f32.mrb[0].mxu0
    %v1097 = vadd.f32 %v916, %v1096
    %v1098 = vpop.f32.mrb[0].mxu0
    %v1099 = vpop.f32.mrb[0].mxu0
    %v1100 = vadd.f32 %v916, %v1099
    %v1101 = vpop.f32.mrb[0].mxu0
    %1102 = vmatprep.mubr.bf16.mxu0 0
    %1103 = vmatmul.mubr.bf16.gmra.mrb[0].mxu0 %v893
    %v1104 = vpop.f32.mrb[0].mxu0
    %v1105 = vadd.f32 %v916, %v1104
    %v1106 = vpop.f32.mrb[0].mxu0
    %v1107 = vpop.f32.mrb[0].mxu0
    %v1108 = vadd.f32 %v916, %v1107
    %v1109 = vpop.f32.mrb[0].mxu0
    %1110 = vmatprep.mubr.bf16.mxu0 0
    %1111 = vmatmul.mubr.bf16.gmra.mrb[0].mxu0 %v894
    %v1112 = vpop.f32.mrb[0].mxu0
    %v1113 = vadd.f32 %v916, %v1112
    %v1114 = vpop.f32.mrb[0].mxu0
    %v1115 = vpop.f32.mrb[0].mxu0
    %v1116 = vadd.f32 %v916, %v1115
    %v1117 = vpop.f32.mrb[0].mxu0
    %1118 = vmatprep.mubr.bf16.mxu0 0
    %1119 = vmatmul.mubr.bf16.gmra.mrb[0].mxu0 %v895
    %v1120 = vpop.f32.mrb[0].mxu0
    %v1121 = vadd.f32 %v916, %v1120
    %v1122 = vpop.f32.mrb[0].mxu0
    %v1123 = vpop.f32.mrb[0].mxu0
    %v1124 = vadd.f32 %v916, %v1123
    %v1125 = vpop.f32.mrb[0].mxu0
    %1126 = vmatprep.mubr.bf16.mxu0 0
    %1127 = vmatmul.mubr.bf16.gmra.mrb[0].mxu0 %v896
    %v1128 = vpop.f32.mrb[0].mxu0
    %v1129 = vadd.f32 %v916, %v1128
    %v1130 = vpop.f32.mrb[0].mxu0
    %v1131 = vpop.f32.mrb[0].mxu0
    %v1132 = vadd.f32 %v916, %v1131
    %v1133 = vpop.f32.mrb[0].mxu0
    %1134 = vmatprep.mubr.bf16.mxu0 0
    %1135 = vmatmul.mubr.bf16.gmra.mrb[0].mxu0 %v897
    %v1136 = vpop.f32.mrb[0].mxu0
    %v1137 = vadd.f32 %v916, %v1136
    %v1138 = vpop.f32.mrb[0].mxu0
    %v1139 = vpop.f32.mrb[0].mxu0
    %v1140 = vadd.f32 %v916, %v1139
    %v1141 = vpop.f32.mrb[0].mxu0
    %1142 = vmatprep.mubr.bf16.mxu0 0
    %1143 = vmatmul.mubr.bf16.gmra.mrb[0].mxu0 %v898
    %v1144 = vpop.f32.mrb[0].mxu0
    %v1145 = vadd.f32 %v916, %v1144
    %v1146 = vpop.f32.mrb[0].mxu0
    %v1147 = vpop.f32.mrb[0].mxu0
    %v1148 = vadd.f32 %v916, %v1147
    %v1149 = vpop.f32.mrb[0].mxu0
    %1150 = vmatprep.mubr.bf16.mxu0 0
    %1151 = vmatmul.mubr.bf16.gmra.mrb[0].mxu0 %v899
    %v1152 = vpop.f32.mrb[0].mxu0
    %v1153 = vadd.f32 %v916, %v1152
    %v1154 = vpop.f32.mrb[0].mxu0
    %v1155 = vpop.f32.mrb[0].mxu0
    %v1156 = vadd.f32 %v916, %v1155
    %v1157 = vpop.f32.mrb[0].mxu0
    %1158 = vmatprep.mubr.bf16.mxu0 0
    %1159 = vmatmul.mubr.bf16.gmra.mrb[0].mxu0 %v900
    %v1160 = vpop.f32.mrb[0].mxu0
    %v1161 = vadd.f32 %v916, %v1160
    %v1162 = vpop.f32.mrb[0].mxu0
    %v1163 = vpop.f32.mrb[0].mxu0
    %v1164 = vadd.f32 %v916, %v1163
    %v1165 = vpop.f32.mrb[0].mxu0
    %1166 = vmatprep.mubr.bf16.mxu0 0
    %1167 = vmatmul.mubr.bf16.gmra.mrb[0].mxu0 %v901
    %v1168 = vpop.f32.mrb[0].mxu0
    %v1169 = vadd.f32 %v916, %v1168
    %v1170 = vpop.f32.mrb[0].mxu0
    %v1171 = vpop.f32.mrb[0].mxu0
    %v1172 = vadd.f32 %v916, %v1171
    %v1173 = vpop.f32.mrb[0].mxu0
    %1174 = vmatprep.mubr.bf16.mxu0 0
    %1175 = vmatmul.mubr.bf16.gmra.mrb[0].mxu0 %v902
    %v1176 = vpop.f32.mrb[0].mxu0
    %v1177 = vadd.f32 %v916, %v1176
    %v1178 = vpop.f32.mrb[0].mxu0
    %v1179 = vpop.f32.mrb[0].mxu0
    %v1180 = vadd.f32 %v916, %v1179
    %v1181 = vpop.f32.mrb[0].mxu0
    %1182 = vmatprep.mubr.bf16.mxu0 0
    %1183 = vmatmul.mubr.bf16.gmra.mrb[0].mxu0 %v903
    %v1184 = vpop.f32.mrb[0].mxu0
    %v1185 = vadd.f32 %v916, %v1184
    %v1186 = vpop.f32.mrb[0].mxu0
    %v1187 = vpop.f32.mrb[0].mxu0
    %v1188 = vadd.f32 %v916, %v1187
    %v1189 = vpop.f32.mrb[0].mxu0
    %1190 = vmatprep.mubr.bf16.mxu0 0
    %1191 = vmatmul.mubr.bf16.gmra.mrb[0].mxu0 %v904
    %v1192 = vpop.f32.mrb[0].mxu0
    %v1193 = vadd.f32 %v916, %v1192
    %v1194 = vpop.f32.mrb[0].mxu0
    %v1195 = vpop.f32.mrb[0].mxu0
    %v1196 = vadd.f32 %v916, %v1195
    %v1197 = vpop.f32.mrb[0].mxu0
    %1198 = vmatprep.mubr.bf16.mxu0 0
    %1199 = vmatmul.mubr.bf16.gmra.mrb[0].mxu0 %v905
    %v1200 = vpop.f32.mrb[0].mxu0
    %v1201 = vadd.f32 %v916, %v1200
    %v1202 = vpop.f32.mrb[0].mxu0
    %v1203 = vpop.f32.mrb[0].mxu0
    %v1204 = vadd.f32 %v916, %v1203
    %v1205 = vpop.f32.mrb[0].mxu0
    %1206 = vmatprep.mubr.bf16.mxu0 0
    %1207 = vmatmul.mubr.bf16.gmra.mrb[0].mxu0 %v906
    %v1208 = vpop.f32.mrb[0].mxu0
    %v1209 = vadd.f32 %v916, %v1208
    %v1210 = vpop.f32.mrb[0].mxu0
    %v1211 = vpop.f32.mrb[0].mxu0
    %v1212 = vadd.f32 %v916, %v1211
    %v1213 = vpop.f32.mrb[0].mxu0
    %1214 = vmatprep.mubr.bf16.mxu0 0
    %1215 = vmatmul.mubr.bf16.gmra.mrb[0].mxu0 %v907
    %v1216 = vpop.f32.mrb[0].mxu0
    %v1217 = vadd.f32 %v916, %v1216
    %v1218 = vpop.f32.mrb[0].mxu0
    %v1219 = vpop.f32.mrb[0].mxu0
    %v1220 = vadd.f32 %v916, %v1219
    %v1221 = vpop.f32.mrb[0].mxu0
    %1222 = vmatprep.mubr.bf16.mxu0 0
    %1223 = vmatmul.mubr.bf16.gmra.mrb[0].mxu0 %v908
    %v1224 = vpop.f32.mrb[0].mxu0
    %v1225 = vadd.f32 %v916, %v1224
    %v1226 = vpop.f32.mrb[0].mxu0
    %v1227 = vpop.f32.mrb[0].mxu0
    %v1228 = vadd.f32 %v916, %v1227
    %v1229 = vpop.f32.mrb[0].mxu0
    %1230 = vmatprep.mubr.bf16.mxu0 0
    %1231 = vmatmul.mubr.bf16.gmra.mrb[0].mxu0 %v909
    %v1232 = vpop.f32.mrb[0].mxu0
    %v1233 = vadd.f32 %v916, %v1232
    %v1234 = vpop.f32.mrb[0].mxu0
    %v1235 = vpop.f32.mrb[0].mxu0
    %v1236 = vadd.f32 %v916, %v1235
    %v1237 = vpop.f32.mrb[0].mxu0
    %1238 = vmatprep.mubr.bf16.mxu0 0
    %1239 = vmatmul.mubr.bf16.gmra.mrb[0].mxu0 %v910
    %v1240 = vpop.f32.mrb[0].mxu0
    %v1241 = vadd.f32 %v916, %v1240
    %v1242 = vpop.f32.mrb[0].mxu0
    %v1243 = vpop.f32.mrb[0].mxu0
    %v1244 = vadd.f32 %v916, %v1243
    %v1245 = vpop.f32.mrb[0].mxu0
    %1246 = vmatprep.mubr.bf16.mxu0 0
    %1247 = vmatmul.mubr.bf16.gmra.mrb[0].mxu0 %v911
    %v1248 = vpop.f32.mrb[0].mxu0
    %v1249 = vadd.f32 %v916, %v1248
    %v1250 = vpop.f32.mrb[0].mxu0
    %v1251 = vpop.f32.mrb[0].mxu0
    %v1252 = vadd.f32 %v916, %v1251
    %v1253 = vpop.f32.mrb[0].mxu0
    %1254 = vdwg.mxu0
    %vm1255 = vcmp.gt.f32.partialorder %v1001, 0.0
    %vm1256 = vcmp.gt.f32.partialorder %v1004, 0.0
    %vm1257 = vcmp.gt.f32.partialorder %v1009, 0.0
    %vm1258 = vcmp.gt.f32.partialorder %v1012, 0.0
    %vm1259 = vcmp.gt.f32.partialorder %v1017, 0.0
    %vm1260 = vcmp.gt.f32.partialorder %v1020, 0.0
    %vm1261 = vcmp.gt.f32.partialorder %v1025, 0.0
    %vm1262 = vcmp.gt.f32.partialorder %v1028, 0.0
    %vm1263 = vcmp.gt.f32.partialorder %v1033, 0.0
    %vm1264 = vcmp.gt.f32.partialorder %v1036, 0.0
    %vm1265 = vcmp.gt.f32.partialorder %v1041, 0.0
    %vm1266 = vcmp.gt.f32.partialorder %v1044, 0.0
    %vm1267 = vcmp.gt.f32.partialorder %v1049, 0.0
    %vm1268 = vcmp.gt.f32.partialorder %v1052, 0.0
    %vm1269 = vcmp.gt.f32.partialorder %v1057, 0.0
    %vm1270 = vcmp.gt.f32.partialorder %v1060, 0.0
    %vm1271 = vcmp.gt.f32.partialorder %v1065, 0.0
    %vm1272 = vcmp.gt.f32.partialorder %v1068, 0.0
    %vm1273 = vcmp.gt.f32.partialorder %v1073, 0.0
    %vm1274 = vcmp.gt.f32.partialorder %v1076, 0.0
    %vm1275 = vcmp.gt.f32.partialorder %v1081, 0.0
    %vm1276 = vcmp.gt.f32.partialorder %v1084, 0.0
    %vm1277 = vcmp.gt.f32.partialorder %v1089, 0.0
    %vm1278 = vcmp.gt.f32.partialorder %v1092, 0.0
    %vm1279 = vcmp.gt.f32.partialorder %v1097, 0.0
    %vm1280 = vcmp.gt.f32.partialorder %v1100, 0.0
    %vm1281 = vcmp.gt.f32.partialorder %v1105, 0.0
    %vm1282 = vcmp.gt.f32.partialorder %v1108, 0.0
    %vm1283 = vcmp.gt.f32.partialorder %v1113, 0.0
    %vm1284 = vcmp.gt.f32.partialorder %v1116, 0.0
    %vm1285 = vcmp.gt.f32.partialorder %v1121, 0.0
    %vm1286 = vcmp.gt.f32.partialorder %v1124, 0.0
    %vm1287 = vcmp.gt.f32.partialorder %v1129, 0.0
    %vm1288 = vcmp.gt.f32.partialorder %v1132, 0.0
    %vm1289 = vcmp.gt.f32.partialorder %v1137, 0.0
    %vm1290 = vcmp.gt.f32.partialorder %v1140, 0.0
    %vm1291 = vcmp.gt.f32.partialorder %v1145, 0.0
    %vm1292 = vcmp.gt.f32.partialorder %v1148, 0.0
    %vm1293 = vcmp.gt.f32.partialorder %v1153, 0.0
    %vm1294 = vcmp.gt.f32.partialorder %v1156, 0.0
    %vm1295 = vcmp.gt.f32.partialorder %v1161, 0.0
    %vm1296 = vcmp.gt.f32.partialorder %v1164, 0.0
    %vm1297 = vcmp.gt.f32.partialorder %v1169, 0.0
    %vm1298 = vcmp.gt.f32.partialorder %v1172, 0.0
    %vm1299 = vcmp.gt.f32.partialorder %v1177, 0.0
    %vm1300 = vcmp.gt.f32.partialorder %v1180, 0.0
    %vm1301 = vcmp.gt.f32.partialorder %v1185, 0.0
    %vm1302 = vcmp.gt.f32.partialorder %v1188, 0.0
    %vm1303 = vcmp.gt.f32.partialorder %v1193, 0.0
    %vm1304 = vcmp.gt.f32.partialorder %v1196, 0.0
    %vm1305 = vcmp.gt.f32.partialorder %v1201, 0.0
    %vm1306 = vcmp.gt.f32.partialorder %v1204, 0.0
    %vm1307 = vcmp.gt.f32.partialorder %v1209, 0.0
    %vm1308 = vcmp.gt.f32.partialorder %v1212, 0.0
    %vm1309 = vcmp.gt.f32.partialorder %v1217, 0.0
    %vm1310 = vcmp.gt.f32.partialorder %v1220, 0.0
    %vm1311 = vcmp.gt.f32.partialorder %v1225, 0.0
    %vm1312 = vcmp.gt.f32.partialorder %v1228, 0.0
    %vm1313 = vcmp.gt.f32.partialorder %v1233, 0.0
    %vm1314 = vcmp.gt.f32.partialorder %v1236, 0.0
    %vm1315 = vcmp.gt.f32.partialorder %v1241, 0.0
    %vm1316 = vcmp.gt.f32.partialorder %v1244, 0.0
    %vm1317 = vcmp.gt.f32.partialorder %v1249, 0.0
    %vm1318 = vcmp.gt.f32.partialorder %v1252, 0.0
    %v1319 = vmul.f32 %v1001, 0.1
    %v1320 = vmul.f32 %v1004, 0.1
    %v1321 = vmul.f32 %v1009, 0.1
    %v1322 = vmul.f32 %v1012, 0.1
    %v1323 = vmul.f32 %v1017, 0.1
    %v1324 = vmul.f32 %v1020, 0.1
    %v1325 = vmul.f32 %v1025, 0.1
    %v1326 = vmul.f32 %v1028, 0.1
    %v1327 = vmul.f32 %v1033, 0.1
    %v1328 = vmul.f32 %v1036, 0.1
    %v1329 = vmul.f32 %v1041, 0.1
    %v1330 = vmul.f32 %v1044, 0.1
    %v1331 = vmul.f32 %v1049, 0.1
    %v1332 = vmul.f32 %v1052, 0.1
    %v1333 = vmul.f32 %v1057, 0.1
    %v1334 = vmul.f32 %v1060, 0.1
    %v1335 = vmul.f32 %v1065, 0.1
    %v1336 = vmul.f32 %v1068, 0.1
    %v1337 = vmul.f32 %v1073, 0.1
    %v1338 = vmul.f32 %v1076, 0.1
    %v1339 = vmul.f32 %v1081, 0.1
    %v1340 = vmul.f32 %v1084, 0.1
    %v1341 = vmul.f32 %v1089, 0.1
    %v1342 = vmul.f32 %v1092, 0.1
    %v1343 = vmul.f32 %v1097, 0.1
    %v1344 = vmul.f32 %v1100, 0.1
    %v1345 = vmul.f32 %v1105, 0.1
    %v1346 = vmul.f32 %v1108, 0.1
    %v1347 = vmul.f32 %v1113, 0.1
    %v1348 = vmul.f32 %v1116, 0.1
    %v1349 = vmul.f32 %v1121, 0.1
    %v1350 = vmul.f32 %v1124, 0.1
    %v1351 = vmul.f32 %v1129, 0.1
    %v1352 = vmul.f32 %v1132, 0.1
    %v1353 = vmul.f32 %v1137, 0.1
    %v1354 = vmul.f32 %v1140, 0.1
    %v1355 = vmul.f32 %v1145, 0.1
    %v1356 = vmul.f32 %v1148, 0.1
    %v1357 = vmul.f32 %v1153, 0.1
    %v1358 = vmul.f32 %v1156, 0.1
    %v1359 = vmul.f32 %v1161, 0.1
    %v1360 = vmul.f32 %v1164, 0.1
    %v1361 = vmul.f32 %v1169, 0.1
    %v1362 = vmul.f32 %v1172, 0.1
    %v1363 = vmul.f32 %v1177, 0.1
    %v1364 = vmul.f32 %v1180, 0.1
    %v1365 = vmul.f32 %v1185, 0.1
    %v1366 = vmul.f32 %v1188, 0.1
    %v1367 = vmul.f32 %v1193, 0.1
    %v1368 = vmul.f32 %v1196, 0.1
    %v1369 = vmul.f32 %v1201, 0.1
    %v1370 = vmul.f32 %v1204, 0.1
    %v1371 = vmul.f32 %v1209, 0.1
    %v1372 = vmul.f32 %v1212, 0.1
    %v1373 = vmul.f32 %v1217, 0.1
    %v1374 = vmul.f32 %v1220, 0.1
    %v1375 = vmul.f32 %v1225, 0.1
    %v1376 = vmul.f32 %v1228, 0.1
    %v1377 = vmul.f32 %v1233, 0.1
    %v1378 = vmul.f32 %v1236, 0.1
    %v1379 = vmul.f32 %v1241, 0.1
    %v1380 = vmul.f32 %v1244, 0.1
    %v1381 = vmul.f32 %v1249, 0.1
    %v1382 = vmul.f32 %v1252, 0.1
    %v1383 = vsel %vm1255, %v1001, %v1319
    %v1384 = vsel %vm1256, %v1004, %v1320
    %v1385 = vsel %vm1257, %v1009, %v1321
    %v1386 = vsel %vm1258, %v1012, %v1322
    %v1387 = vsel %vm1259, %v1017, %v1323
    %v1388 = vsel %vm1260, %v1020, %v1324
    %v1389 = vsel %vm1261, %v1025, %v1325
    %v1390 = vsel %vm1262, %v1028, %v1326
    %v1391 = vsel %vm1263, %v1033, %v1327
    %v1392 = vsel %vm1264, %v1036, %v1328
    %v1393 = vsel %vm1265, %v1041, %v1329
    %v1394 = vsel %vm1266, %v1044, %v1330
    %v1395 = vsel %vm1267, %v1049, %v1331
    %v1396 = vsel %vm1268, %v1052, %v1332
    %v1397 = vsel %vm1269, %v1057, %v1333
    %v1398 = vsel %vm1270, %v1060, %v1334
    %v1399 = vsel %vm1271, %v1065, %v1335
    %v1400 = vsel %vm1272, %v1068, %v1336
    %v1401 = vsel %vm1273, %v1073, %v1337
    %v1402 = vsel %vm1274, %v1076, %v1338
    %v1403 = vsel %vm1275, %v1081, %v1339
    %v1404 = vsel %vm1276, %v1084, %v1340
    %v1405 = vsel %vm1277, %v1089, %v1341
    %v1406 = vsel %vm1278, %v1092, %v1342
    %v1407 = vsel %vm1279, %v1097, %v1343
    %v1408 = vsel %vm1280, %v1100, %v1344
    %v1409 = vsel %vm1281, %v1105, %v1345
    %v1410 = vsel %vm1282, %v1108, %v1346
    %v1411 = vsel %vm1283, %v1113, %v1347
    %v1412 = vsel %vm1284, %v1116, %v1348
    %v1413 = vsel %vm1285, %v1121, %v1349
    %v1414 = vsel %vm1286, %v1124, %v1350
    %v1415 = vsel %vm1287, %v1129, %v1351
    %v1416 = vsel %vm1288, %v1132, %v1352
    %v1417 = vsel %vm1289, %v1137, %v1353
    %v1418 = vsel %vm1290, %v1140, %v1354
    %v1419 = vsel %vm1291, %v1145, %v1355
    %v1420 = vsel %vm1292, %v1148, %v1356
    %v1421 = vsel %vm1293, %v1153, %v1357
    %v1422 = vsel %vm1294, %v1156, %v1358
    %v1423 = vsel %vm1295, %v1161, %v1359
    %v1424 = vsel %vm1296, %v1164, %v1360
    %v1425 = vsel %vm1297, %v1169, %v1361
    %v1426 = vsel %vm1298, %v1172, %v1362
    %v1427 = vsel %vm1299, %v1177, %v1363
    %v1428 = vsel %vm1300, %v1180, %v1364
    %v1429 = vsel %vm1301, %v1185, %v1365
    %v1430 = vsel %vm1302, %v1188, %v1366
    %v1431 = vsel %vm1303, %v1193, %v1367
    %v1432 = vsel %vm1304, %v1196, %v1368
    %v1433 = vsel %vm1305, %v1201, %v1369
    %v1434 = vsel %vm1306, %v1204, %v1370
    %v1435 = vsel %vm1307, %v1209, %v1371
    %v1436 = vsel %vm1308, %v1212, %v1372
    %v1437 = vsel %vm1309, %v1217, %v1373
    %v1438 = vsel %vm1310, %v1220, %v1374
    %v1439 = vsel %vm1311, %v1225, %v1375
    %v1440 = vsel %vm1312, %v1228, %v1376
    %v1441 = vsel %vm1313, %v1233, %v1377
    %v1442 = vsel %vm1314, %v1236, %v1378
    %v1443 = vsel %vm1315, %v1241, %v1379
    %v1444 = vsel %vm1316, %v1244, %v1380
    %v1445 = vsel %vm1317, %v1249, %v1381
    %v1446 = vsel %vm1318, %v1252, %v1382
    %v1447 = vld [vmem:[%s5] sm:$0xf]
    %v1448 = vld [vmem:[%s5 + $0x4] sm:$0xf]
    %v1449 = vld [vmem:[%s5 + $0x8] sm:$0xf]
    %v1450 = vld [vmem:[%s5 + $0xc] sm:$0xf]
    %v1451 = vld [vmem:[%s5 + $0x10] sm:$0xf]
    %v1452 = vld [vmem:[%s5 + $0x14] sm:$0xf]
    %v1453 = vld [vmem:[%s5 + $0x18] sm:$0xf]
    %v1454 = vld [vmem:[%s5 + $0x1c] sm:$0xf]
    %v1455 = vld [vmem:[%s5 + $0x20] sm:$0xf]
    %v1456 = vld [vmem:[%s5 + $0x24] sm:$0xf]
    %v1457 = vld [vmem:[%s5 + $0x28] sm:$0xf]
    %v1458 = vld [vmem:[%s5 + $0x2c] sm:$0xf]
    %v1459 = vld [vmem:[%s5 + $0x30] sm:$0xf]
    %v1460 = vld [vmem:[%s5 + $0x34] sm:$0xf]
    %v1461 = vld [vmem:[%s5 + $0x38] sm:$0xf]
    %v1462 = vld [vmem:[%s5 + $0x3c] sm:$0xf]
    %v1463 = vld [vmem:[%s6] sm:$0x1]
    %v1464 = vpack.c.bf16 %v1384, %v1383
    %v1465 = vpack.c.bf16 %v1386, %v1385
    %v1466 = vpack.c.bf16 %v1388, %v1387
    %v1467 = vpack.c.bf16 %v1390, %v1389
    %v1468 = vpack.c.bf16 %v1392, %v1391
    %v1469 = vpack.c.bf16 %v1394, %v1393
    %v1470 = vpack.c.bf16 %v1396, %v1395
    %v1471 = vpack.c.bf16 %v1398, %v1397
    %v1472 = vpack.c.bf16 %v1400, %v1399
    %v1473 = vpack.c.bf16 %v1402, %v1401
    %v1474 = vpack.c.bf16 %v1404, %v1403
    %v1475 = vpack.c.bf16 %v1406, %v1405
    %v1476 = vpack.c.bf16 %v1408, %v1407
    %v1477 = vpack.c.bf16 %v1410, %v1409
    %v1478 = vpack.c.bf16 %v1412, %v1411
    %v1479 = vpack.c.bf16 %v1414, %v1413
    %v1480 = vpack.c.bf16 %v1416, %v1415
    %v1481 = vpack.c.bf16 %v1418, %v1417
    %v1482 = vpack.c.bf16 %v1420, %v1419
    %v1483 = vpack.c.bf16 %v1422, %v1421
    %v1484 = vpack.c.bf16 %v1424, %v1423
    %v1485 = vpack.c.bf16 %v1426, %v1425
    %v1486 = vpack.c.bf16 %v1428, %v1427
    %v1487 = vpack.c.bf16 %v1430, %v1429
    %v1488 = vpack.c.bf16 %v1432, %v1431
    %v1489 = vpack.c.bf16 %v1434, %v1433
    %v1490 = vpack.c.bf16 %v1436, %v1435
    %v1491 = vpack.c.bf16 %v1438, %v1437
    %v1492 = vpack.c.bf16 %v1440, %v1439
    %v1493 = vpack.c.bf16 %v1442, %v1441
    %v1494 = vpack.c.bf16 %v1444, %v1443
    %v1495 = vpack.c.bf16 %v1446, %v1445
    %v1497 = vlaneseq
    %v1498 = vshrl.u32 %v1497, 7
    %v1499 = vsub.s32 0, %v1498
    %v1500 = vrot.slane %v1463, %v1499
    %v1518 = vunpack.c.l.b16 %v1447
    %v1519 = vunpack.c.l.b16 %v1448
    %v1520 = vunpack.c.l.b16 %v1449
    %v1521 = vunpack.c.l.b16 %v1450
    %v1522 = vunpack.c.l.b16 %v1451
    %v1523 = vunpack.c.l.b16 %v1452
    %v1524 = vunpack.c.l.b16 %v1453
    %v1525 = vunpack.c.l.b16 %v1454
    %v1526 = vunpack.c.l.b16 %v1455
    %v1527 = vunpack.c.l.b16 %v1456
    %v1528 = vunpack.c.l.b16 %v1457
    %v1529 = vunpack.c.l.b16 %v1458
    %v1530 = vunpack.c.l.b16 %v1459
    %v1531 = vunpack.c.l.b16 %v1460
    %v1532 = vunpack.c.l.b16 %v1461
    %v1533 = vunpack.c.l.b16 %v1462
    %v1534 = vpack.c.b16 %v1519, %v1518
    %v1535 = vpack.c.b16 %v1521, %v1520
    %v1536 = vpack.c.b16 %v1523, %v1522
    %v1537 = vpack.c.b16 %v1525, %v1524
    %v1538 = vpack.c.b16 %v1527, %v1526
    %v1539 = vpack.c.b16 %v1529, %v1528
    %v1540 = vpack.c.b16 %v1531, %v1530
    %v1541 = vpack.c.b16 %v1533, %v1532
    %1550 = vmatprep.subr.bf16.mxu0 0
    %1551 = vmatpush1.bf16.msra.mxu0 %v1534
    %1552 = vmatprep.subr.bf16.mxu0 0
    %1553 = vmatpush1.bf16.msra.mxu0 %v1535
    %1554 = vmatprep.subr.bf16.mxu0 0
    %1555 = vmatpush1.bf16.msra.mxu0 %v1536
    %1556 = vmatprep.subr.bf16.mxu0 0
    %1557 = vmatpush1.bf16.msra.mxu0 %v1537
    %1558 = vmatprep.subr.bf16.mxu0 0
    %1559 = vmatpush1.bf16.msra.mxu0 %v1538
    %1560 = vmatprep.subr.bf16.mxu0 0
    %1561 = vmatpush1.bf16.msra.mxu0 %v1539
    %1562 = vmatprep.subr.bf16.mxu0 0
    %1563 = vmatpush1.bf16.msra.mxu0 %v1540
    %1564 = vmatprep.subr.bf16.mxu0 0
    %1565 = vmatpush1.bf16.msra.mxu0 %v1541
    %1566 = vmatprep.subr.bf16.mxu0 0
    %1567 = vmatpush1.bf16.msra.mxu0 0
    %1568 = vmatprep.subr.bf16.mxu0 0
    %1569 = vmatpush1.bf16.msra.mxu0 0
    %1570 = vmatprep.subr.bf16.mxu0 0
    %1571 = vmatpush1.bf16.msra.mxu0 0
    %1572 = vmatprep.subr.bf16.mxu0 0
    %1573 = vmatpush1.bf16.msra.mxu0 0
    %1574 = vmatprep.subr.bf16.mxu0 0
    %1575 = vmatpush1.bf16.msra.mxu0 0
    %1576 = vmatprep.subr.bf16.mxu0 0
    %1577 = vmatpush1.bf16.msra.mxu0 0
    %1578 = vmatprep.subr.bf16.mxu0 0
    %1579 = vmatpush1.bf16.msra.mxu0 0
    %1580 = vmatprep.subr.bf16.mxu0 0
    %1581 = vmatpush1.bf16.msra.mxu0 0
    %1582 = vmatprep.mubr.bf16.mxu0 0
    %1583 = vmatmul.mubr.bf16.gmra.mrb[0].mxu0 %v1464
    %v1584 = vpop.f32.mrb[0].mxu0
    %v1585 = vadd.f32 %v1500, %v1584
    %v1586 = vpop.f32.mrb[0].mxu0
    %v1587 = vpop.f32.mrb[0].mxu0
    %v1588 = vadd.f32 %v1500, %v1587
    %v1589 = vpop.f32.mrb[0].mxu0
    %1590 = vmatprep.mubr.bf16.mxu0 0
    %1591 = vmatmul.mubr.bf16.gmra.mrb[0].mxu0 %v1465
    %v1592 = vpop.f32.mrb[0].mxu0
    %v1593 = vadd.f32 %v1500, %v1592
    %v1594 = vpop.f32.mrb[0].mxu0
    %v1595 = vpop.f32.mrb[0].mxu0
    %v1596 = vadd.f32 %v1500, %v1595
    %v1597 = vpop.f32.mrb[0].mxu0
    %1598 = vmatprep.mubr.bf16.mxu0 0
    %1599 = vmatmul.mubr.bf16.gmra.mrb[0].mxu0 %v1466
    %v1600 = vpop.f32.mrb[0].mxu0
    %v1601 = vadd.f32 %v1500, %v1600
    %v1602 = vpop.f32.mrb[0].mxu0
    %v1603 = vpop.f32.mrb[0].mxu0
    %v1604 = vadd.f32 %v1500, %v1603
    %v1605 = vpop.f32.mrb[0].mxu0
    %1606 = vmatprep.mubr.bf16.mxu0 0
    %1607 = vmatmul.mubr.bf16.gmra.mrb[0].mxu0 %v1467
    %v1608 = vpop.f32.mrb[0].mxu0
    %v1609 = vadd.f32 %v1500, %v1608
    %v1610 = vpop.f32.mrb[0].mxu0
    %v1611 = vpop.f32.mrb[0].mxu0
    %v1612 = vadd.f32 %v1500, %v1611
    %v1613 = vpop.f32.mrb[0].mxu0
    %1614 = vmatprep.mubr.bf16.mxu0 0
    %1615 = vmatmul.mubr.bf16.gmra.mrb[0].mxu0 %v1468
    %v1616 = vpop.f32.mrb[0].mxu0
    %v1617 = vadd.f32 %v1500, %v1616
    %v1618 = vpop.f32.mrb[0].mxu0
    %v1619 = vpop.f32.mrb[0].mxu0
    %v1620 = vadd.f32 %v1500, %v1619
    %v1621 = vpop.f32.mrb[0].mxu0
    %1622 = vmatprep.mubr.bf16.mxu0 0
    %1623 = vmatmul.mubr.bf16.gmra.mrb[0].mxu0 %v1469
    %v1624 = vpop.f32.mrb[0].mxu0
    %v1625 = vadd.f32 %v1500, %v1624
    %v1626 = vpop.f32.mrb[0].mxu0
    %v1627 = vpop.f32.mrb[0].mxu0
    %v1628 = vadd.f32 %v1500, %v1627
    %v1629 = vpop.f32.mrb[0].mxu0
    %1630 = vmatprep.mubr.bf16.mxu0 0
    %1631 = vmatmul.mubr.bf16.gmra.mrb[0].mxu0 %v1470
    %v1632 = vpop.f32.mrb[0].mxu0
    %v1633 = vadd.f32 %v1500, %v1632
    %v1634 = vpop.f32.mrb[0].mxu0
    %v1635 = vpop.f32.mrb[0].mxu0
    %v1636 = vadd.f32 %v1500, %v1635
    %v1637 = vpop.f32.mrb[0].mxu0
    %1638 = vmatprep.mubr.bf16.mxu0 0
    %1639 = vmatmul.mubr.bf16.gmra.mrb[0].mxu0 %v1471
    %v1640 = vpop.f32.mrb[0].mxu0
    %v1641 = vadd.f32 %v1500, %v1640
    %v1642 = vpop.f32.mrb[0].mxu0
    %v1643 = vpop.f32.mrb[0].mxu0
    %v1644 = vadd.f32 %v1500, %v1643
    %v1645 = vpop.f32.mrb[0].mxu0
    %1646 = vmatprep.mubr.bf16.mxu0 0
    %1647 = vmatmul.mubr.bf16.gmra.mrb[0].mxu0 %v1472
    %v1648 = vpop.f32.mrb[0].mxu0
    %v1649 = vadd.f32 %v1500, %v1648
    %v1650 = vpop.f32.mrb[0].mxu0
    %v1651 = vpop.f32.mrb[0].mxu0
    %v1652 = vadd.f32 %v1500, %v1651
    %v1653 = vpop.f32.mrb[0].mxu0
    %1654 = vmatprep.mubr.bf16.mxu0 0
    %1655 = vmatmul.mubr.bf16.gmra.mrb[0].mxu0 %v1473
    %v1656 = vpop.f32.mrb[0].mxu0
    %v1657 = vadd.f32 %v1500, %v1656
    %v1658 = vpop.f32.mrb[0].mxu0
    %v1659 = vpop.f32.mrb[0].mxu0
    %v1660 = vadd.f32 %v1500, %v1659
    %v1661 = vpop.f32.mrb[0].mxu0
    %1662 = vmatprep.mubr.bf16.mxu0 0
    %1663 = vmatmul.mubr.bf16.gmra.mrb[0].mxu0 %v1474
    %v1664 = vpop.f32.mrb[0].mxu0
    %v1665 = vadd.f32 %v1500, %v1664
    %v1666 = vpop.f32.mrb[0].mxu0
    %v1667 = vpop.f32.mrb[0].mxu0
    %v1668 = vadd.f32 %v1500, %v1667
    %v1669 = vpop.f32.mrb[0].mxu0
    %1670 = vmatprep.mubr.bf16.mxu0 0
    %1671 = vmatmul.mubr.bf16.gmra.mrb[0].mxu0 %v1475
    %v1672 = vpop.f32.mrb[0].mxu0
    %v1673 = vadd.f32 %v1500, %v1672
    %v1674 = vpop.f32.mrb[0].mxu0
    %v1675 = vpop.f32.mrb[0].mxu0
    %v1676 = vadd.f32 %v1500, %v1675
    %v1677 = vpop.f32.mrb[0].mxu0
    %1678 = vmatprep.mubr.bf16.mxu0 0
    %1679 = vmatmul.mubr.bf16.gmra.mrb[0].mxu0 %v1476
    %v1680 = vpop.f32.mrb[0].mxu0
    %v1681 = vadd.f32 %v1500, %v1680
    %v1682 = vpop.f32.mrb[0].mxu0
    %v1683 = vpop.f32.mrb[0].mxu0
    %v1684 = vadd.f32 %v1500, %v1683
    %v1685 = vpop.f32.mrb[0].mxu0
    %1686 = vmatprep.mubr.bf16.mxu0 0
    %1687 = vmatmul.mubr.bf16.gmra.mrb[0].mxu0 %v1477
    %v1688 = vpop.f32.mrb[0].mxu0
    %v1689 = vadd.f32 %v1500, %v1688
    %v1690 = vpop.f32.mrb[0].mxu0
    %v1691 = vpop.f32.mrb[0].mxu0
    %v1692 = vadd.f32 %v1500, %v1691
    %v1693 = vpop.f32.mrb[0].mxu0
    %1694 = vmatprep.mubr.bf16.mxu0 0
    %1695 = vmatmul.mubr.bf16.gmra.mrb[0].mxu0 %v1478
    %v1696 = vpop.f32.mrb[0].mxu0
    %v1697 = vadd.f32 %v1500, %v1696
    %v1698 = vpop.f32.mrb[0].mxu0
    %v1699 = vpop.f32.mrb[0].mxu0
    %v1700 = vadd.f32 %v1500, %v1699
    %v1701 = vpop.f32.mrb[0].mxu0
    %1702 = vmatprep.mubr.bf16.mxu0 0
    %1703 = vmatmul.mubr.bf16.gmra.mrb[0].mxu0 %v1479
    %v1704 = vpop.f32.mrb[0].mxu0
    %v1705 = vadd.f32 %v1500, %v1704
    %v1706 = vpop.f32.mrb[0].mxu0
    %v1707 = vpop.f32.mrb[0].mxu0
    %v1708 = vadd.f32 %v1500, %v1707
    %v1709 = vpop.f32.mrb[0].mxu0
    %1710 = vmatprep.mubr.bf16.mxu0 0
    %1711 = vmatmul.mubr.bf16.gmra.mrb[0].mxu0 %v1480
    %v1712 = vpop.f32.mrb[0].mxu0
    %v1713 = vadd.f32 %v1500, %v1712
    %v1714 = vpop.f32.mrb[0].mxu0
    %v1715 = vpop.f32.mrb[0].mxu0
    %v1716 = vadd.f32 %v1500, %v1715
    %v1717 = vpop.f32.mrb[0].mxu0
    %1718 = vmatprep.mubr.bf16.mxu0 0
    %1719 = vmatmul.mubr.bf16.gmra.mrb[0].mxu0 %v1481
    %v1720 = vpop.f32.mrb[0].mxu0
    %v1721 = vadd.f32 %v1500, %v1720
    %v1722 = vpop.f32.mrb[0].mxu0
    %v1723 = vpop.f32.mrb[0].mxu0
    %v1724 = vadd.f32 %v1500, %v1723
    %v1725 = vpop.f32.mrb[0].mxu0
    %1726 = vmatprep.mubr.bf16.mxu0 0
    %1727 = vmatmul.mubr.bf16.gmra.mrb[0].mxu0 %v1482
    %v1728 = vpop.f32.mrb[0].mxu0
    %v1729 = vadd.f32 %v1500, %v1728
    %v1730 = vpop.f32.mrb[0].mxu0
    %v1731 = vpop.f32.mrb[0].mxu0
    %v1732 = vadd.f32 %v1500, %v1731
    %v1733 = vpop.f32.mrb[0].mxu0
    %1734 = vmatprep.mubr.bf16.mxu0 0
    %1735 = vmatmul.mubr.bf16.gmra.mrb[0].mxu0 %v1483
    %v1736 = vpop.f32.mrb[0].mxu0
    %v1737 = vadd.f32 %v1500, %v1736
    %v1738 = vpop.f32.mrb[0].mxu0
    %v1739 = vpop.f32.mrb[0].mxu0
    %v1740 = vadd.f32 %v1500, %v1739
    %v1741 = vpop.f32.mrb[0].mxu0
    %1742 = vmatprep.mubr.bf16.mxu0 0
    %1743 = vmatmul.mubr.bf16.gmra.mrb[0].mxu0 %v1484
    %v1744 = vpop.f32.mrb[0].mxu0
    %v1745 = vadd.f32 %v1500, %v1744
    %v1746 = vpop.f32.mrb[0].mxu0
    %v1747 = vpop.f32.mrb[0].mxu0
    %v1748 = vadd.f32 %v1500, %v1747
    %v1749 = vpop.f32.mrb[0].mxu0
    %1750 = vmatprep.mubr.bf16.mxu0 0
    %1751 = vmatmul.mubr.bf16.gmra.mrb[0].mxu0 %v1485
    %v1752 = vpop.f32.mrb[0].mxu0
    %v1753 = vadd.f32 %v1500, %v1752
    %v1754 = vpop.f32.mrb[0].mxu0
    %v1755 = vpop.f32.mrb[0].mxu0
    %v1756 = vadd.f32 %v1500, %v1755
    %v1757 = vpop.f32.mrb[0].mxu0
    %1758 = vmatprep.mubr.bf16.mxu0 0
    %1759 = vmatmul.mubr.bf16.gmra.mrb[0].mxu0 %v1486
    %v1760 = vpop.f32.mrb[0].mxu0
    %v1761 = vadd.f32 %v1500, %v1760
    %v1762 = vpop.f32.mrb[0].mxu0
    %v1763 = vpop.f32.mrb[0].mxu0
    %v1764 = vadd.f32 %v1500, %v1763
    %v1765 = vpop.f32.mrb[0].mxu0
    %1766 = vmatprep.mubr.bf16.mxu0 0
    %1767 = vmatmul.mubr.bf16.gmra.mrb[0].mxu0 %v1487
    %v1768 = vpop.f32.mrb[0].mxu0
    %v1769 = vadd.f32 %v1500, %v1768
    %v1770 = vpop.f32.mrb[0].mxu0
    %v1771 = vpop.f32.mrb[0].mxu0
    %v1772 = vadd.f32 %v1500, %v1771
    %v1773 = vpop.f32.mrb[0].mxu0
    %1774 = vmatprep.mubr.bf16.mxu0 0
    %1775 = vmatmul.mubr.bf16.gmra.mrb[0].mxu0 %v1488
    %v1776 = vpop.f32.mrb[0].mxu0
    %v1777 = vadd.f32 %v1500, %v1776
    %v1778 = vpop.f32.mrb[0].mxu0
    %v1779 = vpop.f32.mrb[0].mxu0
    %v1780 = vadd.f32 %v1500, %v1779
    %v1781 = vpop.f32.mrb[0].mxu0
    %1782 = vmatprep.mubr.bf16.mxu0 0
    %1783 = vmatmul.mubr.bf16.gmra.mrb[0].mxu0 %v1489
    %v1784 = vpop.f32.mrb[0].mxu0
    %v1785 = vadd.f32 %v1500, %v1784
    %v1786 = vpop.f32.mrb[0].mxu0
    %v1787 = vpop.f32.mrb[0].mxu0
    %v1788 = vadd.f32 %v1500, %v1787
    %v1789 = vpop.f32.mrb[0].mxu0
    %1790 = vmatprep.mubr.bf16.mxu0 0
    %1791 = vmatmul.mubr.bf16.gmra.mrb[0].mxu0 %v1490
    %v1792 = vpop.f32.mrb[0].mxu0
    %v1793 = vadd.f32 %v1500, %v1792
    %v1794 = vpop.f32.mrb[0].mxu0
    %v1795 = vpop.f32.mrb[0].mxu0
    %v1796 = vadd.f32 %v1500, %v1795
    %v1797 = vpop.f32.mrb[0].mxu0
    %1798 = vmatprep.mubr.bf16.mxu0 0
    %1799 = vmatmul.mubr.bf16.gmra.mrb[0].mxu0 %v1491
    %v1800 = vpop.f32.mrb[0].mxu0
    %v1801 = vadd.f32 %v1500, %v1800
    %v1802 = vpop.f32.mrb[0].mxu0
    %v1803 = vpop.f32.mrb[0].mxu0
    %v1804 = vadd.f32 %v1500, %v1803
    %v1805 = vpop.f32.mrb[0].mxu0
    %1806 = vmatprep.mubr.bf16.mxu0 0
    %1807 = vmatmul.mubr.bf16.gmra.mrb[0].mxu0 %v1492
    %v1808 = vpop.f32.mrb[0].mxu0
    %v1809 = vadd.f32 %v1500, %v1808
    %v1810 = vpop.f32.mrb[0].mxu0
    %v1811 = vpop.f32.mrb[0].mxu0
    %v1812 = vadd.f32 %v1500, %v1811
    %v1813 = vpop.f32.mrb[0].mxu0
    %1814 = vmatprep.mubr.bf16.mxu0 0
    %1815 = vmatmul.mubr.bf16.gmra.mrb[0].mxu0 %v1493
    %v1816 = vpop.f32.mrb[0].mxu0
    %v1817 = vadd.f32 %v1500, %v1816
    %v1818 = vpop.f32.mrb[0].mxu0
    %v1819 = vpop.f32.mrb[0].mxu0
    %v1820 = vadd.f32 %v1500, %v1819
    %v1821 = vpop.f32.mrb[0].mxu0
    %1822 = vmatprep.mubr.bf16.mxu0 0
    %1823 = vmatmul.mubr.bf16.gmra.mrb[0].mxu0 %v1494
    %v1824 = vpop.f32.mrb[0].mxu0
    %v1825 = vadd.f32 %v1500, %v1824
    %v1826 = vpop.f32.mrb[0].mxu0
    %v1827 = vpop.f32.mrb[0].mxu0
    %v1828 = vadd.f32 %v1500, %v1827
    %v1829 = vpop.f32.mrb[0].mxu0
    %1830 = vmatprep.mubr.bf16.mxu0 0
    %1831 = vmatmul.mubr.bf16.gmra.mrb[0].mxu0 %v1495
    %v1832 = vpop.f32.mrb[0].mxu0
    %v1833 = vadd.f32 %v1500, %v1832
    %v1834 = vpop.f32.mrb[0].mxu0
    %v1835 = vpop.f32.mrb[0].mxu0
    %v1836 = vadd.f32 %v1500, %v1835
    %v1837 = vpop.f32.mrb[0].mxu0
    %1838 = vdwg.mxu0
    %vm1839 = vcmask 130048
    %1840 = vst.msk [vmem:[%s7] sm:$0xff] %vm1839, %v1585
    %1841 = vst.msk [vmem:[%s7 + $0x8] sm:$0xff] %vm1839, %v1588
    %1842 = vst.msk [vmem:[%s7 + $0x10] sm:$0xff] %vm1839, %v1593
    %1843 = vst.msk [vmem:[%s7 + $0x18] sm:$0xff] %vm1839, %v1596
    %1844 = vst.msk [vmem:[%s7 + $0x20] sm:$0xff] %vm1839, %v1601
    %1845 = vst.msk [vmem:[%s7 + $0x28] sm:$0xff] %vm1839, %v1604
    %1846 = vst.msk [vmem:[%s7 + $0x30] sm:$0xff] %vm1839, %v1609
    %1847 = vst.msk [vmem:[%s7 + $0x38] sm:$0xff] %vm1839, %v1612
    %1848 = vst.msk [vmem:[%s7 + $0x40] sm:$0xff] %vm1839, %v1617
    %1849 = vst.msk [vmem:[%s7 + $0x48] sm:$0xff] %vm1839, %v1620
    %1850 = vst.msk [vmem:[%s7 + $0x50] sm:$0xff] %vm1839, %v1625
    %1851 = vst.msk [vmem:[%s7 + $0x58] sm:$0xff] %vm1839, %v1628
    %1852 = vst.msk [vmem:[%s7 + $0x60] sm:$0xff] %vm1839, %v1633
    %1853 = vst.msk [vmem:[%s7 + $0x68] sm:$0xff] %vm1839, %v1636
    %1854 = vst.msk [vmem:[%s7 + $0x70] sm:$0xff] %vm1839, %v1641
    %1855 = vst.msk [vmem:[%s7 + $0x78] sm:$0xff] %vm1839, %v1644
    %1856 = vst.msk [vmem:[%s7 + $0x80] sm:$0xff] %vm1839, %v1649
    %1857 = vst.msk [vmem:[%s7 + $0x88] sm:$0xff] %vm1839, %v1652
    %1858 = vst.msk [vmem:[%s7 + $0x90] sm:$0xff] %vm1839, %v1657
    %1859 = vst.msk [vmem:[%s7 + $0x98] sm:$0xff] %vm1839, %v1660
    %1860 = vst.msk [vmem:[%s7 + $0xa0] sm:$0xff] %vm1839, %v1665
    %1861 = vst.msk [vmem:[%s7 + $0xa8] sm:$0xff] %vm1839, %v1668
    %1862 = vst.msk [vmem:[%s7 + $0xb0] sm:$0xff] %vm1839, %v1673
    %1863 = vst.msk [vmem:[%s7 + $0xb8] sm:$0xff] %vm1839, %v1676
    %1864 = vst.msk [vmem:[%s7 + $0xc0] sm:$0xff] %vm1839, %v1681
    %1865 = vst.msk [vmem:[%s7 + $0xc8] sm:$0xff] %vm1839, %v1684
    %1866 = vst.msk [vmem:[%s7 + $0xd0] sm:$0xff] %vm1839, %v1689
    %1867 = vst.msk [vmem:[%s7 + $0xd8] sm:$0xff] %vm1839, %v1692
    %1868 = vst.msk [vmem:[%s7 + $0xe0] sm:$0xff] %vm1839, %v1697
    %1869 = vst.msk [vmem:[%s7 + $0xe8] sm:$0xff] %vm1839, %v1700
    %1870 = vst.msk [vmem:[%s7 + $0xf0] sm:$0xff] %vm1839, %v1705
    %1871 = vst.msk [vmem:[%s7 + $0xf8] sm:$0xff] %vm1839, %v1708
    %1872 = vst.msk [vmem:[%s7 + $0x100] sm:$0xff] %vm1839, %v1713
    %1873 = vst.msk [vmem:[%s7 + $0x108] sm:$0xff] %vm1839, %v1716
    %1874 = vst.msk [vmem:[%s7 + $0x110] sm:$0xff] %vm1839, %v1721
    %1875 = vst.msk [vmem:[%s7 + $0x118] sm:$0xff] %vm1839, %v1724
    %1876 = vst.msk [vmem:[%s7 + $0x120] sm:$0xff] %vm1839, %v1729
    %1877 = vst.msk [vmem:[%s7 + $0x128] sm:$0xff] %vm1839, %v1732
    %1878 = vst.msk [vmem:[%s7 + $0x130] sm:$0xff] %vm1839, %v1737
    %1879 = vst.msk [vmem:[%s7 + $0x138] sm:$0xff] %vm1839, %v1740
    %1880 = vst.msk [vmem:[%s7 + $0x140] sm:$0xff] %vm1839, %v1745
    %1881 = vst.msk [vmem:[%s7 + $0x148] sm:$0xff] %vm1839, %v1748
    %1882 = vst.msk [vmem:[%s7 + $0x150] sm:$0xff] %vm1839, %v1753
    %1883 = vst.msk [vmem:[%s7 + $0x158] sm:$0xff] %vm1839, %v1756
    %1884 = vst.msk [vmem:[%s7 + $0x160] sm:$0xff] %vm1839, %v1761
    %1885 = vst.msk [vmem:[%s7 + $0x168] sm:$0xff] %vm1839, %v1764
    %1886 = vst.msk [vmem:[%s7 + $0x170] sm:$0xff] %vm1839, %v1769
    %1887 = vst.msk [vmem:[%s7 + $0x178] sm:$0xff] %vm1839, %v1772
    %1888 = vst.msk [vmem:[%s7 + $0x180] sm:$0xff] %vm1839, %v1777
    %1889 = vst.msk [vmem:[%s7 + $0x188] sm:$0xff] %vm1839, %v1780
    %1890 = vst.msk [vmem:[%s7 + $0x190] sm:$0xff] %vm1839, %v1785
    %1891 = vst.msk [vmem:[%s7 + $0x198] sm:$0xff] %vm1839, %v1788
    %1892 = vst.msk [vmem:[%s7 + $0x1a0] sm:$0xff] %vm1839, %v1793
    %1893 = vst.msk [vmem:[%s7 + $0x1a8] sm:$0xff] %vm1839, %v1796
    %1894 = vst.msk [vmem:[%s7 + $0x1b0] sm:$0xff] %vm1839, %v1801
    %1895 = vst.msk [vmem:[%s7 + $0x1b8] sm:$0xff] %vm1839, %v1804
    %1896 = vst.msk [vmem:[%s7 + $0x1c0] sm:$0xff] %vm1839, %v1809
    %1897 = vst.msk [vmem:[%s7 + $0x1c8] sm:$0xff] %vm1839, %v1812
    %1898 = vst.msk [vmem:[%s7 + $0x1d0] sm:$0xff] %vm1839, %v1817
    %1899 = vst.msk [vmem:[%s7 + $0x1d8] sm:$0xff] %vm1839, %v1820
    %1900 = vst.msk [vmem:[%s7 + $0x1e0] sm:$0xff] %vm1839, %v1825
    %1901 = vst.msk [vmem:[%s7 + $0x1e8] sm:$0xff] %vm1839, %v1828
    %1902 = vst.msk [vmem:[%s7 + $0x1f0] sm:$0xff] %vm1839, %v1833
    %1903 = vst.msk [vmem:[%s7 + $0x1f8] sm:$0xff] %vm1839, %v1836
    // Predicated region
    $region38: #{tpu_custom_call.1} parent=1 // pred_check
      _
    $region39: #{tpu_custom_call.1} parent=1 // pred_check_branch
      %1905 = sbr.rel (0) target = $region41
    $region40: #{tpu_custom_call.1} parent=1 // pred_region
      _
    $region41: #{tpu_custom_call.1} parent=1 // pred_fallthru
      _
    // Predicated region
    $region42: #{tpu_custom_call.1} parent=1 // pred_check
      _
    $region43: #{tpu_custom_call.1} parent=1 // pred_check_branch
      %1907 = sbr.rel (0) target = $region45
    $region44: #{tpu_custom_call.1} parent=1 // pred_region
      _
    $region45: #{tpu_custom_call.1} parent=1 // pred_fallthru
      _
    %1908 = vsyncpa [#allocation3], 1
    %1909 = vsyncpa [#allocation5], 1

// kernel: tpu_custom_call.1
$region0: #{tpu_custom_call.1}
  #allocation0 [shape = 'u32[]', space=smem, size = 0x4, offset = 0x4, fixed_abs, tag = 'smem constant byte address 0x4 - core index']
  #allocation1 [shape = 'u32[144,128]{1,0:T(1,128)}', space=vmem, size = 0x12000, scoped, tag = 'internal scratch']
  %s0 = inlined_call_operand.hbm [shape: bf16[512,128], index: 0, kind: input, shape index: {}]
  %s1 = inlined_call_operand.vmem [shape: bf16[128,128], index: 1, kind: input, shape index: {}]
  %s2 = inlined_call_operand.vmem [shape: f32[1,128], index: 2, kind: input, shape index: {}]
  %s3 = inlined_call_operand.hbm [shape: bf16[128,128], index: 3, kind: input, shape index: {}]
  %s4 = inlined_call_operand.vmem [shape: f32[1,128], index: 4, kind: input, shape index: {}]
  %s5 = inlined_call_operand.vmem [shape: bf16[128,16], index: 5, kind: input, shape index: {}]
  %s6 = inlined_call_operand.vmem [shape: f32[1,16], index: 6, kind: input, shape index: {}]
  %s7 = inlined_call_operand.vmem [shape: f32[512,16], index: 7, kind: output, shape index: {}]
  %s8 = sld [smem:[#allocation0]]
  $region46: #{tpu_custom_call.1} parent=0
    _
  %s10 = ssub.s32 1, %s8
  %s11 = scalar_select 0, %s10, %s8
  $region1: #{tpu_custom_call.1} parent=0
    #allocation2 [shape = 'u8[131072]{0}', space=vmem, size = 0x20000, scoped, tag = 'input window, operand 0, single buffered']
    #allocation3 [shape = 's32[1]{0}', space=sflag, size = 0x4, scoped, tag = 'scoped memory for tpu_custom_call.1']
    #allocation4 [shape = 'u8[32768]{0}', space=vmem, size = 0x8000, scoped, tag = 'input window, operand 3, single buffered']
    #allocation5 [shape = 's32[1]{0}', space=sflag, size = 0x4, scoped, tag = 'scoped memory for tpu_custom_call.1']
    %12 = vsyncpa [#allocation3], 0
    %13 = vsyncpa [#allocation5], 0
    // Predicated region
    $region2: #{tpu_custom_call.1} parent=1 // pred_check
      _
    $region3: #{tpu_custom_call.1} parent=1 // pred_check_branch
      %15 = sbr.rel (0) target = $region5
    $region4: #{tpu_custom_call.1} parent=1 // pred_region
      %s17 = ssub.s32 4096, 4096
      %18 = vsyncadd [#allocation3], %s17
      %s19 = sshll.u32 [#allocation2], 4
      %s20 = int_to_ptr.vmem [resolvable:$true] %s19
      %25 = dma.hbm_to_vmem [thread:$0]  %s0, 4096, %s20, [#allocation3], 64, 64, 4
    $region5: #{tpu_custom_call.1} parent=1 // pred_fallthru
      _
    // Predicated region
    $region6: #{tpu_custom_call.1} parent=1 // pred_check
      _
    $region7: #{tpu_custom_call.1} parent=1 // pred_check_branch
      %27 = sbr.rel (0) target = $region9
    $region8: #{tpu_custom_call.1} parent=1 // pred_region
      _
    $region9: #{tpu_custom_call.1} parent=1 // pred_fallthru
      _
    // Predicated region
    $region10: #{tpu_custom_call.1} parent=1 // pred_check
      _
    $region11: #{tpu_custom_call.1} parent=1 // pred_check_branch
      %29 = sbr.rel (0) target = $region13
    $region12: #{tpu_custom_call.1} parent=1 // pred_region
      _
    $region13: #{tpu_custom_call.1} parent=1 // pred_fallthru
      _
    // Predicated region
    $region14: #{tpu_custom_call.1} parent=1 // pred_check
      _
    $region15: #{tpu_custom_call.1} parent=1 // pred_check_branch
      %31 = sbr.rel (0) target = $region17
    $region16: #{tpu_custom_call.1} parent=1 // pred_region
      %s33 = ssub.s32 1024, 1024
      %34 = vsyncadd [#allocation5], %s33
      %s35 = sshll.u32 [#allocation4], 4
      %s36 = int_to_ptr.vmem [resolvable:$true] %s35
      %41 = dma.hbm_to_vmem [thread:$0]  %s3, 1024, %s36, [#allocation5], 64, 64, 4
    $region17: #{tpu_custom_call.1} parent=1 // pred_fallthru
      _
    // Predicated region
    $region18: #{tpu_custom_call.1} parent=1 // pred_check
      _
    $region19: #{tpu_custom_call.1} parent=1 // pred_check_branch
      %43 = sbr.rel (0) target = $region21
    $region20: #{tpu_custom_call.1} parent=1 // pred_region
      _
    $region21: #{tpu_custom_call.1} parent=1 // pred_fallthru
      _
    // Predicated region
    $region22: #{tpu_custom_call.1} parent=1 // pred_check
      _
    $region23: #{tpu_custom_call.1} parent=1 // pred_check_branch
      %45 = sbr.rel (0) target = $region25
    $region24: #{tpu_custom_call.1} parent=1 // pred_region
      _
    $region25: #{tpu_custom_call.1} parent=1 // pred_fallthru
      _
    // Predicated region
    $region26: #{tpu_custom_call.1} parent=1 // pred_check
      _
    $region27: #{tpu_custom_call.1} parent=1 // pred_check_branch
      %47 = sbr.rel (0) target = $region29
    $region28: #{tpu_custom_call.1} parent=1 // pred_region
      _
    $region29: #{tpu_custom_call.1} parent=1 // pred_fallthru
      _
    // Predicated region
    $region30: #{tpu_custom_call.1} parent=1 // pred_check
      _
    $region31: #{tpu_custom_call.1} parent=1 // pred_check_branch
      %49 = sbr.rel (0) target = $region33
    $region32: #{tpu_custom_call.1} parent=1 // pred_region
      %50 = dma.done [#allocation3], 4096
    $region33: #{tpu_custom_call.1} parent=1 // pred_fallthru
      _
    // Predicated region
    $region34: #{tpu_custom_call.1} parent=1 // pred_check
      _
    $region35: #{tpu_custom_call.1} parent=1 // pred_check_branch
      %52 = sbr.rel (0) target = $region37
    $region36: #{tpu_custom_call.1} parent=1 // pred_region
      %53 = dma.done [#allocation5], 1024
    $region37: #{tpu_custom_call.1} parent=1 // pred_fallthru
      _
    %v55 = vld [vmem:[#allocation2] sm:$0xf]
    %v56 = vld [vmem:[#allocation2 + $0x4] sm:$0xf]
    %v57 = vld [vmem:[#allocation2 + $0x8] sm:$0xf]
    %v58 = vld [vmem:[#allocation2 + $0xc] sm:$0xf]
    %v59 = vld [vmem:[#allocation2 + $0x10] sm:$0xf]
    %v60 = vld [vmem:[#allocation2 + $0x14] sm:$0xf]
    %v61 = vld [vmem:[#allocation2 + $0x18] sm:$0xf]
    %v62 = vld [vmem:[#allocation2 + $0x1c] sm:$0xf]
    %v63 = vld [vmem:[#allocation2 + $0x20] sm:$0xf]
    %v64 = vld [vmem:[#allocation2 + $0x24] sm:$0xf]
    %v65 = vld [vmem:[#allocation2 + $0x28] sm:$0xf]
    %v66 = vld [vmem:[#allocation2 + $0x2c] sm:$0xf]
    %v67 = vld [vmem:[#allocation2 + $0x30] sm:$0xf]
    %v68 = vld [vmem:[#allocation2 + $0x34] sm:$0xf]
    %v69 = vld [vmem:[#allocation2 + $0x38] sm:$0xf]
    %v70 = vld [vmem:[#allocation2 + $0x3c] sm:$0xf]
    %v71 = vld [vmem:[#allocation2 + $0x40] sm:$0xf]
    %v72 = vld [vmem:[#allocation2 + $0x44] sm:$0xf]
    %v73 = vld [vmem:[#allocation2 + $0x48] sm:$0xf]
    %v74 = vld [vmem:[#allocation2 + $0x4c] sm:$0xf]
    %v75 = vld [vmem:[#allocation2 + $0x50] sm:$0xf]
    %v76 = vld [vmem:[#allocation2 + $0x54] sm:$0xf]
    %v77 = vld [vmem:[#allocation2 + $0x58] sm:$0xf]
    %v78 = vld [vmem:[#allocation2 + $0x5c] sm:$0xf]
    %v79 = vld [vmem:[#allocation2 + $0x60] sm:$0xf]
    %v80 = vld [vmem:[#allocation2 + $0x64] sm:$0xf]
    %v81 = vld [vmem:[#allocation2 + $0x68] sm:$0xf]
    %v82 = vld [vmem:[#allocation2 + $0x6c] sm:$0xf]
    %v83 = vld [vmem:[#allocation2 + $0x70] sm:$0xf]
    %v84 = vld [vmem:[#allocation2 + $0x74] sm:$0xf]
    %v85 = vld [vmem:[#allocation2 + $0x78] sm:$0xf]
    %v86 = vld [vmem:[#allocation2 + $0x7c] sm:$0xf]
    %v87 = vld [vmem:[#allocation2 + $0x80] sm:$0xf]
    %v88 = vld [vmem:[#allocation2 + $0x84] sm:$0xf]
    %v89 = vld [vmem:[#allocation2 + $0x88] sm:$0xf]
    %v90 = vld [vmem:[#allocation2 + $0x8c] sm:$0xf]
    %v91 = vld [vmem:[#allocation2 + $0x90] sm:$0xf]
    %v92 = vld [vmem:[#allocation2 + $0x94] sm:$0xf]
    %v93 = vld [vmem:[#allocation2 + $0x98] sm:$0xf]
    %v94 = vld [vmem:[#allocation2 + $0x9c] sm:$0xf]
    %v95 = vld [vmem:[#allocation2 + $0xa0] sm:$0xf]
    %v96 = vld [vmem:[#allocation2 + $0xa4] sm:$0xf]
    %v97 = vld [vmem:[#allocation2 + $0xa8] sm:$0xf]
    %v98 = vld [vmem:[#allocation2 + $0xac] sm:$0xf]
    %v99 = vld [vmem:[#allocation2 + $0xb0] sm:$0xf]
    %v100 = vld [vmem:[#allocation2 + $0xb4] sm:$0xf]
    %v101 = vld [vmem:[#allocation2 + $0xb8] sm:$0xf]
    %v102 = vld [vmem:[#allocation2 + $0xbc] sm:$0xf]
    %v103 = vld [vmem:[#allocation2 + $0xc0] sm:$0xf]
    %v104 = vld [vmem:[#allocation2 + $0xc4] sm:$0xf]
    %v105 = vld [vmem:[#allocation2 + $0xc8] sm:$0xf]
    %v106 = vld [vmem:[#allocation2 + $0xcc] sm:$0xf]
    %v107 = vld [vmem:[#allocation2 + $0xd0] sm:$0xf]
    %v108 = vld [vmem:[#allocation2 + $0xd4] sm:$0xf]
    %v109 = vld [vmem:[#allocation2 + $0xd8] sm:$0xf]
    %v110 = vld [vmem:[#allocation2 + $0xdc] sm:$0xf]
    %v111 = vld [vmem:[#allocation2 + $0xe0] sm:$0xf]
    %v112 = vld [vmem:[#allocation2 + $0xe4] sm:$0xf]
    %v113 = vld [vmem:[#allocation2 + $0xe8] sm:$0xf]
    %v114 = vld [vmem:[#allocation2 + $0xec] sm:$0xf]
    %v115 = vld [vmem:[#allocation2 + $0xf0] sm:$0xf]
    %v116 = vld [vmem:[#allocation2 + $0xf4] sm:$0xf]
    %v117 = vld [vmem:[#allocation2 + $0xf8] sm:$0xf]
    %v118 = vld [vmem:[#allocation2 + $0xfc] sm:$0xf]
    %v119 = vld [vmem:[%s1] sm:$0xf]
    %v120 = vld [vmem:[%s1 + $0x4] sm:$0xf]
    %v121 = vld [vmem:[%s1 + $0x8] sm:$0xf]
    %v122 = vld [vmem:[%s1 + $0xc] sm:$0xf]
    %v123 = vld [vmem:[%s1 + $0x10] sm:$0xf]
    %v124 = vld [vmem:[%s1 + $0x14] sm:$0xf]
    %v125 = vld [vmem:[%s1 + $0x18] sm:$0xf]
    %v126 = vld [vmem:[%s1 + $0x1c] sm:$0xf]
    %v127 = vld [vmem:[%s1 + $0x20] sm:$0xf]
    %v128 = vld [vmem:[%s1 + $0x24] sm:$0xf]
    %v129 = vld [vmem:[%s1 + $0x28] sm:$0xf]
    %v130 = vld [vmem:[%s1 + $0x2c] sm:$0xf]
    %v131 = vld [vmem:[%s1 + $0x30] sm:$0xf]
    %v132 = vld [vmem:[%s1 + $0x34] sm:$0xf]
    %v133 = vld [vmem:[%s1 + $0x38] sm:$0xf]
    %v134 = vld [vmem:[%s1 + $0x3c] sm:$0xf]
    %v135 = vld [vmem:[%s2] sm:$0x1]
    %v137 = vlaneseq
    %v138 = vshrl.u32 %v137, 7
    %v139 = vsub.s32 0, %v138
    %v140 = vrot.slane %v135, %v139
    %v206 = vunpack.c.l.b16 %v55
    %v207 = vunpack.c.l.b16 %v56
    %v208 = vunpack.c.l.b16 %v57
    %v209 = vunpack.c.l.b16 %v58
    %v210 = vunpack.c.l.b16 %v59
    %v211 = vunpack.c.l.b16 %v60
    %v212 = vunpack.c.l.b16 %v61
    %v213 = vunpack.c.l.b16 %v62
    %v214 = vunpack.c.l.b16 %v63
    %v215 = vunpack.c.l.b16 %v64
    %v216 = vunpack.c.l.b16 %v65
    %v217 = vunpack.c.l.b16 %v66
    %v218 = vunpack.c.l.b16 %v67
    %v219 = vunpack.c.l.b16 %v68
    %v220 = vunpack.c.l.b16 %v69
    %v221 = vunpack.c.l.b16 %v70
    %v222 = vunpack.c.l.b16 %v71
    %v223 = vunpack.c.l.b16 %v72
    %v224 = vunpack.c.l.b16 %v73
    %v225 = vunpack.c.l.b16 %v74
    %v226 = vunpack.c.l.b16 %v75
    %v227 = vunpack.c.l.b16 %v76
    %v228 = vunpack.c.l.b16 %v77
    %v229 = vunpack.c.l.b16 %v78
    %v230 = vunpack.c.l.b16 %v79
    %v231 = vunpack.c.l.b16 %v80
    %v232 = vunpack.c.l.b16 %v81
    %v233 = vunpack.c.l.b16 %v82
    %v234 = vunpack.c.l.b16 %v83
    %v235 = vunpack.c.l.b16 %v84
    %v236 = vunpack.c.l.b16 %v85
    %v237 = vunpack.c.l.b16 %v86
    %v238 = vunpack.c.l.b16 %v87
    %v239 = vunpack.c.l.b16 %v88
    %v240 = vunpack.c.l.b16 %v89
    %v241 = vunpack.c.l.b16 %v90
    %v242 = vunpack.c.l.b16 %v91
    %v243 = vunpack.c.l.b16 %v92
    %v244 = vunpack.c.l.b16 %v93
    %v245 = vunpack.c.l.b16 %v94
    %v246 = vunpack.c.l.b16 %v95
    %v247 = vunpack.c.l.b16 %v96
    %v248 = vunpack.c.l.b16 %v97
    %v249 = vunpack.c.l.b16 %v98
    %v250 = vunpack.c.l.b16 %v99
    %v251 = vunpack.c.l.b16 %v100
    %v252 = vunpack.c.l.b16 %v101
    %v253 = vunpack.c.l.b16 %v102
    %v254 = vunpack.c.l.b16 %v103
    %v255 = vunpack.c.l.b16 %v104
    %v256 = vunpack.c.l.b16 %v105
    %v257 = vunpack.c.l.b16 %v106
    %v258 = vunpack.c.l.b16 %v107
    %v259 = vunpack.c.l.b16 %v108
    %v260 = vunpack.c.l.b16 %v109
    %v261 = vunpack.c.l.b16 %v110
    %v262 = vunpack.c.l.b16 %v111
    %v263 = vunpack.c.l.b16 %v112
    %v264 = vunpack.c.l.b16 %v113
    %v265 = vunpack.c.l.b16 %v114
    %v266 = vunpack.c.l.b16 %v115
    %v267 = vunpack.c.l.b16 %v116
    %v268 = vunpack.c.l.b16 %v117
    %v269 = vunpack.c.l.b16 %v118
    %v270 = vpack.c.b16 %v207, %v206
    %v271 = vpack.c.b16 %v209, %v208
    %v272 = vpack.c.b16 %v211, %v210
    %v273 = vpack.c.b16 %v213, %v212
    %v274 = vpack.c.b16 %v215, %v214
    %v275 = vpack.c.b16 %v217, %v216
    %v276 = vpack.c.b16 %v219, %v218
    %v277 = vpack.c.b16 %v221, %v220
    %v278 = vpack.c.b16 %v223, %v222
    %v279 = vpack.c.b16 %v225, %v224
    %v280 = vpack.c.b16 %v227, %v226
    %v281 = vpack.c.b16 %v229, %v228
    %v282 = vpack.c.b16 %v231, %v230
    %v283 = vpack.c.b16 %v233, %v232
    %v284 = vpack.c.b16 %v235, %v234
    %v285 = vpack.c.b16 %v237, %v236
    %v286 = vpack.c.b16 %v239, %v238
    %v287 = vpack.c.b16 %v241, %v240
    %v288 = vpack.c.b16 %v243, %v242
    %v289 = vpack.c.b16 %v245, %v244
    %v290 = vpack.c.b16 %v247, %v246
    %v291 = vpack.c.b16 %v249, %v248
    %v292 = vpack.c.b16 %v251, %v250
    %v293 = vpack.c.b16 %v253, %v252
    %v294 = vpack.c.b16 %v255, %v254
    %v295 = vpack.c.b16 %v257, %v256
    %v296 = vpack.c.b16 %v259, %v258
    %v297 = vpack.c.b16 %v261, %v260
    %v298 = vpack.c.b16 %v263, %v262
    %v299 = vpack.c.b16 %v265, %v264
    %v300 = vpack.c.b16 %v267, %v266
    %v301 = vpack.c.b16 %v269, %v268
    %v350 = vunpack.c.l.b16 %v119
    %v351 = vunpack.c.l.b16 %v120
    %v352 = vunpack.c.l.b16 %v121
    %v353 = vunpack.c.l.b16 %v122
    %v354 = vunpack.c.l.b16 %v123
    %v355 = vunpack.c.l.b16 %v124
    %v356 = vunpack.c.l.b16 %v125
    %v357 = vunpack.c.l.b16 %v126
    %v358 = vunpack.c.l.b16 %v127
    %v359 = vunpack.c.l.b16 %v128
    %v360 = vunpack.c.l.b16 %v129
    %v361 = vunpack.c.l.b16 %v130
    %v362 = vunpack.c.l.b16 %v131
    %v363 = vunpack.c.l.b16 %v132
    %v364 = vunpack.c.l.b16 %v133
    %v365 = vunpack.c.l.b16 %v134
    %v366 = vpack.c.b16 %v351, %v350
    %v367 = vpack.c.b16 %v353, %v352
    %v368 = vpack.c.b16 %v355, %v354
    %v369 = vpack.c.b16 %v357, %v356
    %v370 = vpack.c.b16 %v359, %v358
    %v371 = vpack.c.b16 %v361, %v360
    %v372 = vpack.c.b16 %v363, %v362
    %v373 = vpack.c.b16 %v365, %v364
    %382 = vmatprep.subr.bf16.mxu0 0
    %383 = vmatpush1.bf16.msra.mxu0 %v366
    %384 = vmatprep.subr.bf16.mxu0 0
    %385 = vmatpush1.bf16.msra.mxu0 %v367
    %386 = vmatprep.subr.bf16.mxu0 0
    %387 = vmatpush1.bf16.msra.mxu0 %v368
    %388 = vmatprep.subr.bf16.mxu0 0
    %389 = vmatpush1.bf16.msra.mxu0 %v369
    %390 = vmatprep.subr.bf16.mxu0 0
    %391 = vmatpush1.bf16.msra.mxu0 %v370
    %392 = vmatprep.subr.bf16.mxu0 0
    %393 = vmatpush1.bf16.msra.mxu0 %v371
    %394 = vmatprep.subr.bf16.mxu0 0
    %395 = vmatpush1.bf16.msra.mxu0 %v372
    %396 = vmatprep.subr.bf16.mxu0 0
    %397 = vmatpush1.bf16.msra.mxu0 %v373
    %398 = vmatprep.subr.bf16.mxu0 0
    %399 = vmatpush1.bf16.msra.mxu0 0
    %400 = vmatprep.subr.bf16.mxu0 0
    %401 = vmatpush1.bf16.msra.mxu0 0
    %402 = vmatprep.subr.bf16.mxu0 0
    %403 = vmatpush1.bf16.msra.mxu0 0
    %404 = vmatprep.subr.bf16.mxu0 0
    %405 = vmatpush1.bf16.msra.mxu0 0
    %406 = vmatprep.subr.bf16.mxu0 0
    %407 = vmatpush1.bf16.msra.mxu0 0
    %408 = vmatprep.subr.bf16.mxu0 0
    %409 = vmatpush1.bf16.msra.mxu0 0
    %410 = vmatprep.subr.bf16.mxu0 0
    %411 = vmatpush1.bf16.msra.mxu0 0
    %412 = vmatprep.subr.bf16.mxu0 0
    %413 = vmatpush1.bf16.msra.mxu0 0
    %414 = vmatprep.mubr.bf16.mxu0 0
    %415 = vmatmul.mubr.bf16.gmra.mrb[0].mxu0 %v270
    %v416 = vpop.f32.mrb[0].mxu0
    %v417 = vadd.f32 %v140, %v416
    %v418 = vpop.f32.mrb[0].mxu0
    %v419 = vpop.f32.mrb[0].mxu0
    %v420 = vadd.f32 %v140, %v419
    %v421 = vpop.f32.mrb[0].mxu0
    %422 = vmatprep.mubr.bf16.mxu0 0
    %423 = vmatmul.mubr.bf16.gmra.mrb[0].mxu0 %v271
    %v424 = vpop.f32.mrb[0].mxu0
    %v425 = vadd.f32 %v140, %v424
    %v426 = vpop.f32.mrb[0].mxu0
    %v427 = vpop.f32.mrb[0].mxu0
    %v428 = vadd.f32 %v140, %v427
    %v429 = vpop.f32.mrb[0].mxu0
    %430 = vmatprep.mubr.bf16.mxu0 0
    %431 = vmatmul.mubr.bf16.gmra.mrb[0].mxu0 %v272
    %v432 = vpop.f32.mrb[0].mxu0
    %v433 = vadd.f32 %v140, %v432
    %v434 = vpop.f32.mrb[0].mxu0
    %v435 = vpop.f32.mrb[0].mxu0
    %v436 = vadd.f32 %v140, %v435
    %v437 = vpop.f32.mrb[0].mxu0
    %438 = vmatprep.mubr.bf16.mxu0 0
    %439 = vmatmul.mubr.bf16.gmra.mrb[0].mxu0 %v273
    %v440 = vpop.f32.mrb[0].mxu0
    %v441 = vadd.f32 %v140, %v440
    %v442 = vpop.f32.mrb[0].mxu0
    %v443 = vpop.f32.mrb[0].mxu0
    %v444 = vadd.f32 %v140, %v443
    %v445 = vpop.f32.mrb[0].mxu0
    %446 = vmatprep.mubr.bf16.mxu0 0
    %447 = vmatmul.mubr.bf16.gmra.mrb[0].mxu0 %v274
    %v448 = vpop.f32.mrb[0].mxu0
    %v449 = vadd.f32 %v140, %v448
    %v450 = vpop.f32.mrb[0].mxu0
    %v451 = vpop.f32.mrb[0].mxu0
    %v452 = vadd.f32 %v140, %v451
    %v453 = vpop.f32.mrb[0].mxu0
    %454 = vmatprep.mubr.bf16.mxu0 0
    %455 = vmatmul.mubr.bf16.gmra.mrb[0].mxu0 %v275
    %v456 = vpop.f32.mrb[0].mxu0
    %v457 = vadd.f32 %v140, %v456
    %v458 = vpop.f32.mrb[0].mxu0
    %v459 = vpop.f32.mrb[0].mxu0
    %v460 = vadd.f32 %v140, %v459
    %v461 = vpop.f32.mrb[0].mxu0
    %462 = vmatprep.mubr.bf16.mxu0 0
    %463 = vmatmul.mubr.bf16.gmra.mrb[0].mxu0 %v276
    %v464 = vpop.f32.mrb[0].mxu0
    %v465 = vadd.f32 %v140, %v464
    %v466 = vpop.f32.mrb[0].mxu0
    %v467 = vpop.f32.mrb[0].mxu0
    %v468 = vadd.f32 %v140, %v467
    %v469 = vpop.f32.mrb[0].mxu0
    %470 = vmatprep.mubr.bf16.mxu0 0
    %471 = vmatmul.mubr.bf16.gmra.mrb[0].mxu0 %v277
    %v472 = vpop.f32.mrb[0].mxu0
    %v473 = vadd.f32 %v140, %v472
    %v474 = vpop.f32.mrb[0].mxu0
    %v475 = vpop.f32.mrb[0].mxu0
    %v476 = vadd.f32 %v140, %v475
    %v477 = vpop.f32.mrb[0].mxu0
    %478 = vmatprep.mubr.bf16.mxu0 0
    %479 = vmatmul.mubr.bf16.gmra.mrb[0].mxu0 %v278
    %v480 = vpop.f32.mrb[0].mxu0
    %v481 = vadd.f32 %v140, %v480
    %v482 = vpop.f32.mrb[0].mxu0
    %v483 = vpop.f32.mrb[0].mxu0
    %v484 = vadd.f32 %v140, %v483
    %v485 = vpop.f32.mrb[0].mxu0
    %486 = vmatprep.mubr.bf16.mxu0 0
    %487 = vmatmul.mubr.bf16.gmra.mrb[0].mxu0 %v279
    %v488 = vpop.f32.mrb[0].mxu0
    %v489 = vadd.f32 %v140, %v488
    %v490 = vpop.f32.mrb[0].mxu0
    %v491 = vpop.f32.mrb[0].mxu0
    %v492 = vadd.f32 %v140, %v491
    %v493 = vpop.f32.mrb[0].mxu0
    %494 = vmatprep.mubr.bf16.mxu0 0
    %495 = vmatmul.mubr.bf16.gmra.mrb[0].mxu0 %v280
    %v496 = vpop.f32.mrb[0].mxu0
    %v497 = vadd.f32 %v140, %v496
    %v498 = vpop.f32.mrb[0].mxu0
    %v499 = vpop.f32.mrb[0].mxu0
    %v500 = vadd.f32 %v140, %v499
    %v501 = vpop.f32.mrb[0].mxu0
    %502 = vmatprep.mubr.bf16.mxu0 0
    %503 = vmatmul.mubr.bf16.gmra.mrb[0].mxu0 %v281
    %v504 = vpop.f32.mrb[0].mxu0
    %v505 = vadd.f32 %v140, %v504
    %v506 = vpop.f32.mrb[0].mxu0
    %v507 = vpop.f32.mrb[0].mxu0
    %v508 = vadd.f32 %v140, %v507
    %v509 = vpop.f32.mrb[0].mxu0
    %510 = vmatprep.mubr.bf16.mxu0 0
    %511 = vmatmul.mubr.bf16.gmra.mrb[0].mxu0 %v282
    %v512 = vpop.f32.mrb[0].mxu0
    %v513 = vadd.f32 %v140, %v512
    %v514 = vpop.f32.mrb[0].mxu0
    %v515 = vpop.f32.mrb[0].mxu0
    %v516 = vadd.f32 %v140, %v515
    %v517 = vpop.f32.mrb[0].mxu0
    %518 = vmatprep.mubr.bf16.mxu0 0
    %519 = vmatmul.mubr.bf16.gmra.mrb[0].mxu0 %v283
    %v520 = vpop.f32.mrb[0].mxu0
    %v521 = vadd.f32 %v140, %v520
    %v522 = vpop.f32.mrb[0].mxu0
    %v523 = vpop.f32.mrb[0].mxu0
    %v524 = vadd.f32 %v140, %v523
    %v525 = vpop.f32.mrb[0].mxu0
    %526 = vmatprep.mubr.bf16.mxu0 0
    %527 = vmatmul.mubr.bf16.gmra.mrb[0].mxu0 %v284
    %v528 = vpop.f32.mrb[0].mxu0
    %v529 = vadd.f32 %v140, %v528
    %v530 = vpop.f32.mrb[0].mxu0
    %v531 = vpop.f32.mrb[0].mxu0
    %v532 = vadd.f32 %v140, %v531
    %v533 = vpop.f32.mrb[0].mxu0
    %534 = vmatprep.mubr.bf16.mxu0 0
    %535 = vmatmul.mubr.bf16.gmra.mrb[0].mxu0 %v285
    %v536 = vpop.f32.mrb[0].mxu0
    %v537 = vadd.f32 %v140, %v536
    %v538 = vpop.f32.mrb[0].mxu0
    %v539 = vpop.f32.mrb[0].mxu0
    %v540 = vadd.f32 %v140, %v539
    %v541 = vpop.f32.mrb[0].mxu0
    %542 = vmatprep.mubr.bf16.mxu0 0
    %543 = vmatmul.mubr.bf16.gmra.mrb[0].mxu0 %v286
    %v544 = vpop.f32.mrb[0].mxu0
    %v545 = vadd.f32 %v140, %v544
    %v546 = vpop.f32.mrb[0].mxu0
    %v547 = vpop.f32.mrb[0].mxu0
    %v548 = vadd.f32 %v140, %v547
    %v549 = vpop.f32.mrb[0].mxu0
    %550 = vmatprep.mubr.bf16.mxu0 0
    %551 = vmatmul.mubr.bf16.gmra.mrb[0].mxu0 %v287
    %v552 = vpop.f32.mrb[0].mxu0
    %v553 = vadd.f32 %v140, %v552
    %v554 = vpop.f32.mrb[0].mxu0
    %v555 = vpop.f32.mrb[0].mxu0
    %v556 = vadd.f32 %v140, %v555
    %v557 = vpop.f32.mrb[0].mxu0
    %558 = vmatprep.mubr.bf16.mxu0 0
    %559 = vmatmul.mubr.bf16.gmra.mrb[0].mxu0 %v288
    %v560 = vpop.f32.mrb[0].mxu0
    %v561 = vadd.f32 %v140, %v560
    %v562 = vpop.f32.mrb[0].mxu0
    %v563 = vpop.f32.mrb[0].mxu0
    %v564 = vadd.f32 %v140, %v563
    %v565 = vpop.f32.mrb[0].mxu0
    %566 = vmatprep.mubr.bf16.mxu0 0
    %567 = vmatmul.mubr.bf16.gmra.mrb[0].mxu0 %v289
    %v568 = vpop.f32.mrb[0].mxu0
    %v569 = vadd.f32 %v140, %v568
    %v570 = vpop.f32.mrb[0].mxu0
    %v571 = vpop.f32.mrb[0].mxu0
    %v572 = vadd.f32 %v140, %v571
    %v573 = vpop.f32.mrb[0].mxu0
    %574 = vmatprep.mubr.bf16.mxu0 0
    %575 = vmatmul.mubr.bf16.gmra.mrb[0].mxu0 %v290
    %v576 = vpop.f32.mrb[0].mxu0
    %v577 = vadd.f32 %v140, %v576
    %v578 = vpop.f32.mrb[0].mxu0
    %v579 = vpop.f32.mrb[0].mxu0
    %v580 = vadd.f32 %v140, %v579
    %v581 = vpop.f32.mrb[0].mxu0
    %582 = vmatprep.mubr.bf16.mxu0 0
    %583 = vmatmul.mubr.bf16.gmra.mrb[0].mxu0 %v291
    %v584 = vpop.f32.mrb[0].mxu0
    %v585 = vadd.f32 %v140, %v584
    %v586 = vpop.f32.mrb[0].mxu0
    %v587 = vpop.f32.mrb[0].mxu0
    %v588 = vadd.f32 %v140, %v587
    %v589 = vpop.f32.mrb[0].mxu0
    %590 = vmatprep.mubr.bf16.mxu0 0
    %591 = vmatmul.mubr.bf16.gmra.mrb[0].mxu0 %v292
    %v592 = vpop.f32.mrb[0].mxu0
    %v593 = vadd.f32 %v140, %v592
    %v594 = vpop.f32.mrb[0].mxu0
    %v595 = vpop.f32.mrb[0].mxu0
    %v596 = vadd.f32 %v140, %v595
    %v597 = vpop.f32.mrb[0].mxu0
    %598 = vmatprep.mubr.bf16.mxu0 0
    %599 = vmatmul.mubr.bf16.gmra.mrb[0].mxu0 %v293
    %v600 = vpop.f32.mrb[0].mxu0
    %v601 = vadd.f32 %v140, %v600
    %v602 = vpop.f32.mrb[0].mxu0
    %v603 = vpop.f32.mrb[0].mxu0
    %v604 = vadd.f32 %v140, %v603
    %v605 = vpop.f32.mrb[0].mxu0
    %606 = vmatprep.mubr.bf16.mxu0 0
    %607 = vmatmul.mubr.bf16.gmra.mrb[0].mxu0 %v294
    %v608 = vpop.f32.mrb[0].mxu0
    %v609 = vadd.f32 %v140, %v608
    %v610 = vpop.f32.mrb[0].mxu0
    %v611 = vpop.f32.mrb[0].mxu0
    %v612 = vadd.f32 %v140, %v611
    %v613 = vpop.f32.mrb[0].mxu0
    %614 = vmatprep.mubr.bf16.mxu0 0
    %615 = vmatmul.mubr.bf16.gmra.mrb[0].mxu0 %v295
    %v616 = vpop.f32.mrb[0].mxu0
    %v617 = vadd.f32 %v140, %v616
    %v618 = vpop.f32.mrb[0].mxu0
    %v619 = vpop.f32.mrb[0].mxu0
    %v620 = vadd.f32 %v140, %v619
    %v621 = vpop.f32.mrb[0].mxu0
    %622 = vmatprep.mubr.bf16.mxu0 0
    %623 = vmatmul.mubr.bf16.gmra.mrb[0].mxu0 %v296
    %v624 = vpop.f32.mrb[0].mxu0
    %v625 = vadd.f32 %v140, %v624
    %v626 = vpop.f32.mrb[0].mxu0
    %v627 = vpop.f32.mrb[0].mxu0
    %v628 = vadd.f32 %v140, %v627
    %v629 = vpop.f32.mrb[0].mxu0
    %630 = vmatprep.mubr.bf16.mxu0 0
    %631 = vmatmul.mubr.bf16.gmra.mrb[0].mxu0 %v297
    %v632 = vpop.f32.mrb[0].mxu0
    %v633 = vadd.f32 %v140, %v632
    %v634 = vpop.f32.mrb[0].mxu0
    %v635 = vpop.f32.mrb[0].mxu0
    %v636 = vadd.f32 %v140, %v635
    %v637 = vpop.f32.mrb[0].mxu0
    %638 = vmatprep.mubr.bf16.mxu0 0
    %639 = vmatmul.mubr.bf16.gmra.mrb[0].mxu0 %v298
    %v640 = vpop.f32.mrb[0].mxu0
    %v641 = vadd.f32 %v140, %v640
    %v642 = vpop.f32.mrb[0].mxu0
    %v643 = vpop.f32.mrb[0].mxu0
    %v644 = vadd.f32 %v140, %v643
    %v645 = vpop.f32.mrb[0].mxu0
    %646 = vmatprep.mubr.bf16.mxu0 0
    %647 = vmatmul.mubr.bf16.gmra.mrb[0].mxu0 %v299
    %v648 = vpop.f32.mrb[0].mxu0
    %v649 = vadd.f32 %v140, %v648
    %v650 = vpop.f32.mrb[0].mxu0
    %v651 = vpop.f32.mrb[0].mxu0
    %v652 = vadd.f32 %v140, %v651
    %v653 = vpop.f32.mrb[0].mxu0
    %654 = vmatprep.mubr.bf16.mxu0 0
    %655 = vmatmul.mubr.bf16.gmra.mrb[0].mxu0 %v300
    %v656 = vpop.f32.mrb[0].mxu0
    %v657 = vadd.f32 %v140, %v656
    %v658 = vpop.f32.mrb[0].mxu0
    %v659 = vpop.f32.mrb[0].mxu0
    %v660 = vadd.f32 %v140, %v659
    %v661 = vpop.f32.mrb[0].mxu0
    %662 = vmatprep.mubr.bf16.mxu0 0
    %663 = vmatmul.mubr.bf16.gmra.mrb[0].mxu0 %v301
    %v664 = vpop.f32.mrb[0].mxu0
    %v665 = vadd.f32 %v140, %v664
    %v666 = vpop.f32.mrb[0].mxu0
    %v667 = vpop.f32.mrb[0].mxu0
    %v668 = vadd.f32 %v140, %v667
    %v669 = vpop.f32.mrb[0].mxu0
    %670 = vdwg.mxu0
    %vm671 = vcmp.gt.f32.partialorder %v417, 0.0
    %vm672 = vcmp.gt.f32.partialorder %v420, 0.0
    %vm673 = vcmp.gt.f32.partialorder %v425, 0.0
    %vm674 = vcmp.gt.f32.partialorder %v428, 0.0
    %vm675 = vcmp.gt.f32.partialorder %v433, 0.0
    %vm676 = vcmp.gt.f32.partialorder %v436, 0.0
    %vm677 = vcmp.gt.f32.partialorder %v441, 0.0
    %vm678 = vcmp.gt.f32.partialorder %v444, 0.0
    %vm679 = vcmp.gt.f32.partialorder %v449, 0.0
    %vm680 = vcmp.gt.f32.partialorder %v452, 0.0
    %vm681 = vcmp.gt.f32.partialorder %v457, 0.0
    %vm682 = vcmp.gt.f32.partialorder %v460, 0.0
    %vm683 = vcmp.gt.f32.partialorder %v465, 0.0
    %vm684 = vcmp.gt.f32.partialorder %v468, 0.0
    %vm685 = vcmp.gt.f32.partialorder %v473, 0.0
    %vm686 = vcmp.gt.f32.partialorder %v476, 0.0
    %vm687 = vcmp.gt.f32.partialorder %v481, 0.0
    %vm688 = vcmp.gt.f32.partialorder %v484, 0.0
    %vm689 = vcmp.gt.f32.partialorder %v489, 0.0
    %vm690 = vcmp.gt.f32.partialorder %v492, 0.0
    %vm691 = vcmp.gt.f32.partialorder %v497, 0.0
    %vm692 = vcmp.gt.f32.partialorder %v500, 0.0
    %vm693 = vcmp.gt.f32.partialorder %v505, 0.0
    %vm694 = vcmp.gt.f32.partialorder %v508, 0.0
    %vm695 = vcmp.gt.f32.partialorder %v513, 0.0
    %vm696 = vcmp.gt.f32.partialorder %v516, 0.0
    %vm697 = vcmp.gt.f32.partialorder %v521, 0.0
    %vm698 = vcmp.gt.f32.partialorder %v524, 0.0
    %vm699 = vcmp.gt.f32.partialorder %v529, 0.0
    %vm700 = vcmp.gt.f32.partialorder %v532, 0.0
    %vm701 = vcmp.gt.f32.partialorder %v537, 0.0
    %vm702 = vcmp.gt.f32.partialorder %v540, 0.0
    %vm703 = vcmp.gt.f32.partialorder %v545, 0.0
    %vm704 = vcmp.gt.f32.partialorder %v548, 0.0
    %vm705 = vcmp.gt.f32.partialorder %v553, 0.0
    %vm706 = vcmp.gt.f32.partialorder %v556, 0.0
    %vm707 = vcmp.gt.f32.partialorder %v561, 0.0
    %vm708 = vcmp.gt.f32.partialorder %v564, 0.0
    %vm709 = vcmp.gt.f32.partialorder %v569, 0.0
    %vm710 = vcmp.gt.f32.partialorder %v572, 0.0
    %vm711 = vcmp.gt.f32.partialorder %v577, 0.0
    %vm712 = vcmp.gt.f32.partialorder %v580, 0.0
    %vm713 = vcmp.gt.f32.partialorder %v585, 0.0
    %vm714 = vcmp.gt.f32.partialorder %v588, 0.0
    %vm715 = vcmp.gt.f32.partialorder %v593, 0.0
    %vm716 = vcmp.gt.f32.partialorder %v596, 0.0
    %vm717 = vcmp.gt.f32.partialorder %v601, 0.0
    %vm718 = vcmp.gt.f32.partialorder %v604, 0.0
    %vm719 = vcmp.gt.f32.partialorder %v609, 0.0
    %vm720 = vcmp.gt.f32.partialorder %v612, 0.0
    %vm721 = vcmp.gt.f32.partialorder %v617, 0.0
    %vm722 = vcmp.gt.f32.partialorder %v620, 0.0
    %vm723 = vcmp.gt.f32.partialorder %v625, 0.0
    %vm724 = vcmp.gt.f32.partialorder %v628, 0.0
    %vm725 = vcmp.gt.f32.partialorder %v633, 0.0
    %vm726 = vcmp.gt.f32.partialorder %v636, 0.0
    %vm727 = vcmp.gt.f32.partialorder %v641, 0.0
    %vm728 = vcmp.gt.f32.partialorder %v644, 0.0
    %vm729 = vcmp.gt.f32.partialorder %v649, 0.0
    %vm730 = vcmp.gt.f32.partialorder %v652, 0.0
    %vm731 = vcmp.gt.f32.partialorder %v657, 0.0
    %vm732 = vcmp.gt.f32.partialorder %v660, 0.0
    %vm733 = vcmp.gt.f32.partialorder %v665, 0.0
    %vm734 = vcmp.gt.f32.partialorder %v668, 0.0
    %v735 = vmul.f32 %v417, 0.1
    %v736 = vmul.f32 %v420, 0.1
    %v737 = vmul.f32 %v425, 0.1
    %v738 = vmul.f32 %v428, 0.1
    %v739 = vmul.f32 %v433, 0.1
    %v740 = vmul.f32 %v436, 0.1
    %v741 = vmul.f32 %v441, 0.1
    %v742 = vmul.f32 %v444, 0.1
    %v743 = vmul.f32 %v449, 0.1
    %v744 = vmul.f32 %v452, 0.1
    %v745 = vmul.f32 %v457, 0.1
    %v746 = vmul.f32 %v460, 0.1
    %v747 = vmul.f32 %v465, 0.1
    %v748 = vmul.f32 %v468, 0.1
    %v749 = vmul.f32 %v473, 0.1
    %v750 = vmul.f32 %v476, 0.1
    %v751 = vmul.f32 %v481, 0.1
    %v752 = vmul.f32 %v484, 0.1
    %v753 = vmul.f32 %v489, 0.1
    %v754 = vmul.f32 %v492, 0.1
    %v755 = vmul.f32 %v497, 0.1
    %v756 = vmul.f32 %v500, 0.1
    %v757 = vmul.f32 %v505, 0.1
    %v758 = vmul.f32 %v508, 0.1
    %v759 = vmul.f32 %v513, 0.1
    %v760 = vmul.f32 %v516, 0.1
    %v761 = vmul.f32 %v521, 0.1
    %v762 = vmul.f32 %v524, 0.1
    %v763 = vmul.f32 %v529, 0.1
    %v764 = vmul.f32 %v532, 0.1
    %v765 = vmul.f32 %v537, 0.1
    %v766 = vmul.f32 %v540, 0.1
    %v767 = vmul.f32 %v545, 0.1
    %v768 = vmul.f32 %v548, 0.1
    %v769 = vmul.f32 %v553, 0.1
    %v770 = vmul.f32 %v556, 0.1
    %v771 = vmul.f32 %v561, 0.1
    %v772 = vmul.f32 %v564, 0.1
    %v773 = vmul.f32 %v569, 0.1
    %v774 = vmul.f32 %v572, 0.1
    %v775 = vmul.f32 %v577, 0.1
    %v776 = vmul.f32 %v580, 0.1
    %v777 = vmul.f32 %v585, 0.1
    %v778 = vmul.f32 %v588, 0.1
    %v779 = vmul.f32 %v593, 0.1
    %v780 = vmul.f32 %v596, 0.1
    %v781 = vmul.f32 %v601, 0.1
    %v782 = vmul.f32 %v604, 0.1
    %v783 = vmul.f32 %v609, 0.1
    %v784 = vmul.f32 %v612, 0.1
    %v785 = vmul.f32 %v617, 0.1
    %v786 = vmul.f32 %v620, 0.1
    %v787 = vmul.f32 %v625, 0.1
    %v788 = vmul.f32 %v628, 0.1
    %v789 = vmul.f32 %v633, 0.1
    %v790 = vmul.f32 %v636, 0.1
    %v791 = vmul.f32 %v641, 0.1
    %v792 = vmul.f32 %v644, 0.1
    %v793 = vmul.f32 %v649, 0.1
    %v794 = vmul.f32 %v652, 0.1
    %v795 = vmul.f32 %v657, 0.1
    %v796 = vmul.f32 %v660, 0.1
    %v797 = vmul.f32 %v665, 0.1
    %v798 = vmul.f32 %v668, 0.1
    %v799 = vsel %vm671, %v417, %v735
    %v800 = vsel %vm672, %v420, %v736
    %v801 = vsel %vm673, %v425, %v737
    %v802 = vsel %vm674, %v428, %v738
    %v803 = vsel %vm675, %v433, %v739
    %v804 = vsel %vm676, %v436, %v740
    %v805 = vsel %vm677, %v441, %v741
    %v806 = vsel %vm678, %v444, %v742
    %v807 = vsel %vm679, %v449, %v743
    %v808 = vsel %vm680, %v452, %v744
    %v809 = vsel %vm681, %v457, %v745
    %v810 = vsel %vm682, %v460, %v746
    %v811 = vsel %vm683, %v465, %v747
    %v812 = vsel %vm684, %v468, %v748
    %v813 = vsel %vm685, %v473, %v749
    %v814 = vsel %vm686, %v476, %v750
    %v815 = vsel %vm687, %v481, %v751
    %v816 = vsel %vm688, %v484, %v752
    %v817 = vsel %vm689, %v489, %v753
    %v818 = vsel %vm690, %v492, %v754
    %v819 = vsel %vm691, %v497, %v755
    %v820 = vsel %vm692, %v500, %v756
    %v821 = vsel %vm693, %v505, %v757
    %v822 = vsel %vm694, %v508, %v758
    %v823 = vsel %vm695, %v513, %v759
    %v824 = vsel %vm696, %v516, %v760
    %v825 = vsel %vm697, %v521, %v761
    %v826 = vsel %vm698, %v524, %v762
    %v827 = vsel %vm699, %v529, %v763
    %v828 = vsel %vm700, %v532, %v764
    %v829 = vsel %vm701, %v537, %v765
    %v830 = vsel %vm702, %v540, %v766
    %v831 = vsel %vm703, %v545, %v767
    %v832 = vsel %vm704, %v548, %v768
    %v833 = vsel %vm705, %v553, %v769
    %v834 = vsel %vm706, %v556, %v770
    %v835 = vsel %vm707, %v561, %v771
    %v836 = vsel %vm708, %v564, %v772
    %v837 = vsel %vm709, %v569, %v773
    %v838 = vsel %vm710, %v572, %v774
    %v839 = vsel %vm711, %v577, %v775
    %v840 = vsel %vm712, %v580, %v776
    %v841 = vsel %vm713, %v585, %v777
    %v842 = vsel %vm714, %v588, %v778
    %v843 = vsel %vm715, %v593, %v779
    %v844 = vsel %vm716, %v596, %v780
    %v845 = vsel %vm717, %v601, %v781
    %v846 = vsel %vm718, %v604, %v782
    %v847 = vsel %vm719, %v609, %v783
    %v848 = vsel %vm720, %v612, %v784
    %v849 = vsel %vm721, %v617, %v785
    %v850 = vsel %vm722, %v620, %v786
    %v851 = vsel %vm723, %v625, %v787
    %v852 = vsel %vm724, %v628, %v788
    %v853 = vsel %vm725, %v633, %v789
    %v854 = vsel %vm726, %v636, %v790
    %v855 = vsel %vm727, %v641, %v791
    %v856 = vsel %vm728, %v644, %v792
    %v857 = vsel %vm729, %v649, %v793
    %v858 = vsel %vm730, %v652, %v794
    %v859 = vsel %vm731, %v657, %v795
    %v860 = vsel %vm732, %v660, %v796
    %v861 = vsel %vm733, %v665, %v797
    %v862 = vsel %vm734, %v668, %v798
    %v863 = vld [vmem:[#allocation4] sm:$0xf]
    %v864 = vld [vmem:[#allocation4 + $0x4] sm:$0xf]
    %v865 = vld [vmem:[#allocation4 + $0x8] sm:$0xf]
    %v866 = vld [vmem:[#allocation4 + $0xc] sm:$0xf]
    %v867 = vld [vmem:[#allocation4 + $0x10] sm:$0xf]
    %v868 = vld [vmem:[#allocation4 + $0x14] sm:$0xf]
    %v869 = vld [vmem:[#allocation4 + $0x18] sm:$0xf]
    %v870 = vld [vmem:[#allocation4 + $0x1c] sm:$0xf]
    %v871 = vld [vmem:[#allocation4 + $0x20] sm:$0xf]
    %v872 = vld [vmem:[#allocation4 + $0x24] sm:$0xf]
    %v873 = vld [vmem:[#allocation4 + $0x28] sm:$0xf]
    %v874 = vld [vmem:[#allocation4 + $0x2c] sm:$0xf]
    %v875 = vld [vmem:[#allocation4 + $0x30] sm:$0xf]
    %v876 = vld [vmem:[#allocation4 + $0x34] sm:$0xf]
    %v877 = vld [vmem:[#allocation4 + $0x38] sm:$0xf]
    %v878 = vld [vmem:[#allocation4 + $0x3c] sm:$0xf]
    %v879 = vld [vmem:[%s4] sm:$0x1]
    %v880 = vpack.c.bf16 %v800, %v799
    %v881 = vpack.c.bf16 %v802, %v801
    %v882 = vpack.c.bf16 %v804, %v803
    %v883 = vpack.c.bf16 %v806, %v805
    %v884 = vpack.c.bf16 %v808, %v807
    %v885 = vpack.c.bf16 %v810, %v809
    %v886 = vpack.c.bf16 %v812, %v811
    %v887 = vpack.c.bf16 %v814, %v813
    %v888 = vpack.c.bf16 %v816, %v815
    %v889 = vpack.c.bf16 %v818, %v817
    %v890 = vpack.c.bf16 %v820, %v819
    %v891 = vpack.c.bf16 %v822, %v821
    %v892 = vpack.c.bf16 %v824, %v823
    %v893 = vpack.c.bf16 %v826, %v825
    %v894 = vpack.c.bf16 %v828, %v827
    %v895 = vpack.c.bf16 %v830, %v829
    %v896 = vpack.c.bf16 %v832, %v831
    %v897 = vpack.c.bf16 %v834, %v833
    %v898 = vpack.c.bf16 %v836, %v835
    %v899 = vpack.c.bf16 %v838, %v837
    %v900 = vpack.c.bf16 %v840, %v839
    %v901 = vpack.c.bf16 %v842, %v841
    %v902 = vpack.c.bf16 %v844, %v843
    %v903 = vpack.c.bf16 %v846, %v845
    %v904 = vpack.c.bf16 %v848, %v847
    %v905 = vpack.c.bf16 %v850, %v849
    %v906 = vpack.c.bf16 %v852, %v851
    %v907 = vpack.c.bf16 %v854, %v853
    %v908 = vpack.c.bf16 %v856, %v855
    %v909 = vpack.c.bf16 %v858, %v857
    %v910 = vpack.c.bf16 %v860, %v859
    %v911 = vpack.c.bf16 %v862, %v861
    %v913 = vlaneseq
    %v914 = vshrl.u32 %v913, 7
    %v915 = vsub.s32 0, %v914
    %v916 = vrot.slane %v879, %v915
    %v934 = vunpack.c.l.b16 %v863
    %v935 = vunpack.c.l.b16 %v864
    %v936 = vunpack.c.l.b16 %v865
    %v937 = vunpack.c.l.b16 %v866
    %v938 = vunpack.c.l.b16 %v867
    %v939 = vunpack.c.l.b16 %v868
    %v940 = vunpack.c.l.b16 %v869
    %v941 = vunpack.c.l.b16 %v870
    %v942 = vunpack.c.l.b16 %v871
    %v943 = vunpack.c.l.b16 %v872
    %v944 = vunpack.c.l.b16 %v873
    %v945 = vunpack.c.l.b16 %v874
    %v946 = vunpack.c.l.b16 %v875
    %v947 = vunpack.c.l.b16 %v876
    %v948 = vunpack.c.l.b16 %v877
    %v949 = vunpack.c.l.b16 %v878
    %v950 = vpack.c.b16 %v935, %v934
    %v951 = vpack.c.b16 %v937, %v936
    %v952 = vpack.c.b16 %v939, %v938
    %v953 = vpack.c.b16 %v941, %v940
    %v954 = vpack.c.b16 %v943, %v942
    %v955 = vpack.c.b16 %v945, %v944
    %v956 = vpack.c.b16 %v947, %v946
    %v957 = vpack.c.b16 %v949, %v948
    %966 = vmatprep.subr.bf16.mxu0 0
    %967 = vmatpush1.bf16.msra.mxu0 %v950
    %968 = vmatprep.subr.bf16.mxu0 0
    %969 = vmatpush1.bf16.msra.mxu0 %v951
    %970 = vmatprep.subr.bf16.mxu0 0
    %971 = vmatpush1.bf16.msra.mxu0 %v952
    %972 = vmatprep.subr.bf16.mxu0 0
    %973 = vmatpush1.bf16.msra.mxu0 %v953
    %974 = vmatprep.subr.bf16.mxu0 0
    %975 = vmatpush1.bf16.msra.mxu0 %v954
    %976 = vmatprep.subr.bf16.mxu0 0
    %977 = vmatpush1.bf16.msra.mxu0 %v955
    %978 = vmatprep.subr.bf16.mxu0 0
    %979 = vmatpush1.bf16.msra.mxu0 %v956
    %980 = vmatprep.subr.bf16.mxu0 0
    %981 = vmatpush1.bf16.msra.mxu0 %v957
    %982 = vmatprep.subr.bf16.mxu0 0
    %983 = vmatpush1.bf16.msra.mxu0 0
    %984 = vmatprep.subr.bf16.mxu0 0
    %985 = vmatpush1.bf16.msra.mxu0 0
    %986 = vmatprep.subr.bf16.mxu0 0
    %987 = vmatpush1.bf16.msra.mxu0 0
    %988 = vmatprep.subr.bf16.mxu0 0
    %989 = vmatpush1.bf16.msra.mxu0 0
    %990 = vmatprep.subr.bf16.mxu0 0
    %991 = vmatpush1.bf16.msra.mxu0 0
    %992 = vmatprep.subr.bf16.mxu0 0
    %993 = vmatpush1.bf16.msra.mxu0 0
    %994 = vmatprep.subr.bf16.mxu0 0
    %995 = vmatpush1.bf16.msra.mxu0 0
    %996 = vmatprep.subr.bf16.mxu0 0
    %997 = vmatpush1.bf16.msra.mxu0 0
    %998 = vmatprep.mubr.bf16.mxu0 0
    %999 = vmatmul.mubr.bf16.gmra.mrb[0].mxu0 %v880
    %v1000 = vpop.f32.mrb[0].mxu0
    %v1001 = vadd.f32 %v916, %v1000
    %v1002 = vpop.f32.mrb[0].mxu0
    %v1003 = vpop.f32.mrb[0].mxu0
    %v1004 = vadd.f32 %v916, %v1003
    %v1005 = vpop.f32.mrb[0].mxu0
    %1006 = vmatprep.mubr.bf16.mxu0 0
    %1007 = vmatmul.mubr.bf16.gmra.mrb[0].mxu0 %v881
    %v1008 = vpop.f32.mrb[0].mxu0
    %v1009 = vadd.f32 %v916, %v1008
    %v1010 = vpop.f32.mrb[0].mxu0
    %v1011 = vpop.f32.mrb[0].mxu0
    %v1012 = vadd.f32 %v916, %v1011
    %v1013 = vpop.f32.mrb[0].mxu0
    %1014 = vmatprep.mubr.bf16.mxu0 0
    %1015 = vmatmul.mubr.bf16.gmra.mrb[0].mxu0 %v882
    %v1016 = vpop.f32.mrb[0].mxu0
    %v1017 = vadd.f32 %v916, %v1016
    %v1018 = vpop.f32.mrb[0].mxu0
    %v1019 = vpop.f32.mrb[0].mxu0
    %v1020 = vadd.f32 %v916, %v1019
    %v1021 = vpop.f32.mrb[0].mxu0
    %1022 = vmatprep.mubr.bf16.mxu0 0
    %1023 = vmatmul.mubr.bf16.gmra.mrb[0].mxu0 %v883
    %v1024 = vpop.f32.mrb[0].mxu0
    %v1025 = vadd.f32 %v916, %v1024
    %v1026 = vpop.f32.mrb[0].mxu0
    %v1027 = vpop.f32.mrb[0].mxu0
    %v1028 = vadd.f32 %v916, %v1027
    %v1029 = vpop.f32.mrb[0].mxu0
    %1030 = vmatprep.mubr.bf16.mxu0 0
    %1031 = vmatmul.mubr.bf16.gmra.mrb[0].mxu0 %v884
    %v1032 = vpop.f32.mrb[0].mxu0
    %v1033 = vadd.f32 %v916, %v1032
    %v1034 = vpop.f32.mrb[0].mxu0
    %v1035 = vpop.f32.mrb[0].mxu0
    %v1036 = vadd.f32 %v916, %v1035
    %v1037 = vpop.f32.mrb[0].mxu0
    %1038 = vmatprep.mubr.bf16.mxu0 0
    %1039 = vmatmul.mubr.bf16.gmra.mrb[0].mxu0 %v885
    %v1040 = vpop.f32.mrb[0].mxu0
    %v1041 = vadd.f32 %v916, %v1040
    %v1042 = vpop.f32.mrb[0].mxu0
    %v1043 = vpop.f32.mrb[0].mxu0
    %v1044 = vadd.f32 %v916, %v1043
    %v1045 = vpop.f32.mrb[0].mxu0
    %1046 = vmatprep.mubr.bf16.mxu0 0
    %1047 = vmatmul.mubr.bf16.gmra.mrb[0].mxu0 %v886
    %v1048 = vpop.f32.mrb[0].mxu0
    %v1049 = vadd.f32 %v916, %v1048
    %v1050 = vpop.f32.mrb[0].mxu0
    %v1051 = vpop.f32.mrb[0].mxu0
    %v1052 = vadd.f32 %v916, %v1051
    %v1053 = vpop.f32.mrb[0].mxu0
    %1054 = vmatprep.mubr.bf16.mxu0 0
    %1055 = vmatmul.mubr.bf16.gmra.mrb[0].mxu0 %v887
    %v1056 = vpop.f32.mrb[0].mxu0
    %v1057 = vadd.f32 %v916, %v1056
    %v1058 = vpop.f32.mrb[0].mxu0
    %v1059 = vpop.f32.mrb[0].mxu0
    %v1060 = vadd.f32 %v916, %v1059
    %v1061 = vpop.f32.mrb[0].mxu0
    %1062 = vmatprep.mubr.bf16.mxu0 0
    %1063 = vmatmul.mubr.bf16.gmra.mrb[0].mxu0 %v888
    %v1064 = vpop.f32.mrb[0].mxu0
    %v1065 = vadd.f32 %v916, %v1064
    %v1066 = vpop.f32.mrb[0].mxu0
    %v1067 = vpop.f32.mrb[0].mxu0
    %v1068 = vadd.f32 %v916, %v1067
    %v1069 = vpop.f32.mrb[0].mxu0
    %1070 = vmatprep.mubr.bf16.mxu0 0
    %1071 = vmatmul.mubr.bf16.gmra.mrb[0].mxu0 %v889
    %v1072 = vpop.f32.mrb[0].mxu0
    %v1073 = vadd.f32 %v916, %v1072
    %v1074 = vpop.f32.mrb[0].mxu0
    %v1075 = vpop.f32.mrb[0].mxu0
    %v1076 = vadd.f32 %v916, %v1075
    %v1077 = vpop.f32.mrb[0].mxu0
    %1078 = vmatprep.mubr.bf16.mxu0 0
    %1079 = vmatmul.mubr.bf16.gmra.mrb[0].mxu0 %v890
    %v1080 = vpop.f32.mrb[0].mxu0
    %v1081 = vadd.f32 %v916, %v1080
    %v1082 = vpop.f32.mrb[0].mxu0
    %v1083 = vpop.f32.mrb[0].mxu0
    %v1084 = vadd.f32 %v916, %v1083
    %v1085 = vpop.f32.mrb[0].mxu0
    %1086 = vmatprep.mubr.bf16.mxu0 0
    %1087 = vmatmul.mubr.bf16.gmra.mrb[0].mxu0 %v891
    %v1088 = vpop.f32.mrb[0].mxu0
    %v1089 = vadd.f32 %v916, %v1088
    %v1090 = vpop.f32.mrb[0].mxu0
    %v1091 = vpop.f32.mrb[0].mxu0
    %v1092 = vadd.f32 %v916, %v1091
    %v1093 = vpop.f32.mrb[0].mxu0
    %1094 = vmatprep.mubr.bf16.mxu0 0
    %1095 = vmatmul.mubr.bf16.gmra.mrb[0].mxu0 %v892
    %v1096 = vpop.f32.mrb[0].mxu0
    %v1097 = vadd.f32 %v916, %v1096
    %v1098 = vpop.f32.mrb[0].mxu0
    %v1099 = vpop.f32.mrb[0].mxu0
    %v1100 = vadd.f32 %v916, %v1099
    %v1101 = vpop.f32.mrb[0].mxu0
    %1102 = vmatprep.mubr.bf16.mxu0 0
    %1103 = vmatmul.mubr.bf16.gmra.mrb[0].mxu0 %v893
    %v1104 = vpop.f32.mrb[0].mxu0
    %v1105 = vadd.f32 %v916, %v1104
    %v1106 = vpop.f32.mrb[0].mxu0
    %v1107 = vpop.f32.mrb[0].mxu0
    %v1108 = vadd.f32 %v916, %v1107
    %v1109 = vpop.f32.mrb[0].mxu0
    %1110 = vmatprep.mubr.bf16.mxu0 0
    %1111 = vmatmul.mubr.bf16.gmra.mrb[0].mxu0 %v894
    %v1112 = vpop.f32.mrb[0].mxu0
    %v1113 = vadd.f32 %v916, %v1112
    %v1114 = vpop.f32.mrb[0].mxu0
    %v1115 = vpop.f32.mrb[0].mxu0
    %v1116 = vadd.f32 %v916, %v1115
    %v1117 = vpop.f32.mrb[0].mxu0
    %1118 = vmatprep.mubr.bf16.mxu0 0
    %1119 = vmatmul.mubr.bf16.gmra.mrb[0].mxu0 %v895
    %v1120 = vpop.f32.mrb[0].mxu0
    %v1121 = vadd.f32 %v916, %v1120
    %v1122 = vpop.f32.mrb[0].mxu0
    %v1123 = vpop.f32.mrb[0].mxu0
    %v1124 = vadd.f32 %v916, %v1123
    %v1125 = vpop.f32.mrb[0].mxu0
    %1126 = vmatprep.mubr.bf16.mxu0 0
    %1127 = vmatmul.mubr.bf16.gmra.mrb[0].mxu0 %v896
    %v1128 = vpop.f32.mrb[0].mxu0
    %v1129 = vadd.f32 %v916, %v1128
    %v1130 = vpop.f32.mrb[0].mxu0
    %v1131 = vpop.f32.mrb[0].mxu0
    %v1132 = vadd.f32 %v916, %v1131
    %v1133 = vpop.f32.mrb[0].mxu0
    %1134 = vmatprep.mubr.bf16.mxu0 0
    %1135 = vmatmul.mubr.bf16.gmra.mrb[0].mxu0 %v897
    %v1136 = vpop.f32.mrb[0].mxu0
    %v1137 = vadd.f32 %v916, %v1136
    %v1138 = vpop.f32.mrb[0].mxu0
    %v1139 = vpop.f32.mrb[0].mxu0
    %v1140 = vadd.f32 %v916, %v1139
    %v1141 = vpop.f32.mrb[0].mxu0
    %1142 = vmatprep.mubr.bf16.mxu0 0
    %1143 = vmatmul.mubr.bf16.gmra.mrb[0].mxu0 %v898
    %v1144 = vpop.f32.mrb[0].mxu0
    %v1145 = vadd.f32 %v916, %v1144
    %v1146 = vpop.f32.mrb[0].mxu0
    %v1147 = vpop.f32.mrb[0].mxu0
    %v1148 = vadd.f32 %v916, %v1147
    %v1149 = vpop.f32.mrb[0].mxu0
    %1150 = vmatprep.mubr.bf16.mxu0 0
    %1151 = vmatmul.mubr.bf16.gmra.mrb[0].mxu0 %v899
    %v1152 = vpop.f32.mrb[0].mxu0
    %v1153 = vadd.f32 %v916, %v1152
    %v1154 = vpop.f32.mrb[0].mxu0
    %v1155 = vpop.f32.mrb[0].mxu0
    %v1156 = vadd.f32 %v916, %v1155
    %v1157 = vpop.f32.mrb[0].mxu0
    %1158 = vmatprep.mubr.bf16.mxu0 0
    %1159 = vmatmul.mubr.bf16.gmra.mrb[0].mxu0 %v900
    %v1160 = vpop.f32.mrb[0].mxu0
    %v1161 = vadd.f32 %v916, %v1160
    %v1162 = vpop.f32.mrb[0].mxu0
    %v1163 = vpop.f32.mrb[0].mxu0
    %v1164 = vadd.f32 %v916, %v1163
    %v1165 = vpop.f32.mrb[0].mxu0
    %1166 = vmatprep.mubr.bf16.mxu0 0
    %1167 = vmatmul.mubr.bf16.gmra.mrb[0].mxu0 %v901
    %v1168 = vpop.f32.mrb[0].mxu0
    %v1169 = vadd.f32 %v916, %v1168
    %v1170 = vpop.f32.mrb[0].mxu0
    %v1171 = vpop.f32.mrb[0].mxu0
    %v1172 = vadd.f32 %v916, %v1171
    %v1173 = vpop.f32.mrb[0].mxu0
    %1174 = vmatprep.mubr.bf16.mxu0 0
    %1175 = vmatmul.mubr.bf16.gmra.mrb[0].mxu0 %v902
    %v1176 = vpop.f32.mrb[0].mxu0
    %v1177 = vadd.f32 %v916, %v1176
    %v1178 = vpop.f32.mrb[0].mxu0
    %v1179 = vpop.f32.mrb[0].mxu0
    %v1180 = vadd.f32 %v916, %v1179
    %v1181 = vpop.f32.mrb[0].mxu0
    %1182 = vmatprep.mubr.bf16.mxu0 0
    %1183 = vmatmul.mubr.bf16.gmra.mrb[0].mxu0 %v903
    %v1184 = vpop.f32.mrb[0].mxu0
    %v1185 = vadd.f32 %v916, %v1184
    %v1186 = vpop.f32.mrb[0].mxu0
    %v1187 = vpop.f32.mrb[0].mxu0
    %v1188 = vadd.f32 %v916, %v1187
    %v1189 = vpop.f32.mrb[0].mxu0
    %1190 = vmatprep.mubr.bf16.mxu0 0
    %1191 = vmatmul.mubr.bf16.gmra.mrb[0].mxu0 %v904
    %v1192 = vpop.f32.mrb[0].mxu0
    %v1193 = vadd.f32 %v916, %v1192
    %v1194 = vpop.f32.mrb[0].mxu0
    %v1195 = vpop.f32.mrb[0].mxu0
    %v1196 = vadd.f32 %v916, %v1195
    %v1197 = vpop.f32.mrb[0].mxu0
    %1198 = vmatprep.mubr.bf16.mxu0 0
    %1199 = vmatmul.mubr.bf16.gmra.mrb[0].mxu0 %v905
    %v1200 = vpop.f32.mrb[0].mxu0
    %v1201 = vadd.f32 %v916, %v1200
    %v1202 = vpop.f32.mrb[0].mxu0
    %v1203 = vpop.f32.mrb[0].mxu0
    %v1204 = vadd.f32 %v916, %v1203
    %v1205 = vpop.f32.mrb[0].mxu0
    %1206 = vmatprep.mubr.bf16.mxu0 0
    %1207 = vmatmul.mubr.bf16.gmra.mrb[0].mxu0 %v906
    %v1208 = vpop.f32.mrb[0].mxu0
    %v1209 = vadd.f32 %v916, %v1208
    %v1210 = vpop.f32.mrb[0].mxu0
    %v1211 = vpop.f32.mrb[0].mxu0
    %v1212 = vadd.f32 %v916, %v1211
    %v1213 = vpop.f32.mrb[0].mxu0
    %1214 = vmatprep.mubr.bf16.mxu0 0
    %1215 = vmatmul.mubr.bf16.gmra.mrb[0].mxu0 %v907
    %v1216 = vpop.f32.mrb[0].mxu0
    %v1217 = vadd.f32 %v916, %v1216
    %v1218 = vpop.f32.mrb[0].mxu0
    %v1219 = vpop.f32.mrb[0].mxu0
    %v1220 = vadd.f32 %v916, %v1219
    %v1221 = vpop.f32.mrb[0].mxu0
    %1222 = vmatprep.mubr.bf16.mxu0 0
    %1223 = vmatmul.mubr.bf16.gmra.mrb[0].mxu0 %v908
    %v1224 = vpop.f32.mrb[0].mxu0
    %v1225 = vadd.f32 %v916, %v1224
    %v1226 = vpop.f32.mrb[0].mxu0
    %v1227 = vpop.f32.mrb[0].mxu0
    %v1228 = vadd.f32 %v916, %v1227
    %v1229 = vpop.f32.mrb[0].mxu0
    %1230 = vmatprep.mubr.bf16.mxu0 0
    %1231 = vmatmul.mubr.bf16.gmra.mrb[0].mxu0 %v909
    %v1232 = vpop.f32.mrb[0].mxu0
    %v1233 = vadd.f32 %v916, %v1232
    %v1234 = vpop.f32.mrb[0].mxu0
    %v1235 = vpop.f32.mrb[0].mxu0
    %v1236 = vadd.f32 %v916, %v1235
    %v1237 = vpop.f32.mrb[0].mxu0
    %1238 = vmatprep.mubr.bf16.mxu0 0
    %1239 = vmatmul.mubr.bf16.gmra.mrb[0].mxu0 %v910
    %v1240 = vpop.f32.mrb[0].mxu0
    %v1241 = vadd.f32 %v916, %v1240
    %v1242 = vpop.f32.mrb[0].mxu0
    %v1243 = vpop.f32.mrb[0].mxu0
    %v1244 = vadd.f32 %v916, %v1243
    %v1245 = vpop.f32.mrb[0].mxu0
    %1246 = vmatprep.mubr.bf16.mxu0 0
    %1247 = vmatmul.mubr.bf16.gmra.mrb[0].mxu0 %v911
    %v1248 = vpop.f32.mrb[0].mxu0
    %v1249 = vadd.f32 %v916, %v1248
    %v1250 = vpop.f32.mrb[0].mxu0
    %v1251 = vpop.f32.mrb[0].mxu0
    %v1252 = vadd.f32 %v916, %v1251
    %v1253 = vpop.f32.mrb[0].mxu0
    %1254 = vdwg.mxu0
    %vm1255 = vcmp.gt.f32.partialorder %v1001, 0.0
    %vm1256 = vcmp.gt.f32.partialorder %v1004, 0.0
    %vm1257 = vcmp.gt.f32.partialorder %v1009, 0.0
    %vm1258 = vcmp.gt.f32.partialorder %v1012, 0.0
    %vm1259 = vcmp.gt.f32.partialorder %v1017, 0.0
    %vm1260 = vcmp.gt.f32.partialorder %v1020, 0.0
    %vm1261 = vcmp.gt.f32.partialorder %v1025, 0.0
    %vm1262 = vcmp.gt.f32.partialorder %v1028, 0.0
    %vm1263 = vcmp.gt.f32.partialorder %v1033, 0.0
    %vm1264 = vcmp.gt.f32.partialorder %v1036, 0.0
    %vm1265 = vcmp.gt.f32.partialorder %v1041, 0.0
    %vm1266 = vcmp.gt.f32.partialorder %v1044, 0.0
    %vm1267 = vcmp.gt.f32.partialorder %v1049, 0.0
    %vm1268 = vcmp.gt.f32.partialorder %v1052, 0.0
    %vm1269 = vcmp.gt.f32.partialorder %v1057, 0.0
    %vm1270 = vcmp.gt.f32.partialorder %v1060, 0.0
    %vm1271 = vcmp.gt.f32.partialorder %v1065, 0.0
    %vm1272 = vcmp.gt.f32.partialorder %v1068, 0.0
    %vm1273 = vcmp.gt.f32.partialorder %v1073, 0.0
    %vm1274 = vcmp.gt.f32.partialorder %v1076, 0.0
    %vm1275 = vcmp.gt.f32.partialorder %v1081, 0.0
    %vm1276 = vcmp.gt.f32.partialorder %v1084, 0.0
    %vm1277 = vcmp.gt.f32.partialorder %v1089, 0.0
    %vm1278 = vcmp.gt.f32.partialorder %v1092, 0.0
    %vm1279 = vcmp.gt.f32.partialorder %v1097, 0.0
    %vm1280 = vcmp.gt.f32.partialorder %v1100, 0.0
    %vm1281 = vcmp.gt.f32.partialorder %v1105, 0.0
    %vm1282 = vcmp.gt.f32.partialorder %v1108, 0.0
    %vm1283 = vcmp.gt.f32.partialorder %v1113, 0.0
    %vm1284 = vcmp.gt.f32.partialorder %v1116, 0.0
    %vm1285 = vcmp.gt.f32.partialorder %v1121, 0.0
    %vm1286 = vcmp.gt.f32.partialorder %v1124, 0.0
    %vm1287 = vcmp.gt.f32.partialorder %v1129, 0.0
    %vm1288 = vcmp.gt.f32.partialorder %v1132, 0.0
    %vm1289 = vcmp.gt.f32.partialorder %v1137, 0.0
    %vm1290 = vcmp.gt.f32.partialorder %v1140, 0.0
    %vm1291 = vcmp.gt.f32.partialorder %v1145, 0.0
    %vm1292 = vcmp.gt.f32.partialorder %v1148, 0.0
    %vm1293 = vcmp.gt.f32.partialorder %v1153, 0.0
    %vm1294 = vcmp.gt.f32.partialorder %v1156, 0.0
    %vm1295 = vcmp.gt.f32.partialorder %v1161, 0.0
    %vm1296 = vcmp.gt.f32.partialorder %v1164, 0.0
    %vm1297 = vcmp.gt.f32.partialorder %v1169, 0.0
    %vm1298 = vcmp.gt.f32.partialorder %v1172, 0.0
    %vm1299 = vcmp.gt.f32.partialorder %v1177, 0.0
    %vm1300 = vcmp.gt.f32.partialorder %v1180, 0.0
    %vm1301 = vcmp.gt.f32.partialorder %v1185, 0.0
    %vm1302 = vcmp.gt.f32.partialorder %v1188, 0.0
    %vm1303 = vcmp.gt.f32.partialorder %v1193, 0.0
    %vm1304 = vcmp.gt.f32.partialorder %v1196, 0.0
    %vm1305 = vcmp.gt.f32.partialorder %v1201, 0.0
    %vm1306 = vcmp.gt.f32.partialorder %v1204, 0.0
    %vm1307 = vcmp.gt.f32.partialorder %v1209, 0.0
    %vm1308 = vcmp.gt.f32.partialorder %v1212, 0.0
    %vm1309 = vcmp.gt.f32.partialorder %v1217, 0.0
    %vm1310 = vcmp.gt.f32.partialorder %v1220, 0.0
    %vm1311 = vcmp.gt.f32.partialorder %v1225, 0.0
    %vm1312 = vcmp.gt.f32.partialorder %v1228, 0.0
    %vm1313 = vcmp.gt.f32.partialorder %v1233, 0.0
    %vm1314 = vcmp.gt.f32.partialorder %v1236, 0.0
    %vm1315 = vcmp.gt.f32.partialorder %v1241, 0.0
    %vm1316 = vcmp.gt.f32.partialorder %v1244, 0.0
    %vm1317 = vcmp.gt.f32.partialorder %v1249, 0.0
    %vm1318 = vcmp.gt.f32.partialorder %v1252, 0.0
    %v1319 = vmul.f32 %v1001, 0.1
    %v1320 = vmul.f32 %v1004, 0.1
    %v1321 = vmul.f32 %v1009, 0.1
    %v1322 = vmul.f32 %v1012, 0.1
    %v1323 = vmul.f32 %v1017, 0.1
    %v1324 = vmul.f32 %v1020, 0.1
    %v1325 = vmul.f32 %v1025, 0.1
    %v1326 = vmul.f32 %v1028, 0.1
    %v1327 = vmul.f32 %v1033, 0.1
    %v1328 = vmul.f32 %v1036, 0.1
    %v1329 = vmul.f32 %v1041, 0.1
    %v1330 = vmul.f32 %v1044, 0.1
    %v1331 = vmul.f32 %v1049, 0.1
    %v1332 = vmul.f32 %v1052, 0.1
    %v1333 = vmul.f32 %v1057, 0.1
    %v1334 = vmul.f32 %v1060, 0.1
    %v1335 = vmul.f32 %v1065, 0.1
    %v1336 = vmul.f32 %v1068, 0.1
    %v1337 = vmul.f32 %v1073, 0.1
    %v1338 = vmul.f32 %v1076, 0.1
    %v1339 = vmul.f32 %v1081, 0.1
    %v1340 = vmul.f32 %v1084, 0.1
    %v1341 = vmul.f32 %v1089, 0.1
    %v1342 = vmul.f32 %v1092, 0.1
    %v1343 = vmul.f32 %v1097, 0.1
    %v1344 = vmul.f32 %v1100, 0.1
    %v1345 = vmul.f32 %v1105, 0.1
    %v1346 = vmul.f32 %v1108, 0.1
    %v1347 = vmul.f32 %v1113, 0.1
    %v1348 = vmul.f32 %v1116, 0.1
    %v1349 = vmul.f32 %v1121, 0.1
    %v1350 = vmul.f32 %v1124, 0.1
    %v1351 = vmul.f32 %v1129, 0.1
    %v1352 = vmul.f32 %v1132, 0.1
    %v1353 = vmul.f32 %v1137, 0.1
    %v1354 = vmul.f32 %v1140, 0.1
    %v1355 = vmul.f32 %v1145, 0.1
    %v1356 = vmul.f32 %v1148, 0.1
    %v1357 = vmul.f32 %v1153, 0.1
    %v1358 = vmul.f32 %v1156, 0.1
    %v1359 = vmul.f32 %v1161, 0.1
    %v1360 = vmul.f32 %v1164, 0.1
    %v1361 = vmul.f32 %v1169, 0.1
    %v1362 = vmul.f32 %v1172, 0.1
    %v1363 = vmul.f32 %v1177, 0.1
    %v1364 = vmul.f32 %v1180, 0.1
    %v1365 = vmul.f32 %v1185, 0.1
    %v1366 = vmul.f32 %v1188, 0.1
    %v1367 = vmul.f32 %v1193, 0.1
    %v1368 = vmul.f32 %v1196, 0.1
    %v1369 = vmul.f32 %v1201, 0.1
    %v1370 = vmul.f32 %v1204, 0.1
    %v1371 = vmul.f32 %v1209, 0.1
    %v1372 = vmul.f32 %v1212, 0.1
    %v1373 = vmul.f32 %v1217, 0.1
    %v1374 = vmul.f32 %v1220, 0.1
    %v1375 = vmul.f32 %v1225, 0.1
    %v1376 = vmul.f32 %v1228, 0.1
    %v1377 = vmul.f32 %v1233, 0.1
    %v1378 = vmul.f32 %v1236, 0.1
    %v1379 = vmul.f32 %v1241, 0.1
    %v1380 = vmul.f32 %v1244, 0.1
    %v1381 = vmul.f32 %v1249, 0.1
    %v1382 = vmul.f32 %v1252, 0.1
    %v1383 = vsel %vm1255, %v1001, %v1319
    %v1384 = vsel %vm1256, %v1004, %v1320
    %v1385 = vsel %vm1257, %v1009, %v1321
    %v1386 = vsel %vm1258, %v1012, %v1322
    %v1387 = vsel %vm1259, %v1017, %v1323
    %v1388 = vsel %vm1260, %v1020, %v1324
    %v1389 = vsel %vm1261, %v1025, %v1325
    %v1390 = vsel %vm1262, %v1028, %v1326
    %v1391 = vsel %vm1263, %v1033, %v1327
    %v1392 = vsel %vm1264, %v1036, %v1328
    %v1393 = vsel %vm1265, %v1041, %v1329
    %v1394 = vsel %vm1266, %v1044, %v1330
    %v1395 = vsel %vm1267, %v1049, %v1331
    %v1396 = vsel %vm1268, %v1052, %v1332
    %v1397 = vsel %vm1269, %v1057, %v1333
    %v1398 = vsel %vm1270, %v1060, %v1334
    %v1399 = vsel %vm1271, %v1065, %v1335
    %v1400 = vsel %vm1272, %v1068, %v1336
    %v1401 = vsel %vm1273, %v1073, %v1337
    %v1402 = vsel %vm1274, %v1076, %v1338
    %v1403 = vsel %vm1275, %v1081, %v1339
    %v1404 = vsel %vm1276, %v1084, %v1340
    %v1405 = vsel %vm1277, %v1089, %v1341
    %v1406 = vsel %vm1278, %v1092, %v1342
    %v1407 = vsel %vm1279, %v1097, %v1343
    %v1408 = vsel %vm1280, %v1100, %v1344
    %v1409 = vsel %vm1281, %v1105, %v1345
    %v1410 = vsel %vm1282, %v1108, %v1346
    %v1411 = vsel %vm1283, %v1113, %v1347
    %v1412 = vsel %vm1284, %v1116, %v1348
    %v1413 = vsel %vm1285, %v1121, %v1349
    %v1414 = vsel %vm1286, %v1124, %v1350
    %v1415 = vsel %vm1287, %v1129, %v1351
    %v1416 = vsel %vm1288, %v1132, %v1352
    %v1417 = vsel %vm1289, %v1137, %v1353
    %v1418 = vsel %vm1290, %v1140, %v1354
    %v1419 = vsel %vm1291, %v1145, %v1355
    %v1420 = vsel %vm1292, %v1148, %v1356
    %v1421 = vsel %vm1293, %v1153, %v1357
    %v1422 = vsel %vm1294, %v1156, %v1358
    %v1423 = vsel %vm1295, %v1161, %v1359
    %v1424 = vsel %vm1296, %v1164, %v1360
    %v1425 = vsel %vm1297, %v1169, %v1361
    %v1426 = vsel %vm1298, %v1172, %v1362
    %v1427 = vsel %vm1299, %v1177, %v1363
    %v1428 = vsel %vm1300, %v1180, %v1364
    %v1429 = vsel %vm1301, %v1185, %v1365
    %v1430 = vsel %vm1302, %v1188, %v1366
    %v1431 = vsel %vm1303, %v1193, %v1367
    %v1432 = vsel %vm1304, %v1196, %v1368
    %v1433 = vsel %vm1305, %v1201, %v1369
    %v1434 = vsel %vm1306, %v1204, %v1370
    %v1435 = vsel %vm1307, %v1209, %v1371
    %v1436 = vsel %vm1308, %v1212, %v1372
    %v1437 = vsel %vm1309, %v1217, %v1373
    %v1438 = vsel %vm1310, %v1220, %v1374
    %v1439 = vsel %vm1311, %v1225, %v1375
    %v1440 = vsel %vm1312, %v1228, %v1376
    %v1441 = vsel %vm1313, %v1233, %v1377
    %v1442 = vsel %vm1314, %v1236, %v1378
    %v1443 = vsel %vm1315, %v1241, %v1379
    %v1444 = vsel %vm1316, %v1244, %v1380
    %v1445 = vsel %vm1317, %v1249, %v1381
    %v1446 = vsel %vm1318, %v1252, %v1382
    %v1447 = vld [vmem:[%s5] sm:$0xf]
    %v1448 = vld [vmem:[%s5 + $0x4] sm:$0xf]
    %v1449 = vld [vmem:[%s5 + $0x8] sm:$0xf]
    %v1450 = vld [vmem:[%s5 + $0xc] sm:$0xf]
    %v1451 = vld [vmem:[%s5 + $0x10] sm:$0xf]
    %v1452 = vld [vmem:[%s5 + $0x14] sm:$0xf]
    %v1453 = vld [vmem:[%s5 + $0x18] sm:$0xf]
    %v1454 = vld [vmem:[%s5 + $0x1c] sm:$0xf]
    %v1455 = vld [vmem:[%s5 + $0x20] sm:$0xf]
    %v1456 = vld [vmem:[%s5 + $0x24] sm:$0xf]
    %v1457 = vld [vmem:[%s5 + $0x28] sm:$0xf]
    %v1458 = vld [vmem:[%s5 + $0x2c] sm:$0xf]
    %v1459 = vld [vmem:[%s5 + $0x30] sm:$0xf]
    %v1460 = vld [vmem:[%s5 + $0x34] sm:$0xf]
    %v1461 = vld [vmem:[%s5 + $0x38] sm:$0xf]
    %v1462 = vld [vmem:[%s5 + $0x3c] sm:$0xf]
    %v1463 = vld [vmem:[%s6] sm:$0x1]
    %v1464 = vpack.c.bf16 %v1384, %v1383
    %v1465 = vpack.c.bf16 %v1386, %v1385
    %v1466 = vpack.c.bf16 %v1388, %v1387
    %v1467 = vpack.c.bf16 %v1390, %v1389
    %v1468 = vpack.c.bf16 %v1392, %v1391
    %v1469 = vpack.c.bf16 %v1394, %v1393
    %v1470 = vpack.c.bf16 %v1396, %v1395
    %v1471 = vpack.c.bf16 %v1398, %v1397
    %v1472 = vpack.c.bf16 %v1400, %v1399
    %v1473 = vpack.c.bf16 %v1402, %v1401
    %v1474 = vpack.c.bf16 %v1404, %v1403
    %v1475 = vpack.c.bf16 %v1406, %v1405
    %v1476 = vpack.c.bf16 %v1408, %v1407
    %v1477 = vpack.c.bf16 %v1410, %v1409
    %v1478 = vpack.c.bf16 %v1412, %v1411
    %v1479 = vpack.c.bf16 %v1414, %v1413
    %v1480 = vpack.c.bf16 %v1416, %v1415
    %v1481 = vpack.c.bf16 %v1418, %v1417
    %v1482 = vpack.c.bf16 %v1420, %v1419
    %v1483 = vpack.c.bf16 %v1422, %v1421
    %v1484 = vpack.c.bf16 %v1424, %v1423
    %v1485 = vpack.c.bf16 %v1426, %v1425
    %v1486 = vpack.c.bf16 %v1428, %v1427
    %v1487 = vpack.c.bf16 %v1430, %v1429
    %v1488 = vpack.c.bf16 %v1432, %v1431
    %v1489 = vpack.c.bf16 %v1434, %v1433
    %v1490 = vpack.c.bf16 %v1436, %v1435
    %v1491 = vpack.c.bf16 %v1438, %v1437
    %v1492 = vpack.c.bf16 %v1440, %v1439
    %v1493 = vpack.c.bf16 %v1442, %v1441
    %v1494 = vpack.c.bf16 %v1444, %v1443
    %v1495 = vpack.c.bf16 %v1446, %v1445
    %v1497 = vlaneseq
    %v1498 = vshrl.u32 %v1497, 7
    %v1499 = vsub.s32 0, %v1498
    %v1500 = vrot.slane %v1463, %v1499
    %v1518 = vunpack.c.l.b16 %v1447
    %v1519 = vunpack.c.l.b16 %v1448
    %v1520 = vunpack.c.l.b16 %v1449
    %v1521 = vunpack.c.l.b16 %v1450
    %v1522 = vunpack.c.l.b16 %v1451
    %v1523 = vunpack.c.l.b16 %v1452
    %v1524 = vunpack.c.l.b16 %v1453
    %v1525 = vunpack.c.l.b16 %v1454
    %v1526 = vunpack.c.l.b16 %v1455
    %v1527 = vunpack.c.l.b16 %v1456
    %v1528 = vunpack.c.l.b16 %v1457
    %v1529 = vunpack.c.l.b16 %v1458
    %v1530 = vunpack.c.l.b16 %v1459
    %v1531 = vunpack.c.l.b16 %v1460
    %v1532 = vunpack.c.l.b16 %v1461
    %v1533 = vunpack.c.l.b16 %v1462
    %v1534 = vpack.c.b16 %v1519, %v1518
    %v1535 = vpack.c.b16 %v1521, %v1520
    %v1536 = vpack.c.b16 %v1523, %v1522
    %v1537 = vpack.c.b16 %v1525, %v1524
    %v1538 = vpack.c.b16 %v1527, %v1526
    %v1539 = vpack.c.b16 %v1529, %v1528
    %v1540 = vpack.c.b16 %v1531, %v1530
    %v1541 = vpack.c.b16 %v1533, %v1532
    %1550 = vmatprep.subr.bf16.mxu0 0
    %1551 = vmatpush1.bf16.msra.mxu0 %v1534
    %1552 = vmatprep.subr.bf16.mxu0 0
    %1553 = vmatpush1.bf16.msra.mxu0 %v1535
    %1554 = vmatprep.subr.bf16.mxu0 0
    %1555 = vmatpush1.bf16.msra.mxu0 %v1536
    %1556 = vmatprep.subr.bf16.mxu0 0
    %1557 = vmatpush1.bf16.msra.mxu0 %v1537
    %1558 = vmatprep.subr.bf16.mxu0 0
    %1559 = vmatpush1.bf16.msra.mxu0 %v1538
    %1560 = vmatprep.subr.bf16.mxu0 0
    %1561 = vmatpush1.bf16.msra.mxu0 %v1539
    %1562 = vmatprep.subr.bf16.mxu0 0
    %1563 = vmatpush1.bf16.msra.mxu0 %v1540
    %1564 = vmatprep.subr.bf16.mxu0 0
    %1565 = vmatpush1.bf16.msra.mxu0 %v1541
    %1566 = vmatprep.subr.bf16.mxu0 0
    %1567 = vmatpush1.bf16.msra.mxu0 0
    %1568 = vmatprep.subr.bf16.mxu0 0
    %1569 = vmatpush1.bf16.msra.mxu0 0
    %1570 = vmatprep.subr.bf16.mxu0 0
    %1571 = vmatpush1.bf16.msra.mxu0 0
    %1572 = vmatprep.subr.bf16.mxu0 0
    %1573 = vmatpush1.bf16.msra.mxu0 0
    %1574 = vmatprep.subr.bf16.mxu0 0
    %1575 = vmatpush1.bf16.msra.mxu0 0
    %1576 = vmatprep.subr.bf16.mxu0 0
    %1577 = vmatpush1.bf16.msra.mxu0 0
    %1578 = vmatprep.subr.bf16.mxu0 0
    %1579 = vmatpush1.bf16.msra.mxu0 0
    %1580 = vmatprep.subr.bf16.mxu0 0
    %1581 = vmatpush1.bf16.msra.mxu0 0
    %1582 = vmatprep.mubr.bf16.mxu0 0
    %1583 = vmatmul.mubr.bf16.gmra.mrb[0].mxu0 %v1464
    %v1584 = vpop.f32.mrb[0].mxu0
    %v1585 = vadd.f32 %v1500, %v1584
    %v1586 = vpop.f32.mrb[0].mxu0
    %v1587 = vpop.f32.mrb[0].mxu0
    %v1588 = vadd.f32 %v1500, %v1587
    %v1589 = vpop.f32.mrb[0].mxu0
    %1590 = vmatprep.mubr.bf16.mxu0 0
    %1591 = vmatmul.mubr.bf16.gmra.mrb[0].mxu0 %v1465
    %v1592 = vpop.f32.mrb[0].mxu0
    %v1593 = vadd.f32 %v1500, %v1592
    %v1594 = vpop.f32.mrb[0].mxu0
    %v1595 = vpop.f32.mrb[0].mxu0
    %v1596 = vadd.f32 %v1500, %v1595
    %v1597 = vpop.f32.mrb[0].mxu0
    %1598 = vmatprep.mubr.bf16.mxu0 0
    %1599 = vmatmul.mubr.bf16.gmra.mrb[0].mxu0 %v1466
    %v1600 = vpop.f32.mrb[0].mxu0
    %v1601 = vadd.f32 %v1500, %v1600
    %v1602 = vpop.f32.mrb[0].mxu0
    %v1603 = vpop.f32.mrb[0].mxu0
    %v1604 = vadd.f32 %v1500, %v1603
    %v1605 = vpop.f32.mrb[0].mxu0
    %1606 = vmatprep.mubr.bf16.mxu0 0
    %1607 = vmatmul.mubr.bf16.gmra.mrb[0].mxu0 %v1467
    %v1608 = vpop.f32.mrb[0].mxu0
    %v1609 = vadd.f32 %v1500, %v1608
    %v1610 = vpop.f32.mrb[0].mxu0
    %v1611 = vpop.f32.mrb[0].mxu0
    %v1612 = vadd.f32 %v1500, %v1611
    %v1613 = vpop.f32.mrb[0].mxu0
    %1614 = vmatprep.mubr.bf16.mxu0 0
    %1615 = vmatmul.mubr.bf16.gmra.mrb[0].mxu0 %v1468
    %v1616 = vpop.f32.mrb[0].mxu0
    %v1617 = vadd.f32 %v1500, %v1616
    %v1618 = vpop.f32.mrb[0].mxu0
    %v1619 = vpop.f32.mrb[0].mxu0
    %v1620 = vadd.f32 %v1500, %v1619
    %v1621 = vpop.f32.mrb[0].mxu0
    %1622 = vmatprep.mubr.bf16.mxu0 0
    %1623 = vmatmul.mubr.bf16.gmra.mrb[0].mxu0 %v1469
    %v1624 = vpop.f32.mrb[0].mxu0
    %v1625 = vadd.f32 %v1500, %v1624
    %v1626 = vpop.f32.mrb[0].mxu0
    %v1627 = vpop.f32.mrb[0].mxu0
    %v1628 = vadd.f32 %v1500, %v1627
    %v1629 = vpop.f32.mrb[0].mxu0
    %1630 = vmatprep.mubr.bf16.mxu0 0
    %1631 = vmatmul.mubr.bf16.gmra.mrb[0].mxu0 %v1470
    %v1632 = vpop.f32.mrb[0].mxu0
    %v1633 = vadd.f32 %v1500, %v1632
    %v1634 = vpop.f32.mrb[0].mxu0
    %v1635 = vpop.f32.mrb[0].mxu0
    %v1636 = vadd.f32 %v1500, %v1635
    %v1637 = vpop.f32.mrb[0].mxu0
    %1638 = vmatprep.mubr.bf16.mxu0 0
    %1639 = vmatmul.mubr.bf16.gmra.mrb[0].mxu0 %v1471
    %v1640 = vpop.f32.mrb[0].mxu0
    %v1641 = vadd.f32 %v1500, %v1640
    %v1642 = vpop.f32.mrb[0].mxu0
    %v1643 = vpop.f32.mrb[0].mxu0
    %v1644 = vadd.f32 %v1500, %v1643
    %v1645 = vpop.f32.mrb[0].mxu0
    %1646 = vmatprep.mubr.bf16.mxu0 0
    %1647 = vmatmul.mubr.bf16.gmra.mrb[0].mxu0 %v1472
    %v1648 = vpop.f32.mrb[0].mxu0
    %v1649 = vadd.f32 %v1500, %v1648
    %v1650 = vpop.f32.mrb[0].mxu0
    %v1651 = vpop.f32.mrb[0].mxu0
    %v1652 = vadd.f32 %v1500, %v1651
    %v1653 = vpop.f32.mrb[0].mxu0
    %1654 = vmatprep.mubr.bf16.mxu0 0
    %1655 = vmatmul.mubr.bf16.gmra.mrb[0].mxu0 %v1473
    %v1656 = vpop.f32.mrb[0].mxu0
    %v1657 = vadd.f32 %v1500, %v1656
    %v1658 = vpop.f32.mrb[0].mxu0
    %v1659 = vpop.f32.mrb[0].mxu0
    %v1660 = vadd.f32 %v1500, %v1659
    %v1661 = vpop.f32.mrb[0].mxu0
    %1662 = vmatprep.mubr.bf16.mxu0 0
    %1663 = vmatmul.mubr.bf16.gmra.mrb[0].mxu0 %v1474
    %v1664 = vpop.f32.mrb[0].mxu0
    %v1665 = vadd.f32 %v1500, %v1664
    %v1666 = vpop.f32.mrb[0].mxu0
    %v1667 = vpop.f32.mrb[0].mxu0
    %v1668 = vadd.f32 %v1500, %v1667
    %v1669 = vpop.f32.mrb[0].mxu0
    %1670 = vmatprep.mubr.bf16.mxu0 0
    %1671 = vmatmul.mubr.bf16.gmra.mrb[0].mxu0 %v1475
    %v1672 = vpop.f32.mrb[0].mxu0
    %v1673 = vadd.f32 %v1500, %v1672
    %v1674 = vpop.f32.mrb[0].mxu0
    %v1675 = vpop.f32.mrb[0].mxu0
    %v1676 = vadd.f32 %v1500, %v1675
    %v1677 = vpop.f32.mrb[0].mxu0
    %1678 = vmatprep.mubr.bf16.mxu0 0
    %1679 = vmatmul.mubr.bf16.gmra.mrb[0].mxu0 %v1476
    %v1680 = vpop.f32.mrb[0].mxu0
    %v1681 = vadd.f32 %v1500, %v1680
    %v1682 = vpop.f32.mrb[0].mxu0
    %v1683 = vpop.f32.mrb[0].mxu0
    %v1684 = vadd.f32 %v1500, %v1683
    %v1685 = vpop.f32.mrb[0].mxu0
    %1686 = vmatprep.mubr.bf16.mxu0 0
    %1687 = vmatmul.mubr.bf16.gmra.mrb[0].mxu0 %v1477
    %v1688 = vpop.f32.mrb[0].mxu0
    %v1689 = vadd.f32 %v1500, %v1688
    %v1690 = vpop.f32.mrb[0].mxu0
    %v1691 = vpop.f32.mrb[0].mxu0
    %v1692 = vadd.f32 %v1500, %v1691
    %v1693 = vpop.f32.mrb[0].mxu0
    %1694 = vmatprep.mubr.bf16.mxu0 0
    %1695 = vmatmul.mubr.bf16.gmra.mrb[0].mxu0 %v1478
    %v1696 = vpop.f32.mrb[0].mxu0
    %v1697 = vadd.f32 %v1500, %v1696
    %v1698 = vpop.f32.mrb[0].mxu0
    %v1699 = vpop.f32.mrb[0].mxu0
    %v1700 = vadd.f32 %v1500, %v1699
    %v1701 = vpop.f32.mrb[0].mxu0
    %1702 = vmatprep.mubr.bf16.mxu0 0
    %1703 = vmatmul.mubr.bf16.gmra.mrb[0].mxu0 %v1479
    %v1704 = vpop.f32.mrb[0].mxu0
    %v1705 = vadd.f32 %v1500, %v1704
    %v1706 = vpop.f32.mrb[0].mxu0
    %v1707 = vpop.f32.mrb[0].mxu0
    %v1708 = vadd.f32 %v1500, %v1707
    %v1709 = vpop.f32.mrb[0].mxu0
    %1710 = vmatprep.mubr.bf16.mxu0 0
    %1711 = vmatmul.mubr.bf16.gmra.mrb[0].mxu0 %v1480
    %v1712 = vpop.f32.mrb[0].mxu0
    %v1713 = vadd.f32 %v1500, %v1712
    %v1714 = vpop.f32.mrb[0].mxu0
    %v1715 = vpop.f32.mrb[0].mxu0
    %v1716 = vadd.f32 %v1500, %v1715
    %v1717 = vpop.f32.mrb[0].mxu0
    %1718 = vmatprep.mubr.bf16.mxu0 0
    %1719 = vmatmul.mubr.bf16.gmra.mrb[0].mxu0 %v1481
    %v1720 = vpop.f32.mrb[0].mxu0
    %v1721 = vadd.f32 %v1500, %v1720
    %v1722 = vpop.f32.mrb[0].mxu0
    %v1723 = vpop.f32.mrb[0].mxu0
    %v1724 = vadd.f32 %v1500, %v1723
    %v1725 = vpop.f32.mrb[0].mxu0
    %1726 = vmatprep.mubr.bf16.mxu0 0
    %1727 = vmatmul.mubr.bf16.gmra.mrb[0].mxu0 %v1482
    %v1728 = vpop.f32.mrb[0].mxu0
    %v1729 = vadd.f32 %v1500, %v1728
    %v1730 = vpop.f32.mrb[0].mxu0
    %v1731 = vpop.f32.mrb[0].mxu0
    %v1732 = vadd.f32 %v1500, %v1731
    %v1733 = vpop.f32.mrb[0].mxu0
    %1734 = vmatprep.mubr.bf16.mxu0 0
    %1735 = vmatmul.mubr.bf16.gmra.mrb[0].mxu0 %v1483
    %v1736 = vpop.f32.mrb[0].mxu0
    %v1737 = vadd.f32 %v1500, %v1736
    %v1738 = vpop.f32.mrb[0].mxu0
    %v1739 = vpop.f32.mrb[0].mxu0
    %v1740 = vadd.f32 %v1500, %v1739
    %v1741 = vpop.f32.mrb[0].mxu0
    %1742 = vmatprep.mubr.bf16.mxu0 0
    %1743 = vmatmul.mubr.bf16.gmra.mrb[0].mxu0 %v1484
    %v1744 = vpop.f32.mrb[0].mxu0
    %v1745 = vadd.f32 %v1500, %v1744
    %v1746 = vpop.f32.mrb[0].mxu0
    %v1747 = vpop.f32.mrb[0].mxu0
    %v1748 = vadd.f32 %v1500, %v1747
    %v1749 = vpop.f32.mrb[0].mxu0
    %1750 = vmatprep.mubr.bf16.mxu0 0
    %1751 = vmatmul.mubr.bf16.gmra.mrb[0].mxu0 %v1485
    %v1752 = vpop.f32.mrb[0].mxu0
    %v1753 = vadd.f32 %v1500, %v1752
    %v1754 = vpop.f32.mrb[0].mxu0
    %v1755 = vpop.f32.mrb[0].mxu0
    %v1756 = vadd.f32 %v1500, %v1755
    %v1757 = vpop.f32.mrb[0].mxu0
    %1758 = vmatprep.mubr.bf16.mxu0 0
    %1759 = vmatmul.mubr.bf16.gmra.mrb[0].mxu0 %v1486
    %v1760 = vpop.f32.mrb[0].mxu0
    %v1761 = vadd.f32 %v1500, %v1760
    %v1762 = vpop.f32.mrb[0].mxu0
    %v1763 = vpop.f32.mrb[0].mxu0
    %v1764 = vadd.f32 %v1500, %v1763
    %v1765 = vpop.f32.mrb[0].mxu0
    %1766 = vmatprep.mubr.bf16.mxu0 0
    %1767 = vmatmul.mubr.bf16.gmra.mrb[0].mxu0 %v1487
    %v1768 = vpop.f32.mrb[0].mxu0
    %v1769 = vadd.f32 %v1500, %v1768
    %v1770 = vpop.f32.mrb[0].mxu0
    %v1771 = vpop.f32.mrb[0].mxu0
    %v1772 = vadd.f32 %v1500, %v1771
    %v1773 = vpop.f32.mrb[0].mxu0
    %1774 = vmatprep.mubr.bf16.mxu0 0
    %1775 = vmatmul.mubr.bf16.gmra.mrb[0].mxu0 %v1488
    %v1776 = vpop.f32.mrb[0].mxu0
    %v1777 = vadd.f32 %v1500, %v1776
    %v1778 = vpop.f32.mrb[0].mxu0
    %v1779 = vpop.f32.mrb[0].mxu0
    %v1780 = vadd.f32 %v1500, %v1779
    %v1781 = vpop.f32.mrb[0].mxu0
    %1782 = vmatprep.mubr.bf16.mxu0 0
    %1783 = vmatmul.mubr.bf16.gmra.mrb[0].mxu0 %v1489
    %v1784 = vpop.f32.mrb[0].mxu0
    %v1785 = vadd.f32 %v1500, %v1784
    %v1786 = vpop.f32.mrb[0].mxu0
    %v1787 = vpop.f32.mrb[0].mxu0
    %v1788 = vadd.f32 %v1500, %v1787
    %v1789 = vpop.f32.mrb[0].mxu0
    %1790 = vmatprep.mubr.bf16.mxu0 0
    %1791 = vmatmul.mubr.bf16.gmra.mrb[0].mxu0 %v1490
    %v1792 = vpop.f32.mrb[0].mxu0
    %v1793 = vadd.f32 %v1500, %v1792
    %v1794 = vpop.f32.mrb[0].mxu0
    %v1795 = vpop.f32.mrb[0].mxu0
    %v1796 = vadd.f32 %v1500, %v1795
    %v1797 = vpop.f32.mrb[0].mxu0
    %1798 = vmatprep.mubr.bf16.mxu0 0
    %1799 = vmatmul.mubr.bf16.gmra.mrb[0].mxu0 %v1491
    %v1800 = vpop.f32.mrb[0].mxu0
    %v1801 = vadd.f32 %v1500, %v1800
    %v1802 = vpop.f32.mrb[0].mxu0
    %v1803 = vpop.f32.mrb[0].mxu0
    %v1804 = vadd.f32 %v1500, %v1803
    %v1805 = vpop.f32.mrb[0].mxu0
    %1806 = vmatprep.mubr.bf16.mxu0 0
    %1807 = vmatmul.mubr.bf16.gmra.mrb[0].mxu0 %v1492
    %v1808 = vpop.f32.mrb[0].mxu0
    %v1809 = vadd.f32 %v1500, %v1808
    %v1810 = vpop.f32.mrb[0].mxu0
    %v1811 = vpop.f32.mrb[0].mxu0
    %v1812 = vadd.f32 %v1500, %v1811
    %v1813 = vpop.f32.mrb[0].mxu0
    %1814 = vmatprep.mubr.bf16.mxu0 0
    %1815 = vmatmul.mubr.bf16.gmra.mrb[0].mxu0 %v1493
    %v1816 = vpop.f32.mrb[0].mxu0
    %v1817 = vadd.f32 %v1500, %v1816
    %v1818 = vpop.f32.mrb[0].mxu0
    %v1819 = vpop.f32.mrb[0].mxu0
    %v1820 = vadd.f32 %v1500, %v1819
    %v1821 = vpop.f32.mrb[0].mxu0
    %1822 = vmatprep.mubr.bf16.mxu0 0
    %1823 = vmatmul.mubr.bf16.gmra.mrb[0].mxu0 %v1494
    %v1824 = vpop.f32.mrb[0].mxu0
    %v1825 = vadd.f32 %v1500, %v1824
    %v1826 = vpop.f32.mrb[0].mxu0
    %v1827 = vpop.f32.mrb[0].mxu0
    %v1828 = vadd.f32 %v1500, %v1827
    %v1829 = vpop.f32.mrb[0].mxu0
    %1830 = vmatprep.mubr.bf16.mxu0 0
    %1831 = vmatmul.mubr.bf16.gmra.mrb[0].mxu0 %v1495
    %v1832 = vpop.f32.mrb[0].mxu0
    %v1833 = vadd.f32 %v1500, %v1832
    %v1834 = vpop.f32.mrb[0].mxu0
    %v1835 = vpop.f32.mrb[0].mxu0
    %v1836 = vadd.f32 %v1500, %v1835
    %v1837 = vpop.f32.mrb[0].mxu0
    %1838 = vdwg.mxu0
    %vm1839 = vcmask 130048
    %1840 = vst.msk [vmem:[%s7] sm:$0xff] %vm1839, %v1585
    %1841 = vst.msk [vmem:[%s7 + $0x8] sm:$0xff] %vm1839, %v1588
    %1842 = vst.msk [vmem:[%s7 + $0x10] sm:$0xff] %vm1839, %v1593
    %1843 = vst.msk [vmem:[%s7 + $0x18] sm:$0xff] %vm1839, %v1596
    %1844 = vst.msk [vmem:[%s7 + $0x20] sm:$0xff] %vm1839, %v1601
    %1845 = vst.msk [vmem:[%s7 + $0x28] sm:$0xff] %vm1839, %v1604
    %1846 = vst.msk [vmem:[%s7 + $0x30] sm:$0xff] %vm1839, %v1609
    %1847 = vst.msk [vmem:[%s7 + $0x38] sm:$0xff] %vm1839, %v1612
    %1848 = vst.msk [vmem:[%s7 + $0x40] sm:$0xff] %vm1839, %v1617
    %1849 = vst.msk [vmem:[%s7 + $0x48] sm:$0xff] %vm1839, %v1620
    %1850 = vst.msk [vmem:[%s7 + $0x50] sm:$0xff] %vm1839, %v1625
    %1851 = vst.msk [vmem:[%s7 + $0x58] sm:$0xff] %vm1839, %v1628
    %1852 = vst.msk [vmem:[%s7 + $0x60] sm:$0xff] %vm1839, %v1633
    %1853 = vst.msk [vmem:[%s7 + $0x68] sm:$0xff] %vm1839, %v1636
    %1854 = vst.msk [vmem:[%s7 + $0x70] sm:$0xff] %vm1839, %v1641
    %1855 = vst.msk [vmem:[%s7 + $0x78] sm:$0xff] %vm1839, %v1644
    %1856 = vst.msk [vmem:[%s7 + $0x80] sm:$0xff] %vm1839, %v1649
    %1857 = vst.msk [vmem:[%s7 + $0x88] sm:$0xff] %vm1839, %v1652
    %1858 = vst.msk [vmem:[%s7 + $0x90] sm:$0xff] %vm1839, %v1657
    %1859 = vst.msk [vmem:[%s7 + $0x98] sm:$0xff] %vm1839, %v1660
    %1860 = vst.msk [vmem:[%s7 + $0xa0] sm:$0xff] %vm1839, %v1665
    %1861 = vst.msk [vmem:[%s7 + $0xa8] sm:$0xff] %vm1839, %v1668
    %1862 = vst.msk [vmem:[%s7 + $0xb0] sm:$0xff] %vm1839, %v1673
    %1863 = vst.msk [vmem:[%s7 + $0xb8] sm:$0xff] %vm1839, %v1676
    %1864 = vst.msk [vmem:[%s7 + $0xc0] sm:$0xff] %vm1839, %v1681
    %1865 = vst.msk [vmem:[%s7 + $0xc8] sm:$0xff] %vm1839, %v1684
    %1866 = vst.msk [vmem:[%s7 + $0xd0] sm:$0xff] %vm1839, %v1689
    %1867 = vst.msk [vmem:[%s7 + $0xd8] sm:$0xff] %vm1839, %v1692
    %1868 = vst.msk [vmem:[%s7 + $0xe0] sm:$0xff] %vm1839, %v1697
    %1869 = vst.msk [vmem:[%s7 + $0xe8] sm:$0xff] %vm1839, %v1700
    %1870 = vst.msk [vmem:[%s7 + $0xf0] sm:$0xff] %vm1839, %v1705
    %1871 = vst.msk [vmem:[%s7 + $0xf8] sm:$0xff] %vm1839, %v1708
    %1872 = vst.msk [vmem:[%s7 + $0x100] sm:$0xff] %vm1839, %v1713
    %1873 = vst.msk [vmem:[%s7 + $0x108] sm:$0xff] %vm1839, %v1716
    %1874 = vst.msk [vmem:[%s7 + $0x110] sm:$0xff] %vm1839, %v1721
    %1875 = vst.msk [vmem:[%s7 + $0x118] sm:$0xff] %vm1839, %v1724
    %1876 = vst.msk [vmem:[%s7 + $0x120] sm:$0xff] %vm1839, %v1729
    %1877 = vst.msk [vmem:[%s7 + $0x128] sm:$0xff] %vm1839, %v1732
    %1878 = vst.msk [vmem:[%s7 + $0x130] sm:$0xff] %vm1839, %v1737
    %1879 = vst.msk [vmem:[%s7 + $0x138] sm:$0xff] %vm1839, %v1740
    %1880 = vst.msk [vmem:[%s7 + $0x140] sm:$0xff] %vm1839, %v1745
    %1881 = vst.msk [vmem:[%s7 + $0x148] sm:$0xff] %vm1839, %v1748
    %1882 = vst.msk [vmem:[%s7 + $0x150] sm:$0xff] %vm1839, %v1753
    %1883 = vst.msk [vmem:[%s7 + $0x158] sm:$0xff] %vm1839, %v1756
    %1884 = vst.msk [vmem:[%s7 + $0x160] sm:$0xff] %vm1839, %v1761
    %1885 = vst.msk [vmem:[%s7 + $0x168] sm:$0xff] %vm1839, %v1764
    %1886 = vst.msk [vmem:[%s7 + $0x170] sm:$0xff] %vm1839, %v1769
    %1887 = vst.msk [vmem:[%s7 + $0x178] sm:$0xff] %vm1839, %v1772
    %1888 = vst.msk [vmem:[%s7 + $0x180] sm:$0xff] %vm1839, %v1777
    %1889 = vst.msk [vmem:[%s7 + $0x188] sm:$0xff] %vm1839, %v1780
    %1890 = vst.msk [vmem:[%s7 + $0x190] sm:$0xff] %vm1839, %v1785
    %1891 = vst.msk [vmem:[%s7 + $0x198] sm:$0xff] %vm1839, %v1788
    %1892 = vst.msk [vmem:[%s7 + $0x1a0] sm:$0xff] %vm1839, %v1793
    %1893 = vst.msk [vmem:[%s7 + $0x1a8] sm:$0xff] %vm1839, %v1796
    %1894 = vst.msk [vmem:[%s7 + $0x1b0] sm:$0xff] %vm1839, %v1801
    %1895 = vst.msk [vmem:[%s7 + $0x1b8] sm:$0xff] %vm1839, %v1804
    %1896 = vst.msk [vmem:[%s7 + $0x1c0] sm:$0xff] %vm1839, %v1809
    %1897 = vst.msk [vmem:[%s7 + $0x1c8] sm:$0xff] %vm1839, %v1812
    %1898 = vst.msk [vmem:[%s7 + $0x1d0] sm:$0xff] %vm1839, %v1817
    %1899 = vst.msk [vmem:[%s7 + $0x1d8] sm:$0xff] %vm1839, %v1820
    %1900 = vst.msk [vmem:[%s7 + $0x1e0] sm:$0xff] %vm1839, %v1825
    %1901 = vst.msk [vmem:[%s7 + $0x1e8] sm:$0xff] %vm1839, %v1828
    %1902 = vst.msk [vmem:[%s7 + $0x1f0] sm:$0xff] %vm1839, %v1833
    %1903 = vst.msk [vmem:[%s7 + $0x1f8] sm:$0xff] %vm1839, %v1836
    // Predicated region
    $region38: #{tpu_custom_call.1} parent=1 // pred_check
      _
    $region39: #{tpu_custom_call.1} parent=1 // pred_check_branch
      %1905 = sbr.rel (0) target = $region41
    $region40: #{tpu_custom_call.1} parent=1 // pred_region
      _
    $region41: #{tpu_custom_call.1} parent=1 // pred_fallthru
      _
    // Predicated region
    $region42: #{tpu_custom_call.1} parent=1 // pred_check
      _
    $region43: #{tpu_custom_call.1} parent=1 // pred_check_branch
      %1907 = sbr.rel (0) target = $region45
    $region44: #{tpu_custom_call.1} parent=1 // pred_region
      _
    $region45: #{tpu_custom_call.1} parent=1 // pred_fallthru
      _
    %1908 = vsyncpa [#allocation3], 1
    %1909 = vsyncpa [#allocation5], 1

</llo_original>
